<compile_context>
chip_gen: v7x
topology: tpu7x:2x2x1
jax: 0.10.0
libtpu: 0.0.40
codegen_flags: <defaults>
</compile_context>

<pallas_src>
import functools

import jax
import jax.numpy as jnp
from jax.experimental import pallas as pl
from jax.experimental.pallas import tpu as pltpu

# ---------------------------------------------------------------------------
# Config (small, consistent with the module's __init__)
# ---------------------------------------------------------------------------
CONFIG = dict(
    vocab_size=64,
    context_length=8,
    emb_dim=32,
    num_layers=2,
    num_heads=4,
    dropout_rate=0.0,
)
LN_EPS = 1e-5  # PyTorch nn.LayerNorm default


def _layer_norm(x, g, b):
    mu = jnp.mean(x, axis=-1, keepdims=True)
    var = jnp.mean((x - mu) ** 2, axis=-1, keepdims=True)
    return (x - mu) * jax.lax.rsqrt(var + LN_EPS) * g + b


# ---------------------------------------------------------------------------
# Pallas kernel: full transformer stack + final norm + lane-padded output head.
# One batch-block (BB sequences, M = BB*S rows) per grid step.
# ---------------------------------------------------------------------------
def gpt_kernel(x_ref, wmat_ref, nb_ref, out_ref, *, num_layers, num_heads):
    BB, S, E = x_ref.shape
    H = num_heads
    hd = E // H
    F = 4 * E                      # MLP hidden width (Decoder uses 4*emb_dim)
    M = BB * S
    W = wmat_ref.shape[1]          # lane width of the packed weight slab (128)
    RPL = 2 * E + F                # weight-slab rows per layer
    scale = 1.0 / float(hd) ** 0.5

    # Residual stream: all sequences of this block folded into one (M, E) f32 slab.
    x2 = x_ref[...].reshape(M, E).astype(jnp.float32)

    # f32 LayerNorm / bias slab, loaded once.
    nb = nb_ref[...]

    # causal mask, broadcast over the BB batch dim of each head's scores
    row = jax.lax.broadcasted_iota(jnp.int32, (S, S), 0)
    col = jax.lax.broadcasted_iota(jnp.int32, (S, S), 1)
    causal = (row >= col)[None, :, :]

    # NOTE: static unroll is fine at num_layers=2; switch to lax.fori_loop if L grows.
    for l in range(num_layers):
        r0 = l * RPL
        n0 = 4 * l

        # ---- per-layer packed params (static slices) ----
        w_attn = wmat_ref[r0:r0 + E, :]                    # (E, W) bf16: [w_q|w_k|w_v|w_o]
        w_qkv = w_attn[:, 0:3 * E]                         # (E, 3E)
        w_o = w_attn[:, 3 * E:4 * E]                       # (E, E)
        w1 = wmat_ref[r0 + E:r0 + 2 * E, 0:F]              # (E, F)
        w2 = wmat_ref[r0 + 2 * E:r0 + 2 * E + F, :]        # (F, W)  lanes >= E are zero

        g_a = nb[n0:n0 + 1, 0:E]
        b_a = nb[n0:n0 + 1, E:2 * E]
        g_m = nb[n0:n0 + 1, 2 * E:3 * E]
        b_m = nb[n0:n0 + 1, 3 * E:4 * E]
        b_qkv = nb[n0 + 1:n0 + 2, 0:3 * E]
        b_o = nb[n0 + 1:n0 + 2, 3 * E:4 * E]
        b_mlp1 = nb[n0 + 2:n0 + 3, 0:F]
        b_mlp2 = nb[n0 + 3:n0 + 4, 0:E]

        # ---------------- attention sub-block (pre-norm) ----------------
        h = _layer_norm(x2, g_a, b_a).astype(jnp.bfloat16)                    # (M, E)
        qkv = jnp.dot(h, w_qkv, preferred_element_type=jnp.float32) + b_qkv   # (M, 3E)
        qkv = qkv.reshape(BB, S, 3 * E)

        heads = []
        for hi in range(H):
            q = qkv[:, :, hi * hd:(hi + 1) * hd].astype(jnp.bfloat16)             # (BB,S,hd)
            k = qkv[:, :, E + hi * hd:E + (hi + 1) * hd].astype(jnp.bfloat16)
            v = qkv[:, :, 2 * E + hi * hd:2 * E + (hi + 1) * hd].astype(jnp.bfloat16)
            s = jnp.einsum('bqd,bkd->bqk', q, k,
                           preferred_element_type=jnp.float32) * scale            # (BB,S,S)
            s = jnp.where(causal, s, -1e30)
            s = s - jnp.max(s, axis=-1, keepdims=True)
            p = jnp.exp(s)
            p = p * pl.reciprocal(jnp.sum(p, axis=-1, keepdims=True), approx=True)
            heads.append(jnp.einsum('bqk,bkd->bqd', p.astype(jnp.bfloat16), v,
                                    preferred_element_type=jnp.float32))          # (BB,S,hd)

        o = jnp.concatenate(heads, axis=-1).reshape(M, E).astype(jnp.bfloat16)     # (M, E)
        attn = jnp.dot(o, w_o, preferred_element_type=jnp.float32) + b_o
        x2 = x2 + attn                                                             # residual

        # ---------------- MLP sub-block (pre-norm) ----------------
        h = _layer_norm(x2, g_m, b_m).astype(jnp.bfloat16)
        z = jnp.dot(h, w1, preferred_element_type=jnp.float32) + b_mlp1            # (M, F)
        z = jax.nn.gelu(z, approximate=True)
        z = jnp.dot(z.astype(jnp.bfloat16), w2, preferred_element_type=jnp.float32)  # (M, W)
        x2 = x2 + z[:, 0:E] + b_mlp2                                               # residual

    # ---- final LayerNorm + lane-padded output head (no bias) ----
    fn = nb[4 * num_layers:4 * num_layers + 1, :]
    xf = _layer_norm(x2, fn[:, 0:E], fn[:, E:2 * E]).astype(jnp.bfloat16)
    w_out = wmat_ref[num_layers * RPL:num_layers * RPL + E, :]                     # (E, W)
    logits = jnp.dot(xf, w_out, preferred_element_type=jnp.float32)                # (M, W)
    out_ref[...] = logits.reshape(BB, S, W)


# ---------------------------------------------------------------------------
# Parameter init (deterministic, synthetic; PyTorch-like f32 layout)
# ---------------------------------------------------------------------------
def init_params(key, cfg):
    V, C, E, L = (cfg['vocab_size'], cfg['context_length'],
                  cfg['emb_dim'], cfg['num_layers'])
    F = 4 * E
    ks = jax.random.split(key, 12)

    def nrm(k, shape):
        return (0.02 * jax.random.normal(k, shape)).astype(jnp.float32)

    return dict(
        tok_emb=nrm(ks[0], (V, E)),
        pos_emb=nrm(ks[1], (C, E)),
        ln1_g=jnp.ones((L, 1, E), jnp.float32),
        ln1_b=jnp.zeros((L, 1, E), jnp.float32),
        wq=nrm(ks[2], (L, E, E)), bq=jnp.zeros((L, 1, E), jnp.float32),
        wk=nrm(ks[3], (L, E, E)), bk=jnp.zeros((L, 1, E), jnp.float32),
        wv=nrm(ks[4], (L, E, E)), bv=jnp.zeros((L, 1, E), jnp.float32),
        wo=nrm(ks[5], (L, E, E)), bo=jnp.zeros((L, 1, E), jnp.float32),
        ln2_g=jnp.ones((L, 1, E), jnp.float32),
        ln2_b=jnp.zeros((L, 1, E), jnp.float32),
        w1=nrm(ks[6], (L, E, F)), b1=jnp.zeros((L, 1, F), jnp.float32),
        w2=nrm(ks[7], (L, F, E)), b2=jnp.zeros((L, 1, E), jnp.float32),
        fn_g=jnp.ones((1, E), jnp.float32),
        fn_b=jnp.zeros((1, E), jnp.float32),
        w_out=nrm(ks[8], (E, V)),
    )


# ---------------------------------------------------------------------------
# Host-side weight packing: one bf16 matmul-weight slab (lane width 128) and one
# f32 LayerNorm/bias slab, instead of 12 separate kernel inputs.
# ---------------------------------------------------------------------------
def pack_params(params, cfg):
    L, E, V = cfg['num_layers'], cfg['emb_dim'], cfg['vocab_size']
    F = 4 * E
    W = 128                                   # lane width of both slabs
    assert 4 * E <= W and F <= W and V <= W, "packing assumes this small config"

    def pad_lanes(a):
        return jnp.pad(a, ((0, 0), (0, W - a.shape[-1])))

    def row(*vecs):
        r = jnp.concatenate([v.reshape(-1) for v in vecs])
        return jnp.pad(r, (0, W - r.shape[0]))[None, :]

    wblocks, nbrows = [], []
    for l in range(L):
        w_qkv = jnp.concatenate(
            [params['wq'][l], params['wk'][l], params['wv'][l]], axis=-1)   # (E, 3E)
        wblocks.append(pad_lanes(jnp.concatenate([w_qkv, params['wo'][l]], axis=-1)))
        wblocks.append(pad_lanes(params['w1'][l]))                          # (E, F)
        wblocks.append(pad_lanes(params['w2'][l]))                          # (F, E->W)

        nbrows.append(row(params['ln1_g'][l], params['ln1_b'][l],
                          params['ln2_g'][l], params['ln2_b'][l]))
        nbrows.append(row(params['bq'][l], params['bk'][l],
                          params['bv'][l], params['bo'][l]))
        nbrows.append(row(params['b1'][l]))
        nbrows.append(row(params['b2'][l]))

    wblocks.append(pad_lanes(params['w_out']))                              # (E, V->W)
    nbrows.append(row(params['fn_g'], params['fn_b']))

    wmat = jnp.concatenate(wblocks, axis=0).astype(jnp.bfloat16)            # (L*(2E+F)+E, W)
    nb = jnp.concatenate(nbrows, axis=0).astype(jnp.float32)                # (4L+1, W)
    nb = jnp.pad(nb, ((0, (-nb.shape[0]) % 8), (0, 0)))                     # sublane-pad rows
    return wmat, nb, W


# ---------------------------------------------------------------------------
# Wrapper: embeddings in plain JAX (glue), transformer stack in Pallas.
# num_blocks=1 (single grid step) on v5e/v6e; num_blocks=2 is an option on v7x.
# ---------------------------------------------------------------------------
def adam_model_forward(inputs, params, cfg, num_blocks=1):
    B, S = inputs.shape
    V, E, L, H = (cfg['vocab_size'], cfg['emb_dim'],
                  cfg['num_layers'], cfg['num_heads'])
    F = 4 * E
    assert B % num_blocks == 0
    BB = B // num_blocks

    # token + positional embeddings (gather is glue); dropout = identity (eval)
    x = (params['tok_emb'][inputs] + params['pos_emb'][:S][None, :, :]
         ).astype(jnp.bfloat16)                                             # (B,S,E) bf16

    wmat, nb, W = pack_params(params, cfg)

    kernel = functools.partial(gpt_kernel, num_layers=L, num_heads=H)

    # Advisory cost hint (kernel is tiny / fixed-overhead bound).
    flops = 2 * B * S * (L * (3 * E * E + E * E + 2 * S * E + 2 * E * F) + E * W)
    transc = B * S * (L * (S * H + F))
    bytes_acc = x.size * 2 + wmat.size * 2 + nb.size * 4 + B * S * W * 4

    logits_pad = pl.pallas_call(
        kernel,
        out_shape=jax.ShapeDtypeStruct((B, S, W), jnp.float32),
        grid_spec=pltpu.PrefetchScalarGridSpec(
            num_scalar_prefetch=0,
            grid=(num_blocks,),
            in_specs=[pl.BlockSpec((BB, S, E), lambda b: (b, 0, 0)),
                      pl.BlockSpec(wmat.shape, lambda b: (0, 0)),
                      pl.BlockSpec(nb.shape, lambda b: (0, 0))],
            out_specs=pl.BlockSpec((BB, S, W), lambda b: (b, 0, 0)),
        ),
        compiler_params=pltpu.CompilerParams(
            dimension_semantics=("parallel",) if num_blocks > 1 else ("arbitrary",)),
        cost_estimate=pl.CostEstimate(flops=int(flops),
                                      transcendentals=int(transc),
                                      bytes_accessed=int(bytes_acc)),
    )(x, wmat, nb)

    # drop lane-padding columns (vocab padded to 128 lanes for dense stores)
    return logits_pad[..., :V]


# ---------------------------------------------------------------------------
if __name__ == "__main__":
    key = jax.random.PRNGKey(0)
    pkey, ikey = jax.random.split(key)

    params = init_params(pkey, CONFIG)

    B, S = 4, CONFIG['context_length']
    inputs = jax.random.randint(ikey, (B, S), 0, CONFIG['vocab_size'],
                                dtype=jnp.int32)

    logits = adam_model_forward(inputs, params, CONFIG)   # num_blocks=2 only if v7x wins
    jax.block_until_ready(logits)
    assert logits.shape == (B, S, CONFIG['vocab_size'])
    assert bool(jnp.all(jnp.isfinite(logits)))
    print("KERNEL_OK")
</pallas_src>

<mosaic_0001>
module attributes {stable_mosaic.version = 11 : i64} {
  func.func @gpt_kernel(%arg0: i32, %arg1: memref<4x8x32xbf16, #tpu.memory_space<vmem>>, %arg2: memref<416x128xbf16, #tpu.memory_space<vmem>>, %arg3: memref<16x128xf32, #tpu.memory_space<vmem>>, %arg4: memref<4x8x128xf32, #tpu.memory_space<vmem>>) attributes {dimension_semantics = [#tpu.dimension_semantics<arbitrary>], iteration_bounds = array<i64: 1>, scalar_prefetch = 0 : i64, scratch_operands = 0 : i64, tpu.core_type = #tpu.core_type<tc>, window_params = [{transform_indices = @transform_0, window_bounds = array<i64: 4, 8, 32>}, {pipeline_mode = #tpu.pipeline_mode<synchronous>, transform_indices = @transform_1, window_bounds = array<i64: 416, 128>}, {pipeline_mode = #tpu.pipeline_mode<synchronous>, transform_indices = @transform_2, window_bounds = array<i64: 16, 128>}, {transform_indices = @transform_3, window_bounds = array<i64: 4, 8, 128>}]} {
    %c0 = arith.constant 0 : index
    %c0_0 = arith.constant 0 : index
    %c0_1 = arith.constant 0 : index
    %0 = vector.load %arg1[%c0, %c0_0, %c0_1] : memref<4x8x32xbf16, #tpu.memory_space<vmem>>, vector<4x8x32xbf16>
    %1 = vector.shape_cast %0 : vector<4x8x32xbf16> to vector<32x32xbf16>
    %2 = arith.extf %1 : vector<32x32xbf16> to vector<32x32xf32>
    %c0_2 = arith.constant 0 : index
    %c0_3 = arith.constant 0 : index
    %3 = vector.load %arg3[%c0_2, %c0_3] : memref<16x128xf32, #tpu.memory_space<vmem>>, vector<16x128xf32>
    %4 = tpu.iota {dimensions = array<i32: 0>} : vector<8x8xi32>
    %5 = tpu.iota {dimensions = array<i32: 1>} : vector<8x8xi32>
    %6 = arith.cmpi sge, %4, %5 : vector<8x8xi32>
    %7 = vector.shape_cast %6 : vector<8x8xi1> to vector<1x8x8xi1>
    %c0_4 = arith.constant 0 : index
    %c0_5 = arith.constant 0 : index
    %8 = vector.load %arg2[%c0_4, %c0_5] : memref<416x128xbf16, #tpu.memory_space<vmem>>, vector<32x128xbf16>
    %9 = vector.extract_strided_slice %8 {offsets = [0, 0], sizes = [32, 96], strides = [1, 1]} : vector<32x128xbf16> to vector<32x96xbf16>
    %10 = vector.extract_strided_slice %8 {offsets = [0, 96], sizes = [32, 32], strides = [1, 1]} : vector<32x128xbf16> to vector<32x32xbf16>
    %c32 = arith.constant 32 : index
    %c0_6 = arith.constant 0 : index
    %11 = vector.load %arg2[%c32, %c0_6] : memref<416x128xbf16, #tpu.memory_space<vmem>>, vector<32x128xbf16>
    %c64 = arith.constant 64 : index
    %c0_7 = arith.constant 0 : index
    %12 = vector.load %arg2[%c64, %c0_7] : memref<416x128xbf16, #tpu.memory_space<vmem>>, vector<128x128xbf16>
    %13 = vector.extract_strided_slice %3 {offsets = [0, 0], sizes = [1, 32], strides = [1, 1]} : vector<16x128xf32> to vector<1x32xf32>
    %14 = vector.extract_strided_slice %3 {offsets = [0, 32], sizes = [1, 32], strides = [1, 1]} : vector<16x128xf32> to vector<1x32xf32>
    %15 = vector.extract_strided_slice %3 {offsets = [0, 64], sizes = [1, 32], strides = [1, 1]} : vector<16x128xf32> to vector<1x32xf32>
    %16 = vector.extract_strided_slice %3 {offsets = [0, 96], sizes = [1, 32], strides = [1, 1]} : vector<16x128xf32> to vector<1x32xf32>
    %17 = vector.extract_strided_slice %3 {offsets = [1, 0], sizes = [1, 96], strides = [1, 1]} : vector<16x128xf32> to vector<1x96xf32>
    %18 = vector.extract_strided_slice %3 {offsets = [1, 96], sizes = [1, 32], strides = [1, 1]} : vector<16x128xf32> to vector<1x32xf32>
    %19 = vector.extract_strided_slice %3 {offsets = [2, 0], sizes = [1, 128], strides = [1, 1]} : vector<16x128xf32> to vector<1x128xf32>
    %20 = vector.extract_strided_slice %3 {offsets = [3, 0], sizes = [1, 32], strides = [1, 1]} : vector<16x128xf32> to vector<1x32xf32>
    %cst = arith.constant dense<0.000000e+00> : vector<32xf32>
    %21 = vector.multi_reduction <add>, %2, %cst [1] : vector<32x32xf32> to vector<32xf32>
    %22 = vector.shape_cast %21 : vector<32xf32> to vector<32x1xf32>
    %cst_8 = arith.constant 3.200000e+01 : f32
    %23 = vector.broadcast %cst_8 : f32 to vector<32x1xf32>
    %24 = arith.divf %22, %23 : vector<32x1xf32>
    %25 = vector.broadcast %24 : vector<32x1xf32> to vector<32x32xf32>
    %26 = arith.subf %2, %25 : vector<32x32xf32>
    %27 = arith.mulf %26, %26 : vector<32x32xf32>
    %cst_9 = arith.constant dense<0.000000e+00> : vector<32xf32>
    %28 = vector.multi_reduction <add>, %27, %cst_9 [1] : vector<32x32xf32> to vector<32xf32>
    %29 = vector.shape_cast %28 : vector<32xf32> to vector<32x1xf32>
    %cst_10 = arith.constant 3.200000e+01 : f32
    %30 = vector.broadcast %cst_10 : f32 to vector<32x1xf32>
    %31 = arith.divf %29, %30 : vector<32x1xf32>
    %32 = vector.broadcast %24 : vector<32x1xf32> to vector<32x32xf32>
    %33 = arith.subf %2, %32 : vector<32x32xf32>
    %cst_11 = arith.constant 9.99999974E-6 : f32
    %34 = vector.broadcast %cst_11 : f32 to vector<32x1xf32>
    %35 = arith.addf %31, %34 : vector<32x1xf32>
    %36 = math.rsqrt %35 : vector<32x1xf32>
    %37 = vector.broadcast %36 : vector<32x1xf32> to vector<32x32xf32>
    %38 = arith.mulf %33, %37 : vector<32x32xf32>
    %39 = vector.broadcast %13 : vector<1x32xf32> to vector<32x32xf32>
    %40 = arith.mulf %38, %39 : vector<32x32xf32>
    %41 = vector.broadcast %14 : vector<1x32xf32> to vector<32x32xf32>
    %42 = arith.addf %40, %41 : vector<32x32xf32>
    %43 = arith.truncf %42 : vector<32x32xf32> to vector<32x32xbf16>
    %cst_12 = arith.constant dense<0.000000e+00> : vector<32x96xf32>
    %44 = tpu.matmul %43, %9, %cst_12 {dimension_numbers = #tpu.dot_dimension_numbers<[1], [0], [0], [1], [0, 0, 1, 1], [], []>} : vector<32x32xbf16>, vector<32x96xbf16>, vector<32x96xf32> -> vector<32x96xf32>
    %45 = vector.broadcast %17 : vector<1x96xf32> to vector<32x96xf32>
    %46 = arith.addf %44, %45 : vector<32x96xf32>
    %47 = vector.shape_cast %46 : vector<32x96xf32> to vector<4x8x96xf32>
    %48 = vector.extract_strided_slice %47 {offsets = [0, 0, 0], sizes = [4, 8, 8], strides = [1, 1, 1]} : vector<4x8x96xf32> to vector<4x8x8xf32>
    %49 = arith.truncf %48 : vector<4x8x8xf32> to vector<4x8x8xbf16>
    %50 = vector.extract_strided_slice %47 {offsets = [0, 0, 32], sizes = [4, 8, 8], strides = [1, 1, 1]} : vector<4x8x96xf32> to vector<4x8x8xf32>
    %51 = arith.truncf %50 : vector<4x8x8xf32> to vector<4x8x8xbf16>
    %52 = vector.extract_strided_slice %47 {offsets = [0, 0, 64], sizes = [4, 8, 8], strides = [1, 1, 1]} : vector<4x8x96xf32> to vector<4x8x8xf32>
    %53 = arith.truncf %52 : vector<4x8x8xf32> to vector<4x8x8xbf16>
    "tpu.trace_start"() <{level = 10 : i32, message = "bqd,bkd->bqk"}> : () -> ()
    %cst_13 = arith.constant dense<0.000000e+00> : vector<4x8x8xf32>
    %54 = tpu.matmul %49, %51, %cst_13 {dimension_numbers = #tpu.dot_dimension_numbers<[2], [2], [1], [1], [0, 0, 0, 1, 1, 1], [0], [0]>} : vector<4x8x8xbf16>, vector<4x8x8xbf16>, vector<4x8x8xf32> -> vector<4x8x8xf32>
    "tpu.trace_stop"() : () -> ()
    %cst_14 = arith.constant 0.353553385 : f32
    %55 = vector.broadcast %cst_14 : f32 to vector<4x8x8xf32>
    %56 = arith.mulf %54, %55 : vector<4x8x8xf32>
    %cst_15 = arith.constant -1.000000e+30 : f32
    %57 = vector.shape_cast %7 : vector<1x8x8xi1> to vector<1x8x8xi1>
    %58 = vector.broadcast %57 : vector<1x8x8xi1> to vector<4x8x8xi1>
    %59 = vector.broadcast %cst_15 : f32 to vector<4x8x8xf32>
    %60 = arith.select %58, %56, %59 : vector<4x8x8xi1>, vector<4x8x8xf32>
    %cst_16 = arith.constant dense<0xFF800000> : vector<4x8xf32>
    %61 = vector.multi_reduction <maximumf>, %60, %cst_16 [2] : vector<4x8x8xf32> to vector<4x8xf32>
    %62 = vector.shape_cast %61 : vector<4x8xf32> to vector<4x8x1xf32>
    %63 = vector.broadcast %62 : vector<4x8x1xf32> to vector<4x8x8xf32>
    %64 = arith.subf %60, %63 : vector<4x8x8xf32>
    %65 = math.exp %64 : vector<4x8x8xf32>
    %cst_17 = arith.constant dense<0.000000e+00> : vector<4x8xf32>
    %66 = vector.multi_reduction <add>, %65, %cst_17 [2] : vector<4x8x8xf32> to vector<4x8xf32>
    %67 = vector.shape_cast %66 : vector<4x8xf32> to vector<4x8x1xf32>
    %68 = tpu.reciprocal %67 {approx = true} : vector<4x8x1xf32> -> vector<4x8x1xf32>
    %69 = vector.broadcast %68 : vector<4x8x1xf32> to vector<4x8x8xf32>
    %70 = arith.mulf %65, %69 : vector<4x8x8xf32>
    %71 = arith.truncf %70 : vector<4x8x8xf32> to vector<4x8x8xbf16>
    "tpu.trace_start"() <{level = 10 : i32, message = "bqk,bkd->bqd"}> : () -> ()
    %cst_18 = arith.constant dense<0.000000e+00> : vector<4x8x8xf32>
    %72 = tpu.matmul %71, %53, %cst_18 {dimension_numbers = #tpu.dot_dimension_numbers<[2], [1], [1], [2], [0, 0, 0, 1, 1, 2], [0], [0]>} : vector<4x8x8xbf16>, vector<4x8x8xbf16>, vector<4x8x8xf32> -> vector<4x8x8xf32>
    "tpu.trace_stop"() : () -> ()
    %73 = vector.extract_strided_slice %47 {offsets = [0, 0, 8], sizes = [4, 8, 8], strides = [1, 1, 1]} : vector<4x8x96xf32> to vector<4x8x8xf32>
    %74 = arith.truncf %73 : vector<4x8x8xf32> to vector<4x8x8xbf16>
    %75 = vector.extract_strided_slice %47 {offsets = [0, 0, 40], sizes = [4, 8, 8], strides = [1, 1, 1]} : vector<4x8x96xf32> to vector<4x8x8xf32>
    %76 = arith.truncf %75 : vector<4x8x8xf32> to vector<4x8x8xbf16>
    %77 = vector.extract_strided_slice %47 {offsets = [0, 0, 72], sizes = [4, 8, 8], strides = [1, 1, 1]} : vector<4x8x96xf32> to vector<4x8x8xf32>
    %78 = arith.truncf %77 : vector<4x8x8xf32> to vector<4x8x8xbf16>
    "tpu.trace_start"() <{level = 10 : i32, message = "bqd,bkd->bqk"}> : () -> ()
    %cst_19 = arith.constant dense<0.000000e+00> : vector<4x8x8xf32>
    %79 = tpu.matmul %74, %76, %cst_19 {dimension_numbers = #tpu.dot_dimension_numbers<[2], [2], [1], [1], [0, 0, 0, 1, 1, 1], [0], [0]>} : vector<4x8x8xbf16>, vector<4x8x8xbf16>, vector<4x8x8xf32> -> vector<4x8x8xf32>
    "tpu.trace_stop"() : () -> ()
    %cst_20 = arith.constant 0.353553385 : f32
    %80 = vector.broadcast %cst_20 : f32 to vector<4x8x8xf32>
    %81 = arith.mulf %79, %80 : vector<4x8x8xf32>
    %cst_21 = arith.constant -1.000000e+30 : f32
    %82 = vector.shape_cast %7 : vector<1x8x8xi1> to vector<1x8x8xi1>
    %83 = vector.broadcast %82 : vector<1x8x8xi1> to vector<4x8x8xi1>
    %84 = vector.broadcast %cst_21 : f32 to vector<4x8x8xf32>
    %85 = arith.select %83, %81, %84 : vector<4x8x8xi1>, vector<4x8x8xf32>
    %cst_22 = arith.constant dense<0xFF800000> : vector<4x8xf32>
    %86 = vector.multi_reduction <maximumf>, %85, %cst_22 [2] : vector<4x8x8xf32> to vector<4x8xf32>
    %87 = vector.shape_cast %86 : vector<4x8xf32> to vector<4x8x1xf32>
    %88 = vector.broadcast %87 : vector<4x8x1xf32> to vector<4x8x8xf32>
    %89 = arith.subf %85, %88 : vector<4x8x8xf32>
    %90 = math.exp %89 : vector<4x8x8xf32>
    %cst_23 = arith.constant dense<0.000000e+00> : vector<4x8xf32>
    %91 = vector.multi_reduction <add>, %90, %cst_23 [2] : vector<4x8x8xf32> to vector<4x8xf32>
    %92 = vector.shape_cast %91 : vector<4x8xf32> to vector<4x8x1xf32>
    %93 = tpu.reciprocal %92 {approx = true} : vector<4x8x1xf32> -> vector<4x8x1xf32>
    %94 = vector.broadcast %93 : vector<4x8x1xf32> to vector<4x8x8xf32>
    %95 = arith.mulf %90, %94 : vector<4x8x8xf32>
    %96 = arith.truncf %95 : vector<4x8x8xf32> to vector<4x8x8xbf16>
    "tpu.trace_start"() <{level = 10 : i32, message = "bqk,bkd->bqd"}> : () -> ()
    %cst_24 = arith.constant dense<0.000000e+00> : vector<4x8x8xf32>
    %97 = tpu.matmul %96, %78, %cst_24 {dimension_numbers = #tpu.dot_dimension_numbers<[2], [1], [1], [2], [0, 0, 0, 1, 1, 2], [0], [0]>} : vector<4x8x8xbf16>, vector<4x8x8xbf16>, vector<4x8x8xf32> -> vector<4x8x8xf32>
    "tpu.trace_stop"() : () -> ()
    %98 = vector.extract_strided_slice %47 {offsets = [0, 0, 16], sizes = [4, 8, 8], strides = [1, 1, 1]} : vector<4x8x96xf32> to vector<4x8x8xf32>
    %99 = arith.truncf %98 : vector<4x8x8xf32> to vector<4x8x8xbf16>
    %100 = vector.extract_strided_slice %47 {offsets = [0, 0, 48], sizes = [4, 8, 8], strides = [1, 1, 1]} : vector<4x8x96xf32> to vector<4x8x8xf32>
    %101 = arith.truncf %100 : vector<4x8x8xf32> to vector<4x8x8xbf16>
    %102 = vector.extract_strided_slice %47 {offsets = [0, 0, 80], sizes = [4, 8, 8], strides = [1, 1, 1]} : vector<4x8x96xf32> to vector<4x8x8xf32>
    %103 = arith.truncf %102 : vector<4x8x8xf32> to vector<4x8x8xbf16>
    "tpu.trace_start"() <{level = 10 : i32, message = "bqd,bkd->bqk"}> : () -> ()
    %cst_25 = arith.constant dense<0.000000e+00> : vector<4x8x8xf32>
    %104 = tpu.matmul %99, %101, %cst_25 {dimension_numbers = #tpu.dot_dimension_numbers<[2], [2], [1], [1], [0, 0, 0, 1, 1, 1], [0], [0]>} : vector<4x8x8xbf16>, vector<4x8x8xbf16>, vector<4x8x8xf32> -> vector<4x8x8xf32>
    "tpu.trace_stop"() : () -> ()
    %cst_26 = arith.constant 0.353553385 : f32
    %105 = vector.broadcast %cst_26 : f32 to vector<4x8x8xf32>
    %106 = arith.mulf %104, %105 : vector<4x8x8xf32>
    %cst_27 = arith.constant -1.000000e+30 : f32
    %107 = vector.shape_cast %7 : vector<1x8x8xi1> to vector<1x8x8xi1>
    %108 = vector.broadcast %107 : vector<1x8x8xi1> to vector<4x8x8xi1>
    %109 = vector.broadcast %cst_27 : f32 to vector<4x8x8xf32>
    %110 = arith.select %108, %106, %109 : vector<4x8x8xi1>, vector<4x8x8xf32>
    %cst_28 = arith.constant dense<0xFF800000> : vector<4x8xf32>
    %111 = vector.multi_reduction <maximumf>, %110, %cst_28 [2] : vector<4x8x8xf32> to vector<4x8xf32>
    %112 = vector.shape_cast %111 : vector<4x8xf32> to vector<4x8x1xf32>
    %113 = vector.broadcast %112 : vector<4x8x1xf32> to vector<4x8x8xf32>
    %114 = arith.subf %110, %113 : vector<4x8x8xf32>
    %115 = math.exp %114 : vector<4x8x8xf32>
    %cst_29 = arith.constant dense<0.000000e+00> : vector<4x8xf32>
    %116 = vector.multi_reduction <add>, %115, %cst_29 [2] : vector<4x8x8xf32> to vector<4x8xf32>
    %117 = vector.shape_cast %116 : vector<4x8xf32> to vector<4x8x1xf32>
    %118 = tpu.reciprocal %117 {approx = true} : vector<4x8x1xf32> -> vector<4x8x1xf32>
    %119 = vector.broadcast %118 : vector<4x8x1xf32> to vector<4x8x8xf32>
    %120 = arith.mulf %115, %119 : vector<4x8x8xf32>
    %121 = arith.truncf %120 : vector<4x8x8xf32> to vector<4x8x8xbf16>
    "tpu.trace_start"() <{level = 10 : i32, message = "bqk,bkd->bqd"}> : () -> ()
    %cst_30 = arith.constant dense<0.000000e+00> : vector<4x8x8xf32>
    %122 = tpu.matmul %121, %103, %cst_30 {dimension_numbers = #tpu.dot_dimension_numbers<[2], [1], [1], [2], [0, 0, 0, 1, 1, 2], [0], [0]>} : vector<4x8x8xbf16>, vector<4x8x8xbf16>, vector<4x8x8xf32> -> vector<4x8x8xf32>
    "tpu.trace_stop"() : () -> ()
    %123 = vector.extract_strided_slice %47 {offsets = [0, 0, 24], sizes = [4, 8, 8], strides = [1, 1, 1]} : vector<4x8x96xf32> to vector<4x8x8xf32>
    %124 = arith.truncf %123 : vector<4x8x8xf32> to vector<4x8x8xbf16>
    %125 = vector.extract_strided_slice %47 {offsets = [0, 0, 56], sizes = [4, 8, 8], strides = [1, 1, 1]} : vector<4x8x96xf32> to vector<4x8x8xf32>
    %126 = arith.truncf %125 : vector<4x8x8xf32> to vector<4x8x8xbf16>
    %127 = vector.extract_strided_slice %47 {offsets = [0, 0, 88], sizes = [4, 8, 8], strides = [1, 1, 1]} : vector<4x8x96xf32> to vector<4x8x8xf32>
    %128 = arith.truncf %127 : vector<4x8x8xf32> to vector<4x8x8xbf16>
    "tpu.trace_start"() <{level = 10 : i32, message = "bqd,bkd->bqk"}> : () -> ()
    %cst_31 = arith.constant dense<0.000000e+00> : vector<4x8x8xf32>
    %129 = tpu.matmul %124, %126, %cst_31 {dimension_numbers = #tpu.dot_dimension_numbers<[2], [2], [1], [1], [0, 0, 0, 1, 1, 1], [0], [0]>} : vector<4x8x8xbf16>, vector<4x8x8xbf16>, vector<4x8x8xf32> -> vector<4x8x8xf32>
    "tpu.trace_stop"() : () -> ()
    %cst_32 = arith.constant 0.353553385 : f32
    %130 = vector.broadcast %cst_32 : f32 to vector<4x8x8xf32>
    %131 = arith.mulf %129, %130 : vector<4x8x8xf32>
    %cst_33 = arith.constant -1.000000e+30 : f32
    %132 = vector.shape_cast %7 : vector<1x8x8xi1> to vector<1x8x8xi1>
    %133 = vector.broadcast %132 : vector<1x8x8xi1> to vector<4x8x8xi1>
    %134 = vector.broadcast %cst_33 : f32 to vector<4x8x8xf32>
    %135 = arith.select %133, %131, %134 : vector<4x8x8xi1>, vector<4x8x8xf32>
    %cst_34 = arith.constant dense<0xFF800000> : vector<4x8xf32>
    %136 = vector.multi_reduction <maximumf>, %135, %cst_34 [2] : vector<4x8x8xf32> to vector<4x8xf32>
    %137 = vector.shape_cast %136 : vector<4x8xf32> to vector<4x8x1xf32>
    %138 = vector.broadcast %137 : vector<4x8x1xf32> to vector<4x8x8xf32>
    %139 = arith.subf %135, %138 : vector<4x8x8xf32>
    %140 = math.exp %139 : vector<4x8x8xf32>
    %cst_35 = arith.constant dense<0.000000e+00> : vector<4x8xf32>
    %141 = vector.multi_reduction <add>, %140, %cst_35 [2] : vector<4x8x8xf32> to vector<4x8xf32>
    %142 = vector.shape_cast %141 : vector<4x8xf32> to vector<4x8x1xf32>
    %143 = tpu.reciprocal %142 {approx = true} : vector<4x8x1xf32> -> vector<4x8x1xf32>
    %144 = vector.broadcast %143 : vector<4x8x1xf32> to vector<4x8x8xf32>
    %145 = arith.mulf %140, %144 : vector<4x8x8xf32>
    %146 = arith.truncf %145 : vector<4x8x8xf32> to vector<4x8x8xbf16>
    "tpu.trace_start"() <{level = 10 : i32, message = "bqk,bkd->bqd"}> : () -> ()
    %cst_36 = arith.constant dense<0.000000e+00> : vector<4x8x8xf32>
    %147 = tpu.matmul %146, %128, %cst_36 {dimension_numbers = #tpu.dot_dimension_numbers<[2], [1], [1], [2], [0, 0, 0, 1, 1, 2], [0], [0]>} : vector<4x8x8xbf16>, vector<4x8x8xbf16>, vector<4x8x8xf32> -> vector<4x8x8xf32>
    "tpu.trace_stop"() : () -> ()
    %148 = tpu.concatenate %72, %97, %122, %147 in 2 : vector<4x8x8xf32>, vector<4x8x8xf32>, vector<4x8x8xf32>, vector<4x8x8xf32> -> vector<4x8x32xf32>
    %149 = vector.shape_cast %148 : vector<4x8x32xf32> to vector<32x32xf32>
    %150 = arith.truncf %149 : vector<32x32xf32> to vector<32x32xbf16>
    %cst_37 = arith.constant dense<0.000000e+00> : vector<32x32xf32>
    %151 = tpu.matmul %150, %10, %cst_37 {dimension_numbers = #tpu.dot_dimension_numbers<[1], [0], [0], [1], [0, 0, 1, 1], [], []>} : vector<32x32xbf16>, vector<32x32xbf16>, vector<32x32xf32> -> vector<32x32xf32>
    %152 = vector.broadcast %18 : vector<1x32xf32> to vector<32x32xf32>
    %153 = arith.addf %151, %152 : vector<32x32xf32>
    %154 = arith.addf %2, %153 : vector<32x32xf32>
    %cst_38 = arith.constant dense<0.000000e+00> : vector<32xf32>
    %155 = vector.multi_reduction <add>, %154, %cst_38 [1] : vector<32x32xf32> to vector<32xf32>
    %156 = vector.shape_cast %155 : vector<32xf32> to vector<32x1xf32>
    %cst_39 = arith.constant 3.200000e+01 : f32
    %157 = vector.broadcast %cst_39 : f32 to vector<32x1xf32>
    %158 = arith.divf %156, %157 : vector<32x1xf32>
    %159 = vector.broadcast %158 : vector<32x1xf32> to vector<32x32xf32>
    %160 = arith.subf %154, %159 : vector<32x32xf32>
    %161 = arith.mulf %160, %160 : vector<32x32xf32>
    %cst_40 = arith.constant dense<0.000000e+00> : vector<32xf32>
    %162 = vector.multi_reduction <add>, %161, %cst_40 [1] : vector<32x32xf32> to vector<32xf32>
    %163 = vector.shape_cast %162 : vector<32xf32> to vector<32x1xf32>
    %cst_41 = arith.constant 3.200000e+01 : f32
    %164 = vector.broadcast %cst_41 : f32 to vector<32x1xf32>
    %165 = arith.divf %163, %164 : vector<32x1xf32>
    %166 = vector.broadcast %158 : vector<32x1xf32> to vector<32x32xf32>
    %167 = arith.subf %154, %166 : vector<32x32xf32>
    %cst_42 = arith.constant 9.99999974E-6 : f32
    %168 = vector.broadcast %cst_42 : f32 to vector<32x1xf32>
    %169 = arith.addf %165, %168 : vector<32x1xf32>
    %170 = math.rsqrt %169 : vector<32x1xf32>
    %171 = vector.broadcast %170 : vector<32x1xf32> to vector<32x32xf32>
    %172 = arith.mulf %167, %171 : vector<32x32xf32>
    %173 = vector.broadcast %15 : vector<1x32xf32> to vector<32x32xf32>
    %174 = arith.mulf %172, %173 : vector<32x32xf32>
    %175 = vector.broadcast %16 : vector<1x32xf32> to vector<32x32xf32>
    %176 = arith.addf %174, %175 : vector<32x32xf32>
    %177 = arith.truncf %176 : vector<32x32xf32> to vector<32x32xbf16>
    %cst_43 = arith.constant dense<0.000000e+00> : vector<32x128xf32>
    %178 = tpu.matmul %177, %11, %cst_43 {dimension_numbers = #tpu.dot_dimension_numbers<[1], [0], [0], [1], [0, 0, 1, 1], [], []>} : vector<32x32xbf16>, vector<32x128xbf16>, vector<32x128xf32> -> vector<32x128xf32>
    %179 = vector.broadcast %19 : vector<1x128xf32> to vector<32x128xf32>
    %180 = arith.addf %178, %179 : vector<32x128xf32>
    %181 = arith.mulf %180, %180 : vector<32x128xf32>
    %182 = arith.mulf %180, %181 : vector<32x128xf32>
    %cst_44 = arith.constant 4.471500e-02 : f32
    %183 = vector.broadcast %cst_44 : f32 to vector<32x128xf32>
    %184 = arith.mulf %183, %182 : vector<32x128xf32>
    %185 = arith.addf %180, %184 : vector<32x128xf32>
    %cst_45 = arith.constant 0.797884583 : f32
    %186 = vector.broadcast %cst_45 : f32 to vector<32x128xf32>
    %187 = arith.mulf %186, %185 : vector<32x128xf32>
    %188 = math.tanh %187 : vector<32x128xf32>
    %cst_46 = arith.constant 1.000000e+00 : f32
    %189 = vector.broadcast %cst_46 : f32 to vector<32x128xf32>
    %190 = arith.addf %189, %188 : vector<32x128xf32>
    %cst_47 = arith.constant 5.000000e-01 : f32
    %191 = vector.broadcast %cst_47 : f32 to vector<32x128xf32>
    %192 = arith.mulf %191, %190 : vector<32x128xf32>
    %193 = arith.mulf %180, %192 : vector<32x128xf32>
    %194 = arith.truncf %193 : vector<32x128xf32> to vector<32x128xbf16>
    %cst_48 = arith.constant dense<0.000000e+00> : vector<32x128xf32>
    %195 = tpu.matmul %194, %12, %cst_48 {dimension_numbers = #tpu.dot_dimension_numbers<[1], [0], [0], [1], [0, 0, 1, 1], [], []>} : vector<32x128xbf16>, vector<128x128xbf16>, vector<32x128xf32> -> vector<32x128xf32>
    %196 = vector.extract_strided_slice %195 {offsets = [0, 0], sizes = [32, 32], strides = [1, 1]} : vector<32x128xf32> to vector<32x32xf32>
    %197 = arith.addf %154, %196 : vector<32x32xf32>
    %198 = vector.broadcast %20 : vector<1x32xf32> to vector<32x32xf32>
    %199 = arith.addf %197, %198 : vector<32x32xf32>
    %c192 = arith.constant 192 : index
    %c0_49 = arith.constant 0 : index
    %200 = vector.load %arg2[%c192, %c0_49] : memref<416x128xbf16, #tpu.memory_space<vmem>>, vector<32x128xbf16>
    %201 = vector.extract_strided_slice %200 {offsets = [0, 0], sizes = [32, 96], strides = [1, 1]} : vector<32x128xbf16> to vector<32x96xbf16>
    %202 = vector.extract_strided_slice %200 {offsets = [0, 96], sizes = [32, 32], strides = [1, 1]} : vector<32x128xbf16> to vector<32x32xbf16>
    %c224 = arith.constant 224 : index
    %c0_50 = arith.constant 0 : index
    %203 = vector.load %arg2[%c224, %c0_50] : memref<416x128xbf16, #tpu.memory_space<vmem>>, vector<32x128xbf16>
    %c256 = arith.constant 256 : index
    %c0_51 = arith.constant 0 : index
    %204 = vector.load %arg2[%c256, %c0_51] : memref<416x128xbf16, #tpu.memory_space<vmem>>, vector<128x128xbf16>
    %205 = vector.extract_strided_slice %3 {offsets = [4, 0], sizes = [1, 32], strides = [1, 1]} : vector<16x128xf32> to vector<1x32xf32>
    %206 = vector.extract_strided_slice %3 {offsets = [4, 32], sizes = [1, 32], strides = [1, 1]} : vector<16x128xf32> to vector<1x32xf32>
    %207 = vector.extract_strided_slice %3 {offsets = [4, 64], sizes = [1, 32], strides = [1, 1]} : vector<16x128xf32> to vector<1x32xf32>
    %208 = vector.extract_strided_slice %3 {offsets = [4, 96], sizes = [1, 32], strides = [1, 1]} : vector<16x128xf32> to vector<1x32xf32>
    %209 = vector.extract_strided_slice %3 {offsets = [5, 0], sizes = [1, 96], strides = [1, 1]} : vector<16x128xf32> to vector<1x96xf32>
    %210 = vector.extract_strided_slice %3 {offsets = [5, 96], sizes = [1, 32], strides = [1, 1]} : vector<16x128xf32> to vector<1x32xf32>
    %211 = vector.extract_strided_slice %3 {offsets = [6, 0], sizes = [1, 128], strides = [1, 1]} : vector<16x128xf32> to vector<1x128xf32>
    %212 = vector.extract_strided_slice %3 {offsets = [7, 0], sizes = [1, 32], strides = [1, 1]} : vector<16x128xf32> to vector<1x32xf32>
    %cst_52 = arith.constant dense<0.000000e+00> : vector<32xf32>
    %213 = vector.multi_reduction <add>, %199, %cst_52 [1] : vector<32x32xf32> to vector<32xf32>
    %214 = vector.shape_cast %213 : vector<32xf32> to vector<32x1xf32>
    %cst_53 = arith.constant 3.200000e+01 : f32
    %215 = vector.broadcast %cst_53 : f32 to vector<32x1xf32>
    %216 = arith.divf %214, %215 : vector<32x1xf32>
    %217 = vector.broadcast %216 : vector<32x1xf32> to vector<32x32xf32>
    %218 = arith.subf %199, %217 : vector<32x32xf32>
    %219 = arith.mulf %218, %218 : vector<32x32xf32>
    %cst_54 = arith.constant dense<0.000000e+00> : vector<32xf32>
    %220 = vector.multi_reduction <add>, %219, %cst_54 [1] : vector<32x32xf32> to vector<32xf32>
    %221 = vector.shape_cast %220 : vector<32xf32> to vector<32x1xf32>
    %cst_55 = arith.constant 3.200000e+01 : f32
    %222 = vector.broadcast %cst_55 : f32 to vector<32x1xf32>
    %223 = arith.divf %221, %222 : vector<32x1xf32>
    %224 = vector.broadcast %216 : vector<32x1xf32> to vector<32x32xf32>
    %225 = arith.subf %199, %224 : vector<32x32xf32>
    %cst_56 = arith.constant 9.99999974E-6 : f32
    %226 = vector.broadcast %cst_56 : f32 to vector<32x1xf32>
    %227 = arith.addf %223, %226 : vector<32x1xf32>
    %228 = math.rsqrt %227 : vector<32x1xf32>
    %229 = vector.broadcast %228 : vector<32x1xf32> to vector<32x32xf32>
    %230 = arith.mulf %225, %229 : vector<32x32xf32>
    %231 = vector.broadcast %205 : vector<1x32xf32> to vector<32x32xf32>
    %232 = arith.mulf %230, %231 : vector<32x32xf32>
    %233 = vector.broadcast %206 : vector<1x32xf32> to vector<32x32xf32>
    %234 = arith.addf %232, %233 : vector<32x32xf32>
    %235 = arith.truncf %234 : vector<32x32xf32> to vector<32x32xbf16>
    %cst_57 = arith.constant dense<0.000000e+00> : vector<32x96xf32>
    %236 = tpu.matmul %235, %201, %cst_57 {dimension_numbers = #tpu.dot_dimension_numbers<[1], [0], [0], [1], [0, 0, 1, 1], [], []>} : vector<32x32xbf16>, vector<32x96xbf16>, vector<32x96xf32> -> vector<32x96xf32>
    %237 = vector.broadcast %209 : vector<1x96xf32> to vector<32x96xf32>
    %238 = arith.addf %236, %237 : vector<32x96xf32>
    %239 = vector.shape_cast %238 : vector<32x96xf32> to vector<4x8x96xf32>
    %240 = vector.extract_strided_slice %239 {offsets = [0, 0, 0], sizes = [4, 8, 8], strides = [1, 1, 1]} : vector<4x8x96xf32> to vector<4x8x8xf32>
    %241 = arith.truncf %240 : vector<4x8x8xf32> to vector<4x8x8xbf16>
    %242 = vector.extract_strided_slice %239 {offsets = [0, 0, 32], sizes = [4, 8, 8], strides = [1, 1, 1]} : vector<4x8x96xf32> to vector<4x8x8xf32>
    %243 = arith.truncf %242 : vector<4x8x8xf32> to vector<4x8x8xbf16>
    %244 = vector.extract_strided_slice %239 {offsets = [0, 0, 64], sizes = [4, 8, 8], strides = [1, 1, 1]} : vector<4x8x96xf32> to vector<4x8x8xf32>
    %245 = arith.truncf %244 : vector<4x8x8xf32> to vector<4x8x8xbf16>
    "tpu.trace_start"() <{level = 10 : i32, message = "bqd,bkd->bqk"}> : () -> ()
    %cst_58 = arith.constant dense<0.000000e+00> : vector<4x8x8xf32>
    %246 = tpu.matmul %241, %243, %cst_58 {dimension_numbers = #tpu.dot_dimension_numbers<[2], [2], [1], [1], [0, 0, 0, 1, 1, 1], [0], [0]>} : vector<4x8x8xbf16>, vector<4x8x8xbf16>, vector<4x8x8xf32> -> vector<4x8x8xf32>
    "tpu.trace_stop"() : () -> ()
    %cst_59 = arith.constant 0.353553385 : f32
    %247 = vector.broadcast %cst_59 : f32 to vector<4x8x8xf32>
    %248 = arith.mulf %246, %247 : vector<4x8x8xf32>
    %cst_60 = arith.constant -1.000000e+30 : f32
    %249 = vector.shape_cast %7 : vector<1x8x8xi1> to vector<1x8x8xi1>
    %250 = vector.broadcast %249 : vector<1x8x8xi1> to vector<4x8x8xi1>
    %251 = vector.broadcast %cst_60 : f32 to vector<4x8x8xf32>
    %252 = arith.select %250, %248, %251 : vector<4x8x8xi1>, vector<4x8x8xf32>
    %cst_61 = arith.constant dense<0xFF800000> : vector<4x8xf32>
    %253 = vector.multi_reduction <maximumf>, %252, %cst_61 [2] : vector<4x8x8xf32> to vector<4x8xf32>
    %254 = vector.shape_cast %253 : vector<4x8xf32> to vector<4x8x1xf32>
    %255 = vector.broadcast %254 : vector<4x8x1xf32> to vector<4x8x8xf32>
    %256 = arith.subf %252, %255 : vector<4x8x8xf32>
    %257 = math.exp %256 : vector<4x8x8xf32>
    %cst_62 = arith.constant dense<0.000000e+00> : vector<4x8xf32>
    %258 = vector.multi_reduction <add>, %257, %cst_62 [2] : vector<4x8x8xf32> to vector<4x8xf32>
    %259 = vector.shape_cast %258 : vector<4x8xf32> to vector<4x8x1xf32>
    %260 = tpu.reciprocal %259 {approx = true} : vector<4x8x1xf32> -> vector<4x8x1xf32>
    %261 = vector.broadcast %260 : vector<4x8x1xf32> to vector<4x8x8xf32>
    %262 = arith.mulf %257, %261 : vector<4x8x8xf32>
    %263 = arith.truncf %262 : vector<4x8x8xf32> to vector<4x8x8xbf16>
    "tpu.trace_start"() <{level = 10 : i32, message = "bqk,bkd->bqd"}> : () -> ()
    %cst_63 = arith.constant dense<0.000000e+00> : vector<4x8x8xf32>
    %264 = tpu.matmul %263, %245, %cst_63 {dimension_numbers = #tpu.dot_dimension_numbers<[2], [1], [1], [2], [0, 0, 0, 1, 1, 2], [0], [0]>} : vector<4x8x8xbf16>, vector<4x8x8xbf16>, vector<4x8x8xf32> -> vector<4x8x8xf32>
    "tpu.trace_stop"() : () -> ()
    %265 = vector.extract_strided_slice %239 {offsets = [0, 0, 8], sizes = [4, 8, 8], strides = [1, 1, 1]} : vector<4x8x96xf32> to vector<4x8x8xf32>
    %266 = arith.truncf %265 : vector<4x8x8xf32> to vector<4x8x8xbf16>
    %267 = vector.extract_strided_slice %239 {offsets = [0, 0, 40], sizes = [4, 8, 8], strides = [1, 1, 1]} : vector<4x8x96xf32> to vector<4x8x8xf32>
    %268 = arith.truncf %267 : vector<4x8x8xf32> to vector<4x8x8xbf16>
    %269 = vector.extract_strided_slice %239 {offsets = [0, 0, 72], sizes = [4, 8, 8], strides = [1, 1, 1]} : vector<4x8x96xf32> to vector<4x8x8xf32>
    %270 = arith.truncf %269 : vector<4x8x8xf32> to vector<4x8x8xbf16>
    "tpu.trace_start"() <{level = 10 : i32, message = "bqd,bkd->bqk"}> : () -> ()
    %cst_64 = arith.constant dense<0.000000e+00> : vector<4x8x8xf32>
    %271 = tpu.matmul %266, %268, %cst_64 {dimension_numbers = #tpu.dot_dimension_numbers<[2], [2], [1], [1], [0, 0, 0, 1, 1, 1], [0], [0]>} : vector<4x8x8xbf16>, vector<4x8x8xbf16>, vector<4x8x8xf32> -> vector<4x8x8xf32>
    "tpu.trace_stop"() : () -> ()
    %cst_65 = arith.constant 0.353553385 : f32
    %272 = vector.broadcast %cst_65 : f32 to vector<4x8x8xf32>
    %273 = arith.mulf %271, %272 : vector<4x8x8xf32>
    %cst_66 = arith.constant -1.000000e+30 : f32
    %274 = vector.shape_cast %7 : vector<1x8x8xi1> to vector<1x8x8xi1>
    %275 = vector.broadcast %274 : vector<1x8x8xi1> to vector<4x8x8xi1>
    %276 = vector.broadcast %cst_66 : f32 to vector<4x8x8xf32>
    %277 = arith.select %275, %273, %276 : vector<4x8x8xi1>, vector<4x8x8xf32>
    %cst_67 = arith.constant dense<0xFF800000> : vector<4x8xf32>
    %278 = vector.multi_reduction <maximumf>, %277, %cst_67 [2] : vector<4x8x8xf32> to vector<4x8xf32>
    %279 = vector.shape_cast %278 : vector<4x8xf32> to vector<4x8x1xf32>
    %280 = vector.broadcast %279 : vector<4x8x1xf32> to vector<4x8x8xf32>
    %281 = arith.subf %277, %280 : vector<4x8x8xf32>
    %282 = math.exp %281 : vector<4x8x8xf32>
    %cst_68 = arith.constant dense<0.000000e+00> : vector<4x8xf32>
    %283 = vector.multi_reduction <add>, %282, %cst_68 [2] : vector<4x8x8xf32> to vector<4x8xf32>
    %284 = vector.shape_cast %283 : vector<4x8xf32> to vector<4x8x1xf32>
    %285 = tpu.reciprocal %284 {approx = true} : vector<4x8x1xf32> -> vector<4x8x1xf32>
    %286 = vector.broadcast %285 : vector<4x8x1xf32> to vector<4x8x8xf32>
    %287 = arith.mulf %282, %286 : vector<4x8x8xf32>
    %288 = arith.truncf %287 : vector<4x8x8xf32> to vector<4x8x8xbf16>
    "tpu.trace_start"() <{level = 10 : i32, message = "bqk,bkd->bqd"}> : () -> ()
    %cst_69 = arith.constant dense<0.000000e+00> : vector<4x8x8xf32>
    %289 = tpu.matmul %288, %270, %cst_69 {dimension_numbers = #tpu.dot_dimension_numbers<[2], [1], [1], [2], [0, 0, 0, 1, 1, 2], [0], [0]>} : vector<4x8x8xbf16>, vector<4x8x8xbf16>, vector<4x8x8xf32> -> vector<4x8x8xf32>
    "tpu.trace_stop"() : () -> ()
    %290 = vector.extract_strided_slice %239 {offsets = [0, 0, 16], sizes = [4, 8, 8], strides = [1, 1, 1]} : vector<4x8x96xf32> to vector<4x8x8xf32>
    %291 = arith.truncf %290 : vector<4x8x8xf32> to vector<4x8x8xbf16>
    %292 = vector.extract_strided_slice %239 {offsets = [0, 0, 48], sizes = [4, 8, 8], strides = [1, 1, 1]} : vector<4x8x96xf32> to vector<4x8x8xf32>
    %293 = arith.truncf %292 : vector<4x8x8xf32> to vector<4x8x8xbf16>
    %294 = vector.extract_strided_slice %239 {offsets = [0, 0, 80], sizes = [4, 8, 8], strides = [1, 1, 1]} : vector<4x8x96xf32> to vector<4x8x8xf32>
    %295 = arith.truncf %294 : vector<4x8x8xf32> to vector<4x8x8xbf16>
    "tpu.trace_start"() <{level = 10 : i32, message = "bqd,bkd->bqk"}> : () -> ()
    %cst_70 = arith.constant dense<0.000000e+00> : vector<4x8x8xf32>
    %296 = tpu.matmul %291, %293, %cst_70 {dimension_numbers = #tpu.dot_dimension_numbers<[2], [2], [1], [1], [0, 0, 0, 1, 1, 1], [0], [0]>} : vector<4x8x8xbf16>, vector<4x8x8xbf16>, vector<4x8x8xf32> -> vector<4x8x8xf32>
    "tpu.trace_stop"() : () -> ()
    %cst_71 = arith.constant 0.353553385 : f32
    %297 = vector.broadcast %cst_71 : f32 to vector<4x8x8xf32>
    %298 = arith.mulf %296, %297 : vector<4x8x8xf32>
    %cst_72 = arith.constant -1.000000e+30 : f32
    %299 = vector.shape_cast %7 : vector<1x8x8xi1> to vector<1x8x8xi1>
    %300 = vector.broadcast %299 : vector<1x8x8xi1> to vector<4x8x8xi1>
    %301 = vector.broadcast %cst_72 : f32 to vector<4x8x8xf32>
    %302 = arith.select %300, %298, %301 : vector<4x8x8xi1>, vector<4x8x8xf32>
    %cst_73 = arith.constant dense<0xFF800000> : vector<4x8xf32>
    %303 = vector.multi_reduction <maximumf>, %302, %cst_73 [2] : vector<4x8x8xf32> to vector<4x8xf32>
    %304 = vector.shape_cast %303 : vector<4x8xf32> to vector<4x8x1xf32>
    %305 = vector.broadcast %304 : vector<4x8x1xf32> to vector<4x8x8xf32>
    %306 = arith.subf %302, %305 : vector<4x8x8xf32>
    %307 = math.exp %306 : vector<4x8x8xf32>
    %cst_74 = arith.constant dense<0.000000e+00> : vector<4x8xf32>
    %308 = vector.multi_reduction <add>, %307, %cst_74 [2] : vector<4x8x8xf32> to vector<4x8xf32>
    %309 = vector.shape_cast %308 : vector<4x8xf32> to vector<4x8x1xf32>
    %310 = tpu.reciprocal %309 {approx = true} : vector<4x8x1xf32> -> vector<4x8x1xf32>
    %311 = vector.broadcast %310 : vector<4x8x1xf32> to vector<4x8x8xf32>
    %312 = arith.mulf %307, %311 : vector<4x8x8xf32>
    %313 = arith.truncf %312 : vector<4x8x8xf32> to vector<4x8x8xbf16>
    "tpu.trace_start"() <{level = 10 : i32, message = "bqk,bkd->bqd"}> : () -> ()
    %cst_75 = arith.constant dense<0.000000e+00> : vector<4x8x8xf32>
    %314 = tpu.matmul %313, %295, %cst_75 {dimension_numbers = #tpu.dot_dimension_numbers<[2], [1], [1], [2], [0, 0, 0, 1, 1, 2], [0], [0]>} : vector<4x8x8xbf16>, vector<4x8x8xbf16>, vector<4x8x8xf32> -> vector<4x8x8xf32>
    "tpu.trace_stop"() : () -> ()
    %315 = vector.extract_strided_slice %239 {offsets = [0, 0, 24], sizes = [4, 8, 8], strides = [1, 1, 1]} : vector<4x8x96xf32> to vector<4x8x8xf32>
    %316 = arith.truncf %315 : vector<4x8x8xf32> to vector<4x8x8xbf16>
    %317 = vector.extract_strided_slice %239 {offsets = [0, 0, 56], sizes = [4, 8, 8], strides = [1, 1, 1]} : vector<4x8x96xf32> to vector<4x8x8xf32>
    %318 = arith.truncf %317 : vector<4x8x8xf32> to vector<4x8x8xbf16>
    %319 = vector.extract_strided_slice %239 {offsets = [0, 0, 88], sizes = [4, 8, 8], strides = [1, 1, 1]} : vector<4x8x96xf32> to vector<4x8x8xf32>
    %320 = arith.truncf %319 : vector<4x8x8xf32> to vector<4x8x8xbf16>
    "tpu.trace_start"() <{level = 10 : i32, message = "bqd,bkd->bqk"}> : () -> ()
    %cst_76 = arith.constant dense<0.000000e+00> : vector<4x8x8xf32>
    %321 = tpu.matmul %316, %318, %cst_76 {dimension_numbers = #tpu.dot_dimension_numbers<[2], [2], [1], [1], [0, 0, 0, 1, 1, 1], [0], [0]>} : vector<4x8x8xbf16>, vector<4x8x8xbf16>, vector<4x8x8xf32> -> vector<4x8x8xf32>
    "tpu.trace_stop"() : () -> ()
    %cst_77 = arith.constant 0.353553385 : f32
    %322 = vector.broadcast %cst_77 : f32 to vector<4x8x8xf32>
    %323 = arith.mulf %321, %322 : vector<4x8x8xf32>
    %cst_78 = arith.constant -1.000000e+30 : f32
    %324 = vector.shape_cast %7 : vector<1x8x8xi1> to vector<1x8x8xi1>
    %325 = vector.broadcast %324 : vector<1x8x8xi1> to vector<4x8x8xi1>
    %326 = vector.broadcast %cst_78 : f32 to vector<4x8x8xf32>
    %327 = arith.select %325, %323, %326 : vector<4x8x8xi1>, vector<4x8x8xf32>
    %cst_79 = arith.constant dense<0xFF800000> : vector<4x8xf32>
    %328 = vector.multi_reduction <maximumf>, %327, %cst_79 [2] : vector<4x8x8xf32> to vector<4x8xf32>
    %329 = vector.shape_cast %328 : vector<4x8xf32> to vector<4x8x1xf32>
    %330 = vector.broadcast %329 : vector<4x8x1xf32> to vector<4x8x8xf32>
    %331 = arith.subf %327, %330 : vector<4x8x8xf32>
    %332 = math.exp %331 : vector<4x8x8xf32>
    %cst_80 = arith.constant dense<0.000000e+00> : vector<4x8xf32>
    %333 = vector.multi_reduction <add>, %332, %cst_80 [2] : vector<4x8x8xf32> to vector<4x8xf32>
    %334 = vector.shape_cast %333 : vector<4x8xf32> to vector<4x8x1xf32>
    %335 = tpu.reciprocal %334 {approx = true} : vector<4x8x1xf32> -> vector<4x8x1xf32>
    %336 = vector.broadcast %335 : vector<4x8x1xf32> to vector<4x8x8xf32>
    %337 = arith.mulf %332, %336 : vector<4x8x8xf32>
    %338 = arith.truncf %337 : vector<4x8x8xf32> to vector<4x8x8xbf16>
    "tpu.trace_start"() <{level = 10 : i32, message = "bqk,bkd->bqd"}> : () -> ()
    %cst_81 = arith.constant dense<0.000000e+00> : vector<4x8x8xf32>
    %339 = tpu.matmul %338, %320, %cst_81 {dimension_numbers = #tpu.dot_dimension_numbers<[2], [1], [1], [2], [0, 0, 0, 1, 1, 2], [0], [0]>} : vector<4x8x8xbf16>, vector<4x8x8xbf16>, vector<4x8x8xf32> -> vector<4x8x8xf32>
    "tpu.trace_stop"() : () -> ()
    %340 = tpu.concatenate %264, %289, %314, %339 in 2 : vector<4x8x8xf32>, vector<4x8x8xf32>, vector<4x8x8xf32>, vector<4x8x8xf32> -> vector<4x8x32xf32>
    %341 = vector.shape_cast %340 : vector<4x8x32xf32> to vector<32x32xf32>
    %342 = arith.truncf %341 : vector<32x32xf32> to vector<32x32xbf16>
    %cst_82 = arith.constant dense<0.000000e+00> : vector<32x32xf32>
    %343 = tpu.matmul %342, %202, %cst_82 {dimension_numbers = #tpu.dot_dimension_numbers<[1], [0], [0], [1], [0, 0, 1, 1], [], []>} : vector<32x32xbf16>, vector<32x32xbf16>, vector<32x32xf32> -> vector<32x32xf32>
    %344 = vector.broadcast %210 : vector<1x32xf32> to vector<32x32xf32>
    %345 = arith.addf %343, %344 : vector<32x32xf32>
    %346 = arith.addf %199, %345 : vector<32x32xf32>
    %cst_83 = arith.constant dense<0.000000e+00> : vector<32xf32>
    %347 = vector.multi_reduction <add>, %346, %cst_83 [1] : vector<32x32xf32> to vector<32xf32>
    %348 = vector.shape_cast %347 : vector<32xf32> to vector<32x1xf32>
    %cst_84 = arith.constant 3.200000e+01 : f32
    %349 = vector.broadcast %cst_84 : f32 to vector<32x1xf32>
    %350 = arith.divf %348, %349 : vector<32x1xf32>
    %351 = vector.broadcast %350 : vector<32x1xf32> to vector<32x32xf32>
    %352 = arith.subf %346, %351 : vector<32x32xf32>
    %353 = arith.mulf %352, %352 : vector<32x32xf32>
    %cst_85 = arith.constant dense<0.000000e+00> : vector<32xf32>
    %354 = vector.multi_reduction <add>, %353, %cst_85 [1] : vector<32x32xf32> to vector<32xf32>
    %355 = vector.shape_cast %354 : vector<32xf32> to vector<32x1xf32>
    %cst_86 = arith.constant 3.200000e+01 : f32
    %356 = vector.broadcast %cst_86 : f32 to vector<32x1xf32>
    %357 = arith.divf %355, %356 : vector<32x1xf32>
    %358 = vector.broadcast %350 : vector<32x1xf32> to vector<32x32xf32>
    %359 = arith.subf %346, %358 : vector<32x32xf32>
    %cst_87 = arith.constant 9.99999974E-6 : f32
    %360 = vector.broadcast %cst_87 : f32 to vector<32x1xf32>
    %361 = arith.addf %357, %360 : vector<32x1xf32>
    %362 = math.rsqrt %361 : vector<32x1xf32>
    %363 = vector.broadcast %362 : vector<32x1xf32> to vector<32x32xf32>
    %364 = arith.mulf %359, %363 : vector<32x32xf32>
    %365 = vector.broadcast %207 : vector<1x32xf32> to vector<32x32xf32>
    %366 = arith.mulf %364, %365 : vector<32x32xf32>
    %367 = vector.broadcast %208 : vector<1x32xf32> to vector<32x32xf32>
    %368 = arith.addf %366, %367 : vector<32x32xf32>
    %369 = arith.truncf %368 : vector<32x32xf32> to vector<32x32xbf16>
    %cst_88 = arith.constant dense<0.000000e+00> : vector<32x128xf32>
    %370 = tpu.matmul %369, %203, %cst_88 {dimension_numbers = #tpu.dot_dimension_numbers<[1], [0], [0], [1], [0, 0, 1, 1], [], []>} : vector<32x32xbf16>, vector<32x128xbf16>, vector<32x128xf32> -> vector<32x128xf32>
    %371 = vector.broadcast %211 : vector<1x128xf32> to vector<32x128xf32>
    %372 = arith.addf %370, %371 : vector<32x128xf32>
    %373 = arith.mulf %372, %372 : vector<32x128xf32>
    %374 = arith.mulf %372, %373 : vector<32x128xf32>
    %cst_89 = arith.constant 4.471500e-02 : f32
    %375 = vector.broadcast %cst_89 : f32 to vector<32x128xf32>
    %376 = arith.mulf %375, %374 : vector<32x128xf32>
    %377 = arith.addf %372, %376 : vector<32x128xf32>
    %cst_90 = arith.constant 0.797884583 : f32
    %378 = vector.broadcast %cst_90 : f32 to vector<32x128xf32>
    %379 = arith.mulf %378, %377 : vector<32x128xf32>
    %380 = math.tanh %379 : vector<32x128xf32>
    %cst_91 = arith.constant 1.000000e+00 : f32
    %381 = vector.broadcast %cst_91 : f32 to vector<32x128xf32>
    %382 = arith.addf %381, %380 : vector<32x128xf32>
    %cst_92 = arith.constant 5.000000e-01 : f32
    %383 = vector.broadcast %cst_92 : f32 to vector<32x128xf32>
    %384 = arith.mulf %383, %382 : vector<32x128xf32>
    %385 = arith.mulf %372, %384 : vector<32x128xf32>
    %386 = arith.truncf %385 : vector<32x128xf32> to vector<32x128xbf16>
    %cst_93 = arith.constant dense<0.000000e+00> : vector<32x128xf32>
    %387 = tpu.matmul %386, %204, %cst_93 {dimension_numbers = #tpu.dot_dimension_numbers<[1], [0], [0], [1], [0, 0, 1, 1], [], []>} : vector<32x128xbf16>, vector<128x128xbf16>, vector<32x128xf32> -> vector<32x128xf32>
    %388 = vector.extract_strided_slice %387 {offsets = [0, 0], sizes = [32, 32], strides = [1, 1]} : vector<32x128xf32> to vector<32x32xf32>
    %389 = arith.addf %346, %388 : vector<32x32xf32>
    %390 = vector.broadcast %212 : vector<1x32xf32> to vector<32x32xf32>
    %391 = arith.addf %389, %390 : vector<32x32xf32>
    %392 = vector.extract_strided_slice %3 {offsets = [8, 0], sizes = [1, 128], strides = [1, 1]} : vector<16x128xf32> to vector<1x128xf32>
    %393 = vector.extract_strided_slice %392 {offsets = [0, 0], sizes = [1, 32], strides = [1, 1]} : vector<1x128xf32> to vector<1x32xf32>
    %394 = vector.extract_strided_slice %392 {offsets = [0, 32], sizes = [1, 32], strides = [1, 1]} : vector<1x128xf32> to vector<1x32xf32>
    %cst_94 = arith.constant dense<0.000000e+00> : vector<32xf32>
    %395 = vector.multi_reduction <add>, %391, %cst_94 [1] : vector<32x32xf32> to vector<32xf32>
    %396 = vector.shape_cast %395 : vector<32xf32> to vector<32x1xf32>
    %cst_95 = arith.constant 3.200000e+01 : f32
    %397 = vector.broadcast %cst_95 : f32 to vector<32x1xf32>
    %398 = arith.divf %396, %397 : vector<32x1xf32>
    %399 = vector.broadcast %398 : vector<32x1xf32> to vector<32x32xf32>
    %400 = arith.subf %391, %399 : vector<32x32xf32>
    %401 = arith.mulf %400, %400 : vector<32x32xf32>
    %cst_96 = arith.constant dense<0.000000e+00> : vector<32xf32>
    %402 = vector.multi_reduction <add>, %401, %cst_96 [1] : vector<32x32xf32> to vector<32xf32>
    %403 = vector.shape_cast %402 : vector<32xf32> to vector<32x1xf32>
    %cst_97 = arith.constant 3.200000e+01 : f32
    %404 = vector.broadcast %cst_97 : f32 to vector<32x1xf32>
    %405 = arith.divf %403, %404 : vector<32x1xf32>
    %406 = vector.broadcast %398 : vector<32x1xf32> to vector<32x32xf32>
    %407 = arith.subf %391, %406 : vector<32x32xf32>
    %cst_98 = arith.constant 9.99999974E-6 : f32
    %408 = vector.broadcast %cst_98 : f32 to vector<32x1xf32>
    %409 = arith.addf %405, %408 : vector<32x1xf32>
    %410 = math.rsqrt %409 : vector<32x1xf32>
    %411 = vector.broadcast %410 : vector<32x1xf32> to vector<32x32xf32>
    %412 = arith.mulf %407, %411 : vector<32x32xf32>
    %413 = vector.broadcast %393 : vector<1x32xf32> to vector<32x32xf32>
    %414 = arith.mulf %412, %413 : vector<32x32xf32>
    %415 = vector.broadcast %394 : vector<1x32xf32> to vector<32x32xf32>
    %416 = arith.addf %414, %415 : vector<32x32xf32>
    %417 = arith.truncf %416 : vector<32x32xf32> to vector<32x32xbf16>
    %c384 = arith.constant 384 : index
    %c0_99 = arith.constant 0 : index
    %418 = vector.load %arg2[%c384, %c0_99] : memref<416x128xbf16, #tpu.memory_space<vmem>>, vector<32x128xbf16>
    %cst_100 = arith.constant dense<0.000000e+00> : vector<32x128xf32>
    %419 = tpu.matmul %417, %418, %cst_100 {dimension_numbers = #tpu.dot_dimension_numbers<[1], [0], [0], [1], [0, 0, 1, 1], [], []>} : vector<32x32xbf16>, vector<32x128xbf16>, vector<32x128xf32> -> vector<32x128xf32>
    %420 = vector.shape_cast %419 : vector<32x128xf32> to vector<4x8x128xf32>
    %c0_101 = arith.constant 0 : index
    %c0_102 = arith.constant 0 : index
    %c0_103 = arith.constant 0 : index
    %421 = vector.load %arg4[%c0_101, %c0_102, %c0_103] : memref<4x8x128xf32, #tpu.memory_space<vmem>>, vector<4x8x128xf32>
    tpu.vector_store %arg4[%c0_101, %c0_102, %c0_103], %420 {strides = array<i32>} : memref<4x8x128xf32, #tpu.memory_space<vmem>>, vector<4x8x128xf32>,
    return
  }
  func.func @transform_0(%arg0: i32) -> (i32, i32, i32) {
    %c0_i32 = arith.constant 0 : i32
    %c0_i32_0 = arith.constant 0 : i32
    %c0_i32_1 = arith.constant 0 : i32
    return %arg0, %c0_i32, %c0_i32_0 : i32, i32, i32
  }
  func.func @transform_1(%arg0: i32) -> (i32, i32) {
    %c0_i32 = arith.constant 0 : i32
    %c0_i32_0 = arith.constant 0 : i32
    %c0_i32_1 = arith.constant 0 : i32
    return %c0_i32, %c0_i32_0 : i32, i32
  }
  func.func @transform_2(%arg0: i32) -> (i32, i32) {
    %c0_i32 = arith.constant 0 : i32
    %c0_i32_0 = arith.constant 0 : i32
    %c0_i32_1 = arith.constant 0 : i32
    return %c0_i32, %c0_i32_0 : i32, i32
  }
  func.func @transform_3(%arg0: i32) -> (i32, i32, i32) {
    %c0_i32 = arith.constant 0 : i32
    %c0_i32_0 = arith.constant 0 : i32
    %c0_i32_1 = arith.constant 0 : i32
    return %arg0, %c0_i32, %c0_i32_0 : i32, i32, i32
  }
}

</mosaic_0001>

<llo_original>
// kernel: tpu_custom_call.1
$region0: #{tpu_custom_call.1}
  #allocation0 [shape = 'u32[]', space=smem, size = 0x4, offset = 0x4, fixed_abs, tag = 'smem constant byte address 0x4 - core index']
  #allocation1 [shape = 'u32[144,128]{1,0:T(1,128)}', space=vmem, size = 0x12000, scoped, tag = 'internal scratch']
  %s0 = inlined_call_operand.hbm [shape: bf16[4,8,32], index: 0, kind: input, shape index: {}]
  %s1 = inlined_call_operand.hbm [shape: bf16[416,128], index: 1, kind: input, shape index: {}]
  %s2 = inlined_call_operand.hbm [shape: f32[16,128], index: 2, kind: input, shape index: {}]
  %s3 = inlined_call_operand.hbm [shape: f32[4,8,128], index: 3, kind: output, shape index: {}]
  %s4 = sld [smem:[#allocation0]]
  $region34: #{tpu_custom_call.1} parent=0
    _
  %s6 = ssub.s32 1, %s4
  %s7 = scalar_select 0, %s6, %s4
  $region1: #{tpu_custom_call.1} parent=0
    #allocation2 [shape = 'u8[8192]{0}', space=vmem, size = 0x2000, scoped, tag = 'input window, operand 0, single buffered']
    #allocation3 [shape = 's32[1]{0}', space=sflag, size = 0x4, scoped, tag = 'scoped memory for tpu_custom_call.1']
    #allocation4 [shape = 's32[1]{0}', space=sflag, size = 0x4, scoped, tag = 'scoped memory for tpu_custom_call.1']
    #allocation5 [shape = 'u8[106496]{0}', space=vmem, size = 0x1a000, scoped, tag = 'input window, operand 1, single buffered']
    #allocation6 [shape = 's32[1]{0}', space=sflag, size = 0x4, scoped, tag = 'scoped memory for tpu_custom_call.1']
    #allocation7 [shape = 'u8[8192]{0}', space=vmem, size = 0x2000, scoped, tag = 'input window, operand 2, single buffered']
    #allocation8 [shape = 'u8[16384]{0}', space=vmem, size = 0x4000, scoped, tag = 'output window, operand 0, single buffered']
    %8 = vsyncpa [#allocation3], 0
    %9 = vsyncpa [#allocation6], 0
    %10 = vsyncpa [#allocation4], 0
    // Predicated region
    $region2: #{tpu_custom_call.1} parent=1 // pred_check
      _
    $region3: #{tpu_custom_call.1} parent=1 // pred_check_branch
      %12 = sbr.rel (0) target = $region5
    $region4: #{tpu_custom_call.1} parent=1 // pred_region
      %s14 = ssub.s32 256, 256
      %15 = vsyncadd [#allocation3], %s14
      %s16 = sshll.u32 [#allocation2], 4
      %s17 = int_to_ptr.vmem [resolvable:$true] %s16
      %22 = dma.hbm_to_vmem [thread:$0]  %s0, 256, %s17, [#allocation3], 64, 64, 4
    $region5: #{tpu_custom_call.1} parent=1 // pred_fallthru
      _
    // Predicated region
    $region6: #{tpu_custom_call.1} parent=1 // pred_check
      _
    $region7: #{tpu_custom_call.1} parent=1 // pred_check_branch
      %24 = sbr.rel (0) target = $region9
    $region8: #{tpu_custom_call.1} parent=1 // pred_region
      %s26 = ssub.s32 3328, 3328
      %27 = vsyncadd [#allocation6], %s26
      %s28 = sshll.u32 [#allocation5], 4
      %s29 = int_to_ptr.vmem [resolvable:$true] %s28
      %34 = dma.hbm_to_vmem [thread:$0]  %s1, 3328, %s29, [#allocation6], 64, 64, 4
    $region9: #{tpu_custom_call.1} parent=1 // pred_fallthru
      _
    // Predicated region
    $region10: #{tpu_custom_call.1} parent=1 // pred_check
      _
    $region11: #{tpu_custom_call.1} parent=1 // pred_check_branch
      %36 = sbr.rel (0) target = $region13
    $region12: #{tpu_custom_call.1} parent=1 // pred_region
      %s38 = ssub.s32 256, 256
      %39 = vsyncadd [#allocation6], %s38
      %s40 = sshll.u32 [#allocation7], 4
      %s41 = int_to_ptr.vmem [resolvable:$true] %s40
      %46 = dma.hbm_to_vmem [thread:$0]  %s2, 256, %s41, [#allocation6], 128, 128, 8
    $region13: #{tpu_custom_call.1} parent=1 // pred_fallthru
      _
    // Predicated region
    $region14: #{tpu_custom_call.1} parent=1 // pred_check
      _
    $region15: #{tpu_custom_call.1} parent=1 // pred_check_branch
      %48 = sbr.rel (0) target = $region17
    $region16: #{tpu_custom_call.1} parent=1 // pred_region
      %49 = dma.done [#allocation3], 256
    $region17: #{tpu_custom_call.1} parent=1 // pred_fallthru
      _
    // Predicated region
    $region18: #{tpu_custom_call.1} parent=1 // pred_check
      _
    $region19: #{tpu_custom_call.1} parent=1 // pred_check_branch
      %51 = sbr.rel (0) target = $region21
    $region20: #{tpu_custom_call.1} parent=1 // pred_region
      %52 = dma.done [#allocation6], 3328
    $region21: #{tpu_custom_call.1} parent=1 // pred_fallthru
      _
    // Predicated region
    $region22: #{tpu_custom_call.1} parent=1 // pred_check
      _
    $region23: #{tpu_custom_call.1} parent=1 // pred_check_branch
      %54 = sbr.rel (0) target = $region25
    $region24: #{tpu_custom_call.1} parent=1 // pred_region
      %55 = dma.done [#allocation6], 256
    $region25: #{tpu_custom_call.1} parent=1 // pred_fallthru
      _
    %v57 = vld [vmem:[#allocation2] sm:$0xf]
    %v58 = vld [vmem:[#allocation2 + $0x4] sm:$0xf]
    %v59 = vld [vmem:[#allocation2 + $0x8] sm:$0xf]
    %v60 = vld [vmem:[#allocation2 + $0xc] sm:$0xf]
    %v61 = vunpack.c.l.bf16 %v57
    %v62 = vunpack.c.l.bf16 %v58
    %v63 = vunpack.c.l.bf16 %v59
    %v64 = vunpack.c.l.bf16 %v60
    %v65 = vld [vmem:[#allocation7] sm:$0xff]
    %v66 = vld [vmem:[#allocation7 + $0x8] sm:$0xff]
    %v67 = vlaneseq
    %v68 = vshrl.u32 %v67, 7
    %v69 = vlaneseq
    %v70 = vand.u32 %v69, 127
    %vm71 = vcmp.ge.s32.totalorder %v68, %v70
    %v72 = vld [vmem:[#allocation5] sm:$0xf]
    %v73 = vld [vmem:[#allocation5 + $0x4] sm:$0xf]
    %v74 = vld [vmem:[#allocation5 + $0x8] sm:$0xf]
    %v75 = vld [vmem:[#allocation5 + $0xc] sm:$0xf]
    %v76 = vld [vmem:[#allocation5 + $0x10] sm:$0xf]
    %v77 = vld [vmem:[#allocation5 + $0x14] sm:$0xf]
    %v78 = vld [vmem:[#allocation5 + $0x18] sm:$0xf]
    %v79 = vld [vmem:[#allocation5 + $0x1c] sm:$0xf]
    %v80 = vld [vmem:[#allocation5 + $0x20] sm:$0xf]
    %v81 = vld [vmem:[#allocation5 + $0x24] sm:$0xf]
    %v82 = vld [vmem:[#allocation5 + $0x28] sm:$0xf]
    %v83 = vld [vmem:[#allocation5 + $0x2c] sm:$0xf]
    %v84 = vld [vmem:[#allocation5 + $0x30] sm:$0xf]
    %v85 = vld [vmem:[#allocation5 + $0x34] sm:$0xf]
    %v86 = vld [vmem:[#allocation5 + $0x38] sm:$0xf]
    %v87 = vld [vmem:[#allocation5 + $0x3c] sm:$0xf]
    %v88 = vld [vmem:[#allocation5 + $0x40] sm:$0xf]
    %v89 = vld [vmem:[#allocation5 + $0x44] sm:$0xf]
    %v90 = vld [vmem:[#allocation5 + $0x48] sm:$0xf]
    %v91 = vld [vmem:[#allocation5 + $0x4c] sm:$0xf]
    %v92 = vld [vmem:[#allocation5 + $0x50] sm:$0xf]
    %v93 = vld [vmem:[#allocation5 + $0x54] sm:$0xf]
    %v94 = vld [vmem:[#allocation5 + $0x58] sm:$0xf]
    %v95 = vld [vmem:[#allocation5 + $0x5c] sm:$0xf]
    %vm96 = vcmask 261120
    %v97 = vsel %vm96, %v61, 0.0
    %98 = vadd.xlane.f32.xlu0 %v97
    %v99 = vpop.xlane.xlu0 %98
    %v100 = vsel %vm96, %v62, 0.0
    %101 = vadd.xlane.f32.xlu0 %v100
    %v102 = vpop.xlane.xlu0 %101
    %v103 = vsel %vm96, %v63, 0.0
    %104 = vadd.xlane.f32.xlu0 %v103
    %v105 = vpop.xlane.xlu0 %104
    %v106 = vsel %vm96, %v64, 0.0
    %107 = vadd.xlane.f32.xlu0 %v106
    %v108 = vpop.xlane.xlu0 %107
    %v109 = vrcp.pop 32.0
    %v110 = vmul.f32 %v99, %v109
    %v111 = vmul.f32 %v102, %v109
    %v112 = vmul.f32 %v105, %v109
    %v113 = vmul.f32 %v108, %v109
    %v114 = vsub.f32 %v61, %v110
    %v115 = vsub.f32 %v62, %v111
    %v116 = vsub.f32 %v63, %v112
    %v117 = vsub.f32 %v64, %v113
    %v118 = vmul.f32 %v114, %v114
    %v119 = vmul.f32 %v115, %v115
    %v120 = vmul.f32 %v116, %v116
    %v121 = vmul.f32 %v117, %v117
    %v122 = vsel %vm96, %v118, 0.0
    %123 = vadd.xlane.f32.xlu0 %v122
    %v124 = vpop.xlane.xlu0 %123
    %v125 = vsel %vm96, %v119, 0.0
    %126 = vadd.xlane.f32.xlu0 %v125
    %v127 = vpop.xlane.xlu0 %126
    %v128 = vsel %vm96, %v120, 0.0
    %129 = vadd.xlane.f32.xlu0 %v128
    %v130 = vpop.xlane.xlu0 %129
    %v131 = vsel %vm96, %v121, 0.0
    %132 = vadd.xlane.f32.xlu0 %v131
    %v133 = vpop.xlane.xlu0 %132
    %v134 = vmul.f32 %v124, %v109
    %v135 = vmul.f32 %v127, %v109
    %v136 = vmul.f32 %v130, %v109
    %v137 = vmul.f32 %v133, %v109
    %v138 = vadd.f32 %v134, 1e-05
    %v139 = vadd.f32 %v135, 1e-05
    %v140 = vadd.f32 %v136, 1e-05
    %v141 = vadd.f32 %v137, 1e-05
    %v142 = vrsqrt.pop %v138
    %v143 = vrsqrt.pop %v139
    %v144 = vrsqrt.pop %v140
    %v145 = vrsqrt.pop %v141
    %v146 = vmul.f32 %v114, %v142
    %v147 = vmul.f32 %v115, %v143
    %v148 = vmul.f32 %v116, %v144
    %v149 = vmul.f32 %v117, %v145
    %v150 = vlaneseq
    %v151 = vshrl.u32 %v150, 7
    %v152 = vsub.s32 0, %v151
    %v153 = vrot.slane %v65, %v152
    %v154 = vmul.f32 %v146, %v153
    %v155 = vmul.f32 %v147, %v153
    %v156 = vmul.f32 %v148, %v153
    %v157 = vmul.f32 %v149, %v153
    %159 = vrot.lane.b32.xlu0 %v153, 96
    %v160 = vpop.permute.xlu0 %159
    %v162 = vadd.f32 %v154, %v160
    %v163 = vadd.f32 %v155, %v160
    %v164 = vadd.f32 %v156, %v160
    %v165 = vadd.f32 %v157, %v160
    %v166 = vpack.c.bf16 %v163, %v162
    %v167 = vpack.c.bf16 %v165, %v164
    %v168 = vlaneseq
    %v169 = vshrl.u32 %v168, 7
    %v170 = vsub.s32 1, %v169
    %v171 = vrot.slane %v65, %v170
    %v176 = vunpack.c.l.b16 %v72
    %v177 = vunpack.c.l.b16 %v73
    %v178 = vunpack.c.l.b16 %v74
    %v179 = vunpack.c.l.b16 %v75
    %v180 = vpack.c.b16 %v177, %v176
    %v181 = vpack.c.b16 %v179, %v178
    %v185 = vsel %vm96, %v166, 0
    %v188 = vsel %vm96, %v167, 0
    %190 = vmatprep.subr.bf16.mxu0 0
    %191 = vmatpush1.bf16.msra.mxu0 %v180
    %192 = vmatprep.subr.bf16.mxu0 0
    %193 = vmatpush1.bf16.msra.mxu0 %v181
    %194 = vmatprep.subr.bf16.mxu0 0
    %195 = vmatpush1.bf16.msra.mxu0 0
    %196 = vmatprep.subr.bf16.mxu0 0
    %197 = vmatpush1.bf16.msra.mxu0 0
    %198 = vmatprep.subr.bf16.mxu0 0
    %199 = vmatpush1.bf16.msra.mxu0 0
    %200 = vmatprep.subr.bf16.mxu0 0
    %201 = vmatpush1.bf16.msra.mxu0 0
    %202 = vmatprep.subr.bf16.mxu0 0
    %203 = vmatpush1.bf16.msra.mxu0 0
    %204 = vmatprep.subr.bf16.mxu0 0
    %205 = vmatpush1.bf16.msra.mxu0 0
    %206 = vmatprep.subr.bf16.mxu0 0
    %207 = vmatpush1.bf16.msra.mxu0 0
    %208 = vmatprep.subr.bf16.mxu0 0
    %209 = vmatpush1.bf16.msra.mxu0 0
    %210 = vmatprep.subr.bf16.mxu0 0
    %211 = vmatpush1.bf16.msra.mxu0 0
    %212 = vmatprep.subr.bf16.mxu0 0
    %213 = vmatpush1.bf16.msra.mxu0 0
    %214 = vmatprep.subr.bf16.mxu0 0
    %215 = vmatpush1.bf16.msra.mxu0 0
    %216 = vmatprep.subr.bf16.mxu0 0
    %217 = vmatpush1.bf16.msra.mxu0 0
    %218 = vmatprep.subr.bf16.mxu0 0
    %219 = vmatpush1.bf16.msra.mxu0 0
    %220 = vmatprep.subr.bf16.mxu0 0
    %221 = vmatpush1.bf16.msra.mxu0 0
    %222 = vmatprep.mubr.bf16.mxu0 0
    %223 = vmatmul.mubr.bf16.gmra.mrb[0].mxu0 %v185
    %v224 = vpop.f32.mrb[0].mxu0
    %v225 = vadd.f32 %v171, %v224
    %v226 = vpop.f32.mrb[0].mxu0
    %v227 = vpop.f32.mrb[0].mxu0
    %v228 = vadd.f32 %v171, %v227
    %v229 = vpop.f32.mrb[0].mxu0
    %230 = vmatprep.mubr.bf16.mxu0 0
    %231 = vmatmul.mubr.bf16.gmra.mrb[0].mxu0 %v188
    %v232 = vpop.f32.mrb[0].mxu0
    %v233 = vadd.f32 %v171, %v232
    %v234 = vpop.f32.mrb[0].mxu0
    %v235 = vpop.f32.mrb[0].mxu0
    %v236 = vadd.f32 %v171, %v235
    %v237 = vpop.f32.mrb[0].mxu0
    %238 = vdwg.mxu0
    %v239 = vpack.c.bf16 %v225, %v225
    %v240 = vpack.c.bf16 %v228, %v228
    %v241 = vpack.c.bf16 %v233, %v233
    %v242 = vpack.c.bf16 %v236, %v236
    %244 = vrot.lane.b32.xlu0 %v239, 96
    %v245 = vpop.permute.xlu0 %244
    %vm246 = vcmask 64512
    %v248 = vsel %vm246, %v239, 0
    %v251 = vsel %vm246, %v245, 0
    %253 = vmatprep.subr.bf16.mxu0 0
    %254 = vmatpush1.bf16.xpose.msra.mxu0 %v251
    %255 = vmatprep.subr.bf16.mxu0 0
    %256 = vmatpush1.bf16.xpose.msra.mxu0 0
    %257 = vmatprep.subr.bf16.mxu0 0
    %258 = vmatpush1.bf16.xpose.msra.mxu0 0
    %259 = vmatprep.subr.bf16.mxu0 0
    %260 = vmatpush1.bf16.xpose.msra.mxu0 0
    %261 = vmatprep.subr.bf16.mxu0 0
    %262 = vmatpush1.bf16.xpose.msra.mxu0 0
    %263 = vmatprep.subr.bf16.mxu0 0
    %264 = vmatpush1.bf16.xpose.msra.mxu0 0
    %265 = vmatprep.subr.bf16.mxu0 0
    %266 = vmatpush1.bf16.xpose.msra.mxu0 0
    %267 = vmatprep.subr.bf16.mxu0 0
    %268 = vmatpush1.bf16.xpose.msra.mxu0 0
    %269 = vmatprep.subr.bf16.mxu0 0
    %270 = vmatpush1.bf16.xpose.msra.mxu0 0
    %271 = vmatprep.subr.bf16.mxu0 0
    %272 = vmatpush1.bf16.xpose.msra.mxu0 0
    %273 = vmatprep.subr.bf16.mxu0 0
    %274 = vmatpush1.bf16.xpose.msra.mxu0 0
    %275 = vmatprep.subr.bf16.mxu0 0
    %276 = vmatpush1.bf16.xpose.msra.mxu0 0
    %277 = vmatprep.subr.bf16.mxu0 0
    %278 = vmatpush1.bf16.xpose.msra.mxu0 0
    %279 = vmatprep.subr.bf16.mxu0 0
    %280 = vmatpush1.bf16.xpose.msra.mxu0 0
    %281 = vmatprep.subr.bf16.mxu0 0
    %282 = vmatpush1.bf16.xpose.msra.mxu0 0
    %283 = vmatprep.subr.bf16.mxu0 0
    %284 = vmatpush1.bf16.xpose.msra.mxu0 0
    %285 = vmatprep.mubr.bf16.mxu0 0
    %286 = vmatmul.mubr.bf16.gmra.mrb[0].mxu0 %v248
    %v287 = vpop.f32.mrb[0].mxu0
    %v288 = vadd.f32 0.0, %v287
    %v289 = vpop.f32.mrb[0].mxu0
    %v290 = vpop.f32.mrb[0].mxu0
    %v291 = vpop.f32.mrb[0].mxu0
    %292 = vdwg.mxu0
    %294 = vrot.lane.b32.xlu0 %v240, 96
    %v295 = vpop.permute.xlu0 %294
    %v297 = vsel %vm246, %v240, 0
    %v300 = vsel %vm246, %v295, 0
    %302 = vmatprep.subr.bf16.mxu0 0
    %303 = vmatpush1.bf16.xpose.msra.mxu0 %v300
    %304 = vmatprep.subr.bf16.mxu0 0
    %305 = vmatpush1.bf16.xpose.msra.mxu0 0
    %306 = vmatprep.subr.bf16.mxu0 0
    %307 = vmatpush1.bf16.xpose.msra.mxu0 0
    %308 = vmatprep.subr.bf16.mxu0 0
    %309 = vmatpush1.bf16.xpose.msra.mxu0 0
    %310 = vmatprep.subr.bf16.mxu0 0
    %311 = vmatpush1.bf16.xpose.msra.mxu0 0
    %312 = vmatprep.subr.bf16.mxu0 0
    %313 = vmatpush1.bf16.xpose.msra.mxu0 0
    %314 = vmatprep.subr.bf16.mxu0 0
    %315 = vmatpush1.bf16.xpose.msra.mxu0 0
    %316 = vmatprep.subr.bf16.mxu0 0
    %317 = vmatpush1.bf16.xpose.msra.mxu0 0
    %318 = vmatprep.subr.bf16.mxu0 0
    %319 = vmatpush1.bf16.xpose.msra.mxu0 0
    %320 = vmatprep.subr.bf16.mxu0 0
    %321 = vmatpush1.bf16.xpose.msra.mxu0 0
    %322 = vmatprep.subr.bf16.mxu0 0
    %323 = vmatpush1.bf16.xpose.msra.mxu0 0
    %324 = vmatprep.subr.bf16.mxu0 0
    %325 = vmatpush1.bf16.xpose.msra.mxu0 0
    %326 = vmatprep.subr.bf16.mxu0 0
    %327 = vmatpush1.bf16.xpose.msra.mxu0 0
    %328 = vmatprep.subr.bf16.mxu0 0
    %329 = vmatpush1.bf16.xpose.msra.mxu0 0
    %330 = vmatprep.subr.bf16.mxu0 0
    %331 = vmatpush1.bf16.xpose.msra.mxu0 0
    %332 = vmatprep.subr.bf16.mxu0 0
    %333 = vmatpush1.bf16.xpose.msra.mxu0 0
    %334 = vmatprep.mubr.bf16.mxu0 0
    %335 = vmatmul.mubr.bf16.gmra.mrb[0].mxu0 %v297
    %v336 = vpop.f32.mrb[0].mxu0
    %v337 = vadd.f32 0.0, %v336
    %v338 = vpop.f32.mrb[0].mxu0
    %v339 = vpop.f32.mrb[0].mxu0
    %v340 = vpop.f32.mrb[0].mxu0
    %341 = vdwg.mxu0
    %343 = vrot.lane.b32.xlu0 %v241, 96
    %v344 = vpop.permute.xlu0 %343
    %v346 = vsel %vm246, %v241, 0
    %v349 = vsel %vm246, %v344, 0
    %351 = vmatprep.subr.bf16.mxu0 0
    %352 = vmatpush1.bf16.xpose.msra.mxu0 %v349
    %353 = vmatprep.subr.bf16.mxu0 0
    %354 = vmatpush1.bf16.xpose.msra.mxu0 0
    %355 = vmatprep.subr.bf16.mxu0 0
    %356 = vmatpush1.bf16.xpose.msra.mxu0 0
    %357 = vmatprep.subr.bf16.mxu0 0
    %358 = vmatpush1.bf16.xpose.msra.mxu0 0
    %359 = vmatprep.subr.bf16.mxu0 0
    %360 = vmatpush1.bf16.xpose.msra.mxu0 0
    %361 = vmatprep.subr.bf16.mxu0 0
    %362 = vmatpush1.bf16.xpose.msra.mxu0 0
    %363 = vmatprep.subr.bf16.mxu0 0
    %364 = vmatpush1.bf16.xpose.msra.mxu0 0
    %365 = vmatprep.subr.bf16.mxu0 0
    %366 = vmatpush1.bf16.xpose.msra.mxu0 0
    %367 = vmatprep.subr.bf16.mxu0 0
    %368 = vmatpush1.bf16.xpose.msra.mxu0 0
    %369 = vmatprep.subr.bf16.mxu0 0
    %370 = vmatpush1.bf16.xpose.msra.mxu0 0
    %371 = vmatprep.subr.bf16.mxu0 0
    %372 = vmatpush1.bf16.xpose.msra.mxu0 0
    %373 = vmatprep.subr.bf16.mxu0 0
    %374 = vmatpush1.bf16.xpose.msra.mxu0 0
    %375 = vmatprep.subr.bf16.mxu0 0
    %376 = vmatpush1.bf16.xpose.msra.mxu0 0
    %377 = vmatprep.subr.bf16.mxu0 0
    %378 = vmatpush1.bf16.xpose.msra.mxu0 0
    %379 = vmatprep.subr.bf16.mxu0 0
    %380 = vmatpush1.bf16.xpose.msra.mxu0 0
    %381 = vmatprep.subr.bf16.mxu0 0
    %382 = vmatpush1.bf16.xpose.msra.mxu0 0
    %383 = vmatprep.mubr.bf16.mxu0 0
    %384 = vmatmul.mubr.bf16.gmra.mrb[0].mxu0 %v346
    %v385 = vpop.f32.mrb[0].mxu0
    %v386 = vadd.f32 0.0, %v385
    %v387 = vpop.f32.mrb[0].mxu0
    %v388 = vpop.f32.mrb[0].mxu0
    %v389 = vpop.f32.mrb[0].mxu0
    %390 = vdwg.mxu0
    %392 = vrot.lane.b32.xlu0 %v242, 96
    %v393 = vpop.permute.xlu0 %392
    %v395 = vsel %vm246, %v242, 0
    %v398 = vsel %vm246, %v393, 0
    %400 = vmatprep.subr.bf16.mxu0 0
    %401 = vmatpush1.bf16.xpose.msra.mxu0 %v398
    %402 = vmatprep.subr.bf16.mxu0 0
    %403 = vmatpush1.bf16.xpose.msra.mxu0 0
    %404 = vmatprep.subr.bf16.mxu0 0
    %405 = vmatpush1.bf16.xpose.msra.mxu0 0
    %406 = vmatprep.subr.bf16.mxu0 0
    %407 = vmatpush1.bf16.xpose.msra.mxu0 0
    %408 = vmatprep.subr.bf16.mxu0 0
    %409 = vmatpush1.bf16.xpose.msra.mxu0 0
    %410 = vmatprep.subr.bf16.mxu0 0
    %411 = vmatpush1.bf16.xpose.msra.mxu0 0
    %412 = vmatprep.subr.bf16.mxu0 0
    %413 = vmatpush1.bf16.xpose.msra.mxu0 0
    %414 = vmatprep.subr.bf16.mxu0 0
    %415 = vmatpush1.bf16.xpose.msra.mxu0 0
    %416 = vmatprep.subr.bf16.mxu0 0
    %417 = vmatpush1.bf16.xpose.msra.mxu0 0
    %418 = vmatprep.subr.bf16.mxu0 0
    %419 = vmatpush1.bf16.xpose.msra.mxu0 0
    %420 = vmatprep.subr.bf16.mxu0 0
    %421 = vmatpush1.bf16.xpose.msra.mxu0 0
    %422 = vmatprep.subr.bf16.mxu0 0
    %423 = vmatpush1.bf16.xpose.msra.mxu0 0
    %424 = vmatprep.subr.bf16.mxu0 0
    %425 = vmatpush1.bf16.xpose.msra.mxu0 0
    %426 = vmatprep.subr.bf16.mxu0 0
    %427 = vmatpush1.bf16.xpose.msra.mxu0 0
    %428 = vmatprep.subr.bf16.mxu0 0
    %429 = vmatpush1.bf16.xpose.msra.mxu0 0
    %430 = vmatprep.subr.bf16.mxu0 0
    %431 = vmatpush1.bf16.xpose.msra.mxu0 0
    %432 = vmatprep.mubr.bf16.mxu0 0
    %433 = vmatmul.mubr.bf16.gmra.mrb[0].mxu0 %v395
    %v434 = vpop.f32.mrb[0].mxu0
    %v435 = vadd.f32 0.0, %v434
    %v436 = vpop.f32.mrb[0].mxu0
    %v437 = vpop.f32.mrb[0].mxu0
    %v438 = vpop.f32.mrb[0].mxu0
    %439 = vdwg.mxu0
    %v440 = vmul.f32 %v288, 0.35355338
    %v441 = vmul.f32 %v337, 0.35355338
    %v442 = vmul.f32 %v386, 0.35355338
    %v443 = vmul.f32 %v435, 0.35355338
    %v444 = vsel %vm71, 1, 0
    %vm445 = vcmp.eq.s32.totalorder %v444, 1
    %v446 = vsel %vm445, %v440, -1e+30
    %v447 = vsel %vm445, %v441, -1e+30
    %v448 = vsel %vm445, %v442, -1e+30
    %v449 = vsel %vm445, %v443, -1e+30
    %v450 = vsel %vm246, %v446, -inf
    %451 = vmax.xlane.f32.xlu0 %v450
    %v452 = vpop.xlane.xlu0 %451
    %v453 = vsel %vm246, %v447, -inf
    %454 = vmax.xlane.f32.xlu0 %v453
    %v455 = vpop.xlane.xlu0 %454
    %v456 = vsel %vm246, %v448, -inf
    %457 = vmax.xlane.f32.xlu0 %v456
    %v458 = vpop.xlane.xlu0 %457
    %v459 = vsel %vm246, %v449, -inf
    %460 = vmax.xlane.f32.xlu0 %v459
    %v461 = vpop.xlane.xlu0 %460
    %v462 = vsub.f32 %v446, %v452
    %v463 = vsub.f32 %v447, %v455
    %v464 = vsub.f32 %v448, %v458
    %v465 = vsub.f32 %v449, %v461
    %v466 = vmul.f32 %v462, 1.442695
    %v467 = vpow.pop %v466
    %v468 = vmul.f32 %v463, 1.442695
    %v469 = vpow.pop %v468
    %v470 = vmul.f32 %v464, 1.442695
    %v471 = vpow.pop %v470
    %v472 = vmul.f32 %v465, 1.442695
    %v473 = vpow.pop %v472
    %v474 = vsel %vm246, %v467, 0.0
    %475 = vadd.xlane.f32.xlu0 %v474
    %v476 = vpop.xlane.xlu0 %475
    %v477 = vsel %vm246, %v469, 0.0
    %478 = vadd.xlane.f32.xlu0 %v477
    %v479 = vpop.xlane.xlu0 %478
    %v480 = vsel %vm246, %v471, 0.0
    %481 = vadd.xlane.f32.xlu0 %v480
    %v482 = vpop.xlane.xlu0 %481
    %v483 = vsel %vm246, %v473, 0.0
    %484 = vadd.xlane.f32.xlu0 %v483
    %v485 = vpop.xlane.xlu0 %484
    %v486 = vrcp.pop %v476
    %v487 = vrcp.pop %v479
    %v488 = vrcp.pop %v482
    %v489 = vrcp.pop %v485
    %v490 = vmul.f32 %v467, %v486
    %v491 = vmul.f32 %v469, %v487
    %v492 = vmul.f32 %v471, %v488
    %v493 = vmul.f32 %v473, %v489
    %v494 = vpack.c.bf16 %v490, %v490
    %v495 = vpack.c.bf16 %v491, %v491
    %v496 = vpack.c.bf16 %v492, %v492
    %v497 = vpack.c.bf16 %v493, %v493
    %498 = vrot.lane.b32.xlu0 %v239, 64
    %v499 = vpop.permute.xlu0 %498
    %v501 = vsel %vm246, %v494, 0
    %vm503 = vcmask 1043456
    %v505 = vsel %vm503, %v499, 0
    %507 = vmatprep.subr.bf16.mxu0 0
    %508 = vmatpush1.bf16.msra.mxu0 %v505
    %509 = vmatprep.subr.bf16.mxu0 0
    %510 = vmatpush1.bf16.msra.mxu0 0
    %511 = vmatprep.subr.bf16.mxu0 0
    %512 = vmatpush1.bf16.msra.mxu0 0
    %513 = vmatprep.subr.bf16.mxu0 0
    %514 = vmatpush1.bf16.msra.mxu0 0
    %515 = vmatprep.subr.bf16.mxu0 0
    %516 = vmatpush1.bf16.msra.mxu0 0
    %517 = vmatprep.subr.bf16.mxu0 0
    %518 = vmatpush1.bf16.msra.mxu0 0
    %519 = vmatprep.subr.bf16.mxu0 0
    %520 = vmatpush1.bf16.msra.mxu0 0
    %521 = vmatprep.subr.bf16.mxu0 0
    %522 = vmatpush1.bf16.msra.mxu0 0
    %523 = vmatprep.subr.bf16.mxu0 0
    %524 = vmatpush1.bf16.msra.mxu0 0
    %525 = vmatprep.subr.bf16.mxu0 0
    %526 = vmatpush1.bf16.msra.mxu0 0
    %527 = vmatprep.subr.bf16.mxu0 0
    %528 = vmatpush1.bf16.msra.mxu0 0
    %529 = vmatprep.subr.bf16.mxu0 0
    %530 = vmatpush1.bf16.msra.mxu0 0
    %531 = vmatprep.subr.bf16.mxu0 0
    %532 = vmatpush1.bf16.msra.mxu0 0
    %533 = vmatprep.subr.bf16.mxu0 0
    %534 = vmatpush1.bf16.msra.mxu0 0
    %535 = vmatprep.subr.bf16.mxu0 0
    %536 = vmatpush1.bf16.msra.mxu0 0
    %537 = vmatprep.subr.bf16.mxu0 0
    %538 = vmatpush1.bf16.msra.mxu0 0
    %539 = vmatprep.mubr.bf16.mxu0 0
    %540 = vmatmul.mubr.bf16.gmra.mrb[0].mxu0 %v501
    %v541 = vpop.f32.mrb[0].mxu0
    %v542 = vadd.f32 0.0, %v541
    %v543 = vpop.f32.mrb[0].mxu0
    %v544 = vpop.f32.mrb[0].mxu0
    %v545 = vpop.f32.mrb[0].mxu0
    %546 = vdwg.mxu0
    %547 = vrot.lane.b32.xlu0 %v240, 64
    %v548 = vpop.permute.xlu0 %547
    %v550 = vsel %vm246, %v495, 0
    %v553 = vsel %vm503, %v548, 0
    %555 = vmatprep.subr.bf16.mxu0 0
    %556 = vmatpush1.bf16.msra.mxu0 %v553
    %557 = vmatprep.subr.bf16.mxu0 0
    %558 = vmatpush1.bf16.msra.mxu0 0
    %559 = vmatprep.subr.bf16.mxu0 0
    %560 = vmatpush1.bf16.msra.mxu0 0
    %561 = vmatprep.subr.bf16.mxu0 0
    %562 = vmatpush1.bf16.msra.mxu0 0
    %563 = vmatprep.subr.bf16.mxu0 0
    %564 = vmatpush1.bf16.msra.mxu0 0
    %565 = vmatprep.subr.bf16.mxu0 0
    %566 = vmatpush1.bf16.msra.mxu0 0
    %567 = vmatprep.subr.bf16.mxu0 0
    %568 = vmatpush1.bf16.msra.mxu0 0
    %569 = vmatprep.subr.bf16.mxu0 0
    %570 = vmatpush1.bf16.msra.mxu0 0
    %571 = vmatprep.subr.bf16.mxu0 0
    %572 = vmatpush1.bf16.msra.mxu0 0
    %573 = vmatprep.subr.bf16.mxu0 0
    %574 = vmatpush1.bf16.msra.mxu0 0
    %575 = vmatprep.subr.bf16.mxu0 0
    %576 = vmatpush1.bf16.msra.mxu0 0
    %577 = vmatprep.subr.bf16.mxu0 0
    %578 = vmatpush1.bf16.msra.mxu0 0
    %579 = vmatprep.subr.bf16.mxu0 0
    %580 = vmatpush1.bf16.msra.mxu0 0
    %581 = vmatprep.subr.bf16.mxu0 0
    %582 = vmatpush1.bf16.msra.mxu0 0
    %583 = vmatprep.subr.bf16.mxu0 0
    %584 = vmatpush1.bf16.msra.mxu0 0
    %585 = vmatprep.subr.bf16.mxu0 0
    %586 = vmatpush1.bf16.msra.mxu0 0
    %587 = vmatprep.mubr.bf16.mxu0 0
    %588 = vmatmul.mubr.bf16.gmra.mrb[0].mxu0 %v550
    %v589 = vpop.f32.mrb[0].mxu0
    %v590 = vadd.f32 0.0, %v589
    %v591 = vpop.f32.mrb[0].mxu0
    %v592 = vpop.f32.mrb[0].mxu0
    %v593 = vpop.f32.mrb[0].mxu0
    %594 = vdwg.mxu0
    %595 = vrot.lane.b32.xlu0 %v241, 64
    %v596 = vpop.permute.xlu0 %595
    %v598 = vsel %vm246, %v496, 0
    %v601 = vsel %vm503, %v596, 0
    %603 = vmatprep.subr.bf16.mxu0 0
    %604 = vmatpush1.bf16.msra.mxu0 %v601
    %605 = vmatprep.subr.bf16.mxu0 0
    %606 = vmatpush1.bf16.msra.mxu0 0
    %607 = vmatprep.subr.bf16.mxu0 0
    %608 = vmatpush1.bf16.msra.mxu0 0
    %609 = vmatprep.subr.bf16.mxu0 0
    %610 = vmatpush1.bf16.msra.mxu0 0
    %611 = vmatprep.subr.bf16.mxu0 0
    %612 = vmatpush1.bf16.msra.mxu0 0
    %613 = vmatprep.subr.bf16.mxu0 0
    %614 = vmatpush1.bf16.msra.mxu0 0
    %615 = vmatprep.subr.bf16.mxu0 0
    %616 = vmatpush1.bf16.msra.mxu0 0
    %617 = vmatprep.subr.bf16.mxu0 0
    %618 = vmatpush1.bf16.msra.mxu0 0
    %619 = vmatprep.subr.bf16.mxu0 0
    %620 = vmatpush1.bf16.msra.mxu0 0
    %621 = vmatprep.subr.bf16.mxu0 0
    %622 = vmatpush1.bf16.msra.mxu0 0
    %623 = vmatprep.subr.bf16.mxu0 0
    %624 = vmatpush1.bf16.msra.mxu0 0
    %625 = vmatprep.subr.bf16.mxu0 0
    %626 = vmatpush1.bf16.msra.mxu0 0
    %627 = vmatprep.subr.bf16.mxu0 0
    %628 = vmatpush1.bf16.msra.mxu0 0
    %629 = vmatprep.subr.bf16.mxu0 0
    %630 = vmatpush1.bf16.msra.mxu0 0
    %631 = vmatprep.subr.bf16.mxu0 0
    %632 = vmatpush1.bf16.msra.mxu0 0
    %633 = vmatprep.subr.bf16.mxu0 0
    %634 = vmatpush1.bf16.msra.mxu0 0
    %635 = vmatprep.mubr.bf16.mxu0 0
    %636 = vmatmul.mubr.bf16.gmra.mrb[0].mxu0 %v598
    %v637 = vpop.f32.mrb[0].mxu0
    %v638 = vadd.f32 0.0, %v637
    %v639 = vpop.f32.mrb[0].mxu0
    %v640 = vpop.f32.mrb[0].mxu0
    %v641 = vpop.f32.mrb[0].mxu0
    %642 = vdwg.mxu0
    %643 = vrot.lane.b32.xlu0 %v242, 64
    %v644 = vpop.permute.xlu0 %643
    %v646 = vsel %vm246, %v497, 0
    %v649 = vsel %vm503, %v644, 0
    %651 = vmatprep.subr.bf16.mxu0 0
    %652 = vmatpush1.bf16.msra.mxu0 %v649
    %653 = vmatprep.subr.bf16.mxu0 0
    %654 = vmatpush1.bf16.msra.mxu0 0
    %655 = vmatprep.subr.bf16.mxu0 0
    %656 = vmatpush1.bf16.msra.mxu0 0
    %657 = vmatprep.subr.bf16.mxu0 0
    %658 = vmatpush1.bf16.msra.mxu0 0
    %659 = vmatprep.subr.bf16.mxu0 0
    %660 = vmatpush1.bf16.msra.mxu0 0
    %661 = vmatprep.subr.bf16.mxu0 0
    %662 = vmatpush1.bf16.msra.mxu0 0
    %663 = vmatprep.subr.bf16.mxu0 0
    %664 = vmatpush1.bf16.msra.mxu0 0
    %665 = vmatprep.subr.bf16.mxu0 0
    %666 = vmatpush1.bf16.msra.mxu0 0
    %667 = vmatprep.subr.bf16.mxu0 0
    %668 = vmatpush1.bf16.msra.mxu0 0
    %669 = vmatprep.subr.bf16.mxu0 0
    %670 = vmatpush1.bf16.msra.mxu0 0
    %671 = vmatprep.subr.bf16.mxu0 0
    %672 = vmatpush1.bf16.msra.mxu0 0
    %673 = vmatprep.subr.bf16.mxu0 0
    %674 = vmatpush1.bf16.msra.mxu0 0
    %675 = vmatprep.subr.bf16.mxu0 0
    %676 = vmatpush1.bf16.msra.mxu0 0
    %677 = vmatprep.subr.bf16.mxu0 0
    %678 = vmatpush1.bf16.msra.mxu0 0
    %679 = vmatprep.subr.bf16.mxu0 0
    %680 = vmatpush1.bf16.msra.mxu0 0
    %681 = vmatprep.subr.bf16.mxu0 0
    %682 = vmatpush1.bf16.msra.mxu0 0
    %683 = vmatprep.mubr.bf16.mxu0 0
    %684 = vmatmul.mubr.bf16.gmra.mrb[0].mxu0 %v646
    %v685 = vpop.f32.mrb[0].mxu0
    %v686 = vadd.f32 0.0, %v685
    %v687 = vpop.f32.mrb[0].mxu0
    %v688 = vpop.f32.mrb[0].mxu0
    %v689 = vpop.f32.mrb[0].mxu0
    %690 = vdwg.mxu0
    %691 = vrot.lane.b32.xlu0 %v239, 120
    %v692 = vpop.permute.xlu0 %691
    %693 = vrot.lane.b32.xlu0 %v239, 88
    %v694 = vpop.permute.xlu0 %693
    %v696 = vsel %vm246, %v692, 0
    %v699 = vsel %vm246, %v694, 0
    %701 = vmatprep.subr.bf16.mxu0 0
    %702 = vmatpush1.bf16.xpose.msra.mxu0 %v699
    %703 = vmatprep.subr.bf16.mxu0 0
    %704 = vmatpush1.bf16.xpose.msra.mxu0 0
    %705 = vmatprep.subr.bf16.mxu0 0
    %706 = vmatpush1.bf16.xpose.msra.mxu0 0
    %707 = vmatprep.subr.bf16.mxu0 0
    %708 = vmatpush1.bf16.xpose.msra.mxu0 0
    %709 = vmatprep.subr.bf16.mxu0 0
    %710 = vmatpush1.bf16.xpose.msra.mxu0 0
    %711 = vmatprep.subr.bf16.mxu0 0
    %712 = vmatpush1.bf16.xpose.msra.mxu0 0
    %713 = vmatprep.subr.bf16.mxu0 0
    %714 = vmatpush1.bf16.xpose.msra.mxu0 0
    %715 = vmatprep.subr.bf16.mxu0 0
    %716 = vmatpush1.bf16.xpose.msra.mxu0 0
    %717 = vmatprep.subr.bf16.mxu0 0
    %718 = vmatpush1.bf16.xpose.msra.mxu0 0
    %719 = vmatprep.subr.bf16.mxu0 0
    %720 = vmatpush1.bf16.xpose.msra.mxu0 0
    %721 = vmatprep.subr.bf16.mxu0 0
    %722 = vmatpush1.bf16.xpose.msra.mxu0 0
    %723 = vmatprep.subr.bf16.mxu0 0
    %724 = vmatpush1.bf16.xpose.msra.mxu0 0
    %725 = vmatprep.subr.bf16.mxu0 0
    %726 = vmatpush1.bf16.xpose.msra.mxu0 0
    %727 = vmatprep.subr.bf16.mxu0 0
    %728 = vmatpush1.bf16.xpose.msra.mxu0 0
    %729 = vmatprep.subr.bf16.mxu0 0
    %730 = vmatpush1.bf16.xpose.msra.mxu0 0
    %731 = vmatprep.subr.bf16.mxu0 0
    %732 = vmatpush1.bf16.xpose.msra.mxu0 0
    %733 = vmatprep.mubr.bf16.mxu0 0
    %734 = vmatmul.mubr.bf16.gmra.mrb[0].mxu0 %v696
    %v735 = vpop.f32.mrb[0].mxu0
    %v736 = vadd.f32 0.0, %v735
    %v737 = vpop.f32.mrb[0].mxu0
    %v738 = vpop.f32.mrb[0].mxu0
    %v739 = vpop.f32.mrb[0].mxu0
    %740 = vdwg.mxu0
    %741 = vrot.lane.b32.xlu0 %v240, 120
    %v742 = vpop.permute.xlu0 %741
    %743 = vrot.lane.b32.xlu0 %v240, 88
    %v744 = vpop.permute.xlu0 %743
    %v746 = vsel %vm246, %v742, 0
    %v749 = vsel %vm246, %v744, 0
    %751 = vmatprep.subr.bf16.mxu0 0
    %752 = vmatpush1.bf16.xpose.msra.mxu0 %v749
    %753 = vmatprep.subr.bf16.mxu0 0
    %754 = vmatpush1.bf16.xpose.msra.mxu0 0
    %755 = vmatprep.subr.bf16.mxu0 0
    %756 = vmatpush1.bf16.xpose.msra.mxu0 0
    %757 = vmatprep.subr.bf16.mxu0 0
    %758 = vmatpush1.bf16.xpose.msra.mxu0 0
    %759 = vmatprep.subr.bf16.mxu0 0
    %760 = vmatpush1.bf16.xpose.msra.mxu0 0
    %761 = vmatprep.subr.bf16.mxu0 0
    %762 = vmatpush1.bf16.xpose.msra.mxu0 0
    %763 = vmatprep.subr.bf16.mxu0 0
    %764 = vmatpush1.bf16.xpose.msra.mxu0 0
    %765 = vmatprep.subr.bf16.mxu0 0
    %766 = vmatpush1.bf16.xpose.msra.mxu0 0
    %767 = vmatprep.subr.bf16.mxu0 0
    %768 = vmatpush1.bf16.xpose.msra.mxu0 0
    %769 = vmatprep.subr.bf16.mxu0 0
    %770 = vmatpush1.bf16.xpose.msra.mxu0 0
    %771 = vmatprep.subr.bf16.mxu0 0
    %772 = vmatpush1.bf16.xpose.msra.mxu0 0
    %773 = vmatprep.subr.bf16.mxu0 0
    %774 = vmatpush1.bf16.xpose.msra.mxu0 0
    %775 = vmatprep.subr.bf16.mxu0 0
    %776 = vmatpush1.bf16.xpose.msra.mxu0 0
    %777 = vmatprep.subr.bf16.mxu0 0
    %778 = vmatpush1.bf16.xpose.msra.mxu0 0
    %779 = vmatprep.subr.bf16.mxu0 0
    %780 = vmatpush1.bf16.xpose.msra.mxu0 0
    %781 = vmatprep.subr.bf16.mxu0 0
    %782 = vmatpush1.bf16.xpose.msra.mxu0 0
    %783 = vmatprep.mubr.bf16.mxu0 0
    %784 = vmatmul.mubr.bf16.gmra.mrb[0].mxu0 %v746
    %v785 = vpop.f32.mrb[0].mxu0
    %v786 = vadd.f32 0.0, %v785
    %v787 = vpop.f32.mrb[0].mxu0
    %v788 = vpop.f32.mrb[0].mxu0
    %v789 = vpop.f32.mrb[0].mxu0
    %790 = vdwg.mxu0
    %791 = vrot.lane.b32.xlu0 %v241, 120
    %v792 = vpop.permute.xlu0 %791
    %793 = vrot.lane.b32.xlu0 %v241, 88
    %v794 = vpop.permute.xlu0 %793
    %v796 = vsel %vm246, %v792, 0
    %v799 = vsel %vm246, %v794, 0
    %801 = vmatprep.subr.bf16.mxu0 0
    %802 = vmatpush1.bf16.xpose.msra.mxu0 %v799
    %803 = vmatprep.subr.bf16.mxu0 0
    %804 = vmatpush1.bf16.xpose.msra.mxu0 0
    %805 = vmatprep.subr.bf16.mxu0 0
    %806 = vmatpush1.bf16.xpose.msra.mxu0 0
    %807 = vmatprep.subr.bf16.mxu0 0
    %808 = vmatpush1.bf16.xpose.msra.mxu0 0
    %809 = vmatprep.subr.bf16.mxu0 0
    %810 = vmatpush1.bf16.xpose.msra.mxu0 0
    %811 = vmatprep.subr.bf16.mxu0 0
    %812 = vmatpush1.bf16.xpose.msra.mxu0 0
    %813 = vmatprep.subr.bf16.mxu0 0
    %814 = vmatpush1.bf16.xpose.msra.mxu0 0
    %815 = vmatprep.subr.bf16.mxu0 0
    %816 = vmatpush1.bf16.xpose.msra.mxu0 0
    %817 = vmatprep.subr.bf16.mxu0 0
    %818 = vmatpush1.bf16.xpose.msra.mxu0 0
    %819 = vmatprep.subr.bf16.mxu0 0
    %820 = vmatpush1.bf16.xpose.msra.mxu0 0
    %821 = vmatprep.subr.bf16.mxu0 0
    %822 = vmatpush1.bf16.xpose.msra.mxu0 0
    %823 = vmatprep.subr.bf16.mxu0 0
    %824 = vmatpush1.bf16.xpose.msra.mxu0 0
    %825 = vmatprep.subr.bf16.mxu0 0
    %826 = vmatpush1.bf16.xpose.msra.mxu0 0
    %827 = vmatprep.subr.bf16.mxu0 0
    %828 = vmatpush1.bf16.xpose.msra.mxu0 0
    %829 = vmatprep.subr.bf16.mxu0 0
    %830 = vmatpush1.bf16.xpose.msra.mxu0 0
    %831 = vmatprep.subr.bf16.mxu0 0
    %832 = vmatpush1.bf16.xpose.msra.mxu0 0
    %833 = vmatprep.mubr.bf16.mxu0 0
    %834 = vmatmul.mubr.bf16.gmra.mrb[0].mxu0 %v796
    %v835 = vpop.f32.mrb[0].mxu0
    %v836 = vadd.f32 0.0, %v835
    %v837 = vpop.f32.mrb[0].mxu0
    %v838 = vpop.f32.mrb[0].mxu0
    %v839 = vpop.f32.mrb[0].mxu0
    %840 = vdwg.mxu0
    %841 = vrot.lane.b32.xlu0 %v242, 120
    %v842 = vpop.permute.xlu0 %841
    %843 = vrot.lane.b32.xlu0 %v242, 88
    %v844 = vpop.permute.xlu0 %843
    %v846 = vsel %vm246, %v842, 0
    %v849 = vsel %vm246, %v844, 0
    %851 = vmatprep.subr.bf16.mxu0 0
    %852 = vmatpush1.bf16.xpose.msra.mxu0 %v849
    %853 = vmatprep.subr.bf16.mxu0 0
    %854 = vmatpush1.bf16.xpose.msra.mxu0 0
    %855 = vmatprep.subr.bf16.mxu0 0
    %856 = vmatpush1.bf16.xpose.msra.mxu0 0
    %857 = vmatprep.subr.bf16.mxu0 0
    %858 = vmatpush1.bf16.xpose.msra.mxu0 0
    %859 = vmatprep.subr.bf16.mxu0 0
    %860 = vmatpush1.bf16.xpose.msra.mxu0 0
    %861 = vmatprep.subr.bf16.mxu0 0
    %862 = vmatpush1.bf16.xpose.msra.mxu0 0
    %863 = vmatprep.subr.bf16.mxu0 0
    %864 = vmatpush1.bf16.xpose.msra.mxu0 0
    %865 = vmatprep.subr.bf16.mxu0 0
    %866 = vmatpush1.bf16.xpose.msra.mxu0 0
    %867 = vmatprep.subr.bf16.mxu0 0
    %868 = vmatpush1.bf16.xpose.msra.mxu0 0
    %869 = vmatprep.subr.bf16.mxu0 0
    %870 = vmatpush1.bf16.xpose.msra.mxu0 0
    %871 = vmatprep.subr.bf16.mxu0 0
    %872 = vmatpush1.bf16.xpose.msra.mxu0 0
    %873 = vmatprep.subr.bf16.mxu0 0
    %874 = vmatpush1.bf16.xpose.msra.mxu0 0
    %875 = vmatprep.subr.bf16.mxu0 0
    %876 = vmatpush1.bf16.xpose.msra.mxu0 0
    %877 = vmatprep.subr.bf16.mxu0 0
    %878 = vmatpush1.bf16.xpose.msra.mxu0 0
    %879 = vmatprep.subr.bf16.mxu0 0
    %880 = vmatpush1.bf16.xpose.msra.mxu0 0
    %881 = vmatprep.subr.bf16.mxu0 0
    %882 = vmatpush1.bf16.xpose.msra.mxu0 0
    %883 = vmatprep.mubr.bf16.mxu0 0
    %884 = vmatmul.mubr.bf16.gmra.mrb[0].mxu0 %v846
    %v885 = vpop.f32.mrb[0].mxu0
    %v886 = vadd.f32 0.0, %v885
    %v887 = vpop.f32.mrb[0].mxu0
    %v888 = vpop.f32.mrb[0].mxu0
    %v889 = vpop.f32.mrb[0].mxu0
    %890 = vdwg.mxu0
    %v891 = vmul.f32 %v736, 0.35355338
    %v892 = vmul.f32 %v786, 0.35355338
    %v893 = vmul.f32 %v836, 0.35355338
    %v894 = vmul.f32 %v886, 0.35355338
    %v895 = vsel %vm445, %v891, -1e+30
    %v896 = vsel %vm445, %v892, -1e+30
    %v897 = vsel %vm445, %v893, -1e+30
    %v898 = vsel %vm445, %v894, -1e+30
    %v899 = vsel %vm246, %v895, -inf
    %900 = vmax.xlane.f32.xlu0 %v899
    %v901 = vpop.xlane.xlu0 %900
    %v902 = vsel %vm246, %v896, -inf
    %903 = vmax.xlane.f32.xlu0 %v902
    %v904 = vpop.xlane.xlu0 %903
    %v905 = vsel %vm246, %v897, -inf
    %906 = vmax.xlane.f32.xlu0 %v905
    %v907 = vpop.xlane.xlu0 %906
    %v908 = vsel %vm246, %v898, -inf
    %909 = vmax.xlane.f32.xlu0 %v908
    %v910 = vpop.xlane.xlu0 %909
    %v911 = vsub.f32 %v895, %v901
    %v912 = vsub.f32 %v896, %v904
    %v913 = vsub.f32 %v897, %v907
    %v914 = vsub.f32 %v898, %v910
    %v915 = vmul.f32 %v911, 1.442695
    %v916 = vpow.pop %v915
    %v917 = vmul.f32 %v912, 1.442695
    %v918 = vpow.pop %v917
    %v919 = vmul.f32 %v913, 1.442695
    %v920 = vpow.pop %v919
    %v921 = vmul.f32 %v914, 1.442695
    %v922 = vpow.pop %v921
    %v923 = vsel %vm246, %v916, 0.0
    %924 = vadd.xlane.f32.xlu0 %v923
    %v925 = vpop.xlane.xlu0 %924
    %v926 = vsel %vm246, %v918, 0.0
    %927 = vadd.xlane.f32.xlu0 %v926
    %v928 = vpop.xlane.xlu0 %927
    %v929 = vsel %vm246, %v920, 0.0
    %930 = vadd.xlane.f32.xlu0 %v929
    %v931 = vpop.xlane.xlu0 %930
    %v932 = vsel %vm246, %v922, 0.0
    %933 = vadd.xlane.f32.xlu0 %v932
    %v934 = vpop.xlane.xlu0 %933
    %v935 = vrcp.pop %v925
    %v936 = vrcp.pop %v928
    %v937 = vrcp.pop %v931
    %v938 = vrcp.pop %v934
    %v939 = vmul.f32 %v916, %v935
    %v940 = vmul.f32 %v918, %v936
    %v941 = vmul.f32 %v920, %v937
    %v942 = vmul.f32 %v922, %v938
    %v943 = vpack.c.bf16 %v939, %v939
    %v944 = vpack.c.bf16 %v940, %v940
    %v945 = vpack.c.bf16 %v941, %v941
    %v946 = vpack.c.bf16 %v942, %v942
    %947 = vrot.lane.b32.xlu0 %v239, 56
    %v948 = vpop.permute.xlu0 %947
    %v950 = vsel %vm246, %v943, 0
    %v953 = vsel %vm503, %v948, 0
    %955 = vmatprep.subr.bf16.mxu0 0
    %956 = vmatpush1.bf16.msra.mxu0 %v953
    %957 = vmatprep.subr.bf16.mxu0 0
    %958 = vmatpush1.bf16.msra.mxu0 0
    %959 = vmatprep.subr.bf16.mxu0 0
    %960 = vmatpush1.bf16.msra.mxu0 0
    %961 = vmatprep.subr.bf16.mxu0 0
    %962 = vmatpush1.bf16.msra.mxu0 0
    %963 = vmatprep.subr.bf16.mxu0 0
    %964 = vmatpush1.bf16.msra.mxu0 0
    %965 = vmatprep.subr.bf16.mxu0 0
    %966 = vmatpush1.bf16.msra.mxu0 0
    %967 = vmatprep.subr.bf16.mxu0 0
    %968 = vmatpush1.bf16.msra.mxu0 0
    %969 = vmatprep.subr.bf16.mxu0 0
    %970 = vmatpush1.bf16.msra.mxu0 0
    %971 = vmatprep.subr.bf16.mxu0 0
    %972 = vmatpush1.bf16.msra.mxu0 0
    %973 = vmatprep.subr.bf16.mxu0 0
    %974 = vmatpush1.bf16.msra.mxu0 0
    %975 = vmatprep.subr.bf16.mxu0 0
    %976 = vmatpush1.bf16.msra.mxu0 0
    %977 = vmatprep.subr.bf16.mxu0 0
    %978 = vmatpush1.bf16.msra.mxu0 0
    %979 = vmatprep.subr.bf16.mxu0 0
    %980 = vmatpush1.bf16.msra.mxu0 0
    %981 = vmatprep.subr.bf16.mxu0 0
    %982 = vmatpush1.bf16.msra.mxu0 0
    %983 = vmatprep.subr.bf16.mxu0 0
    %984 = vmatpush1.bf16.msra.mxu0 0
    %985 = vmatprep.subr.bf16.mxu0 0
    %986 = vmatpush1.bf16.msra.mxu0 0
    %987 = vmatprep.mubr.bf16.mxu0 0
    %988 = vmatmul.mubr.bf16.gmra.mrb[0].mxu0 %v950
    %v989 = vpop.f32.mrb[0].mxu0
    %v990 = vadd.f32 0.0, %v989
    %v991 = vpop.f32.mrb[0].mxu0
    %v992 = vpop.f32.mrb[0].mxu0
    %v993 = vpop.f32.mrb[0].mxu0
    %994 = vdwg.mxu0
    %995 = vrot.lane.b32.xlu0 %v240, 56
    %v996 = vpop.permute.xlu0 %995
    %v998 = vsel %vm246, %v944, 0
    %v1001 = vsel %vm503, %v996, 0
    %1003 = vmatprep.subr.bf16.mxu0 0
    %1004 = vmatpush1.bf16.msra.mxu0 %v1001
    %1005 = vmatprep.subr.bf16.mxu0 0
    %1006 = vmatpush1.bf16.msra.mxu0 0
    %1007 = vmatprep.subr.bf16.mxu0 0
    %1008 = vmatpush1.bf16.msra.mxu0 0
    %1009 = vmatprep.subr.bf16.mxu0 0
    %1010 = vmatpush1.bf16.msra.mxu0 0
    %1011 = vmatprep.subr.bf16.mxu0 0
    %1012 = vmatpush1.bf16.msra.mxu0 0
    %1013 = vmatprep.subr.bf16.mxu0 0
    %1014 = vmatpush1.bf16.msra.mxu0 0
    %1015 = vmatprep.subr.bf16.mxu0 0
    %1016 = vmatpush1.bf16.msra.mxu0 0
    %1017 = vmatprep.subr.bf16.mxu0 0
    %1018 = vmatpush1.bf16.msra.mxu0 0
    %1019 = vmatprep.subr.bf16.mxu0 0
    %1020 = vmatpush1.bf16.msra.mxu0 0
    %1021 = vmatprep.subr.bf16.mxu0 0
    %1022 = vmatpush1.bf16.msra.mxu0 0
    %1023 = vmatprep.subr.bf16.mxu0 0
    %1024 = vmatpush1.bf16.msra.mxu0 0
    %1025 = vmatprep.subr.bf16.mxu0 0
    %1026 = vmatpush1.bf16.msra.mxu0 0
    %1027 = vmatprep.subr.bf16.mxu0 0
    %1028 = vmatpush1.bf16.msra.mxu0 0
    %1029 = vmatprep.subr.bf16.mxu0 0
    %1030 = vmatpush1.bf16.msra.mxu0 0
    %1031 = vmatprep.subr.bf16.mxu0 0
    %1032 = vmatpush1.bf16.msra.mxu0 0
    %1033 = vmatprep.subr.bf16.mxu0 0
    %1034 = vmatpush1.bf16.msra.mxu0 0
    %1035 = vmatprep.mubr.bf16.mxu0 0
    %1036 = vmatmul.mubr.bf16.gmra.mrb[0].mxu0 %v998
    %v1037 = vpop.f32.mrb[0].mxu0
    %v1038 = vadd.f32 0.0, %v1037
    %v1039 = vpop.f32.mrb[0].mxu0
    %v1040 = vpop.f32.mrb[0].mxu0
    %v1041 = vpop.f32.mrb[0].mxu0
    %1042 = vdwg.mxu0
    %1043 = vrot.lane.b32.xlu0 %v241, 56
    %v1044 = vpop.permute.xlu0 %1043
    %v1046 = vsel %vm246, %v945, 0
    %v1049 = vsel %vm503, %v1044, 0
    %1051 = vmatprep.subr.bf16.mxu0 0
    %1052 = vmatpush1.bf16.msra.mxu0 %v1049
    %1053 = vmatprep.subr.bf16.mxu0 0
    %1054 = vmatpush1.bf16.msra.mxu0 0
    %1055 = vmatprep.subr.bf16.mxu0 0
    %1056 = vmatpush1.bf16.msra.mxu0 0
    %1057 = vmatprep.subr.bf16.mxu0 0
    %1058 = vmatpush1.bf16.msra.mxu0 0
    %1059 = vmatprep.subr.bf16.mxu0 0
    %1060 = vmatpush1.bf16.msra.mxu0 0
    %1061 = vmatprep.subr.bf16.mxu0 0
    %1062 = vmatpush1.bf16.msra.mxu0 0
    %1063 = vmatprep.subr.bf16.mxu0 0
    %1064 = vmatpush1.bf16.msra.mxu0 0
    %1065 = vmatprep.subr.bf16.mxu0 0
    %1066 = vmatpush1.bf16.msra.mxu0 0
    %1067 = vmatprep.subr.bf16.mxu0 0
    %1068 = vmatpush1.bf16.msra.mxu0 0
    %1069 = vmatprep.subr.bf16.mxu0 0
    %1070 = vmatpush1.bf16.msra.mxu0 0
    %1071 = vmatprep.subr.bf16.mxu0 0
    %1072 = vmatpush1.bf16.msra.mxu0 0
    %1073 = vmatprep.subr.bf16.mxu0 0
    %1074 = vmatpush1.bf16.msra.mxu0 0
    %1075 = vmatprep.subr.bf16.mxu0 0
    %1076 = vmatpush1.bf16.msra.mxu0 0
    %1077 = vmatprep.subr.bf16.mxu0 0
    %1078 = vmatpush1.bf16.msra.mxu0 0
    %1079 = vmatprep.subr.bf16.mxu0 0
    %1080 = vmatpush1.bf16.msra.mxu0 0
    %1081 = vmatprep.subr.bf16.mxu0 0
    %1082 = vmatpush1.bf16.msra.mxu0 0
    %1083 = vmatprep.mubr.bf16.mxu0 0
    %1084 = vmatmul.mubr.bf16.gmra.mrb[0].mxu0 %v1046
    %v1085 = vpop.f32.mrb[0].mxu0
    %v1086 = vadd.f32 0.0, %v1085
    %v1087 = vpop.f32.mrb[0].mxu0
    %v1088 = vpop.f32.mrb[0].mxu0
    %v1089 = vpop.f32.mrb[0].mxu0
    %1090 = vdwg.mxu0
    %1091 = vrot.lane.b32.xlu0 %v242, 56
    %v1092 = vpop.permute.xlu0 %1091
    %v1094 = vsel %vm246, %v946, 0
    %v1097 = vsel %vm503, %v1092, 0
    %1099 = vmatprep.subr.bf16.mxu0 0
    %1100 = vmatpush1.bf16.msra.mxu0 %v1097
    %1101 = vmatprep.subr.bf16.mxu0 0
    %1102 = vmatpush1.bf16.msra.mxu0 0
    %1103 = vmatprep.subr.bf16.mxu0 0
    %1104 = vmatpush1.bf16.msra.mxu0 0
    %1105 = vmatprep.subr.bf16.mxu0 0
    %1106 = vmatpush1.bf16.msra.mxu0 0
    %1107 = vmatprep.subr.bf16.mxu0 0
    %1108 = vmatpush1.bf16.msra.mxu0 0
    %1109 = vmatprep.subr.bf16.mxu0 0
    %1110 = vmatpush1.bf16.msra.mxu0 0
    %1111 = vmatprep.subr.bf16.mxu0 0
    %1112 = vmatpush1.bf16.msra.mxu0 0
    %1113 = vmatprep.subr.bf16.mxu0 0
    %1114 = vmatpush1.bf16.msra.mxu0 0
    %1115 = vmatprep.subr.bf16.mxu0 0
    %1116 = vmatpush1.bf16.msra.mxu0 0
    %1117 = vmatprep.subr.bf16.mxu0 0
    %1118 = vmatpush1.bf16.msra.mxu0 0
    %1119 = vmatprep.subr.bf16.mxu0 0
    %1120 = vmatpush1.bf16.msra.mxu0 0
    %1121 = vmatprep.subr.bf16.mxu0 0
    %1122 = vmatpush1.bf16.msra.mxu0 0
    %1123 = vmatprep.subr.bf16.mxu0 0
    %1124 = vmatpush1.bf16.msra.mxu0 0
    %1125 = vmatprep.subr.bf16.mxu0 0
    %1126 = vmatpush1.bf16.msra.mxu0 0
    %1127 = vmatprep.subr.bf16.mxu0 0
    %1128 = vmatpush1.bf16.msra.mxu0 0
    %1129 = vmatprep.subr.bf16.mxu0 0
    %1130 = vmatpush1.bf16.msra.mxu0 0
    %1131 = vmatprep.mubr.bf16.mxu0 0
    %1132 = vmatmul.mubr.bf16.gmra.mrb[0].mxu0 %v1094
    %v1133 = vpop.f32.mrb[0].mxu0
    %v1134 = vadd.f32 0.0, %v1133
    %v1135 = vpop.f32.mrb[0].mxu0
    %v1136 = vpop.f32.mrb[0].mxu0
    %v1137 = vpop.f32.mrb[0].mxu0
    %1138 = vdwg.mxu0
    %1139 = vrot.lane.b32.xlu0 %v239, 112
    %v1140 = vpop.permute.xlu0 %1139
    %1141 = vrot.lane.b32.xlu0 %v239, 80
    %v1142 = vpop.permute.xlu0 %1141
    %v1144 = vsel %vm246, %v1140, 0
    %v1147 = vsel %vm246, %v1142, 0
    %1149 = vmatprep.subr.bf16.mxu0 0
    %1150 = vmatpush1.bf16.xpose.msra.mxu0 %v1147
    %1151 = vmatprep.subr.bf16.mxu0 0
    %1152 = vmatpush1.bf16.xpose.msra.mxu0 0
    %1153 = vmatprep.subr.bf16.mxu0 0
    %1154 = vmatpush1.bf16.xpose.msra.mxu0 0
    %1155 = vmatprep.subr.bf16.mxu0 0
    %1156 = vmatpush1.bf16.xpose.msra.mxu0 0
    %1157 = vmatprep.subr.bf16.mxu0 0
    %1158 = vmatpush1.bf16.xpose.msra.mxu0 0
    %1159 = vmatprep.subr.bf16.mxu0 0
    %1160 = vmatpush1.bf16.xpose.msra.mxu0 0
    %1161 = vmatprep.subr.bf16.mxu0 0
    %1162 = vmatpush1.bf16.xpose.msra.mxu0 0
    %1163 = vmatprep.subr.bf16.mxu0 0
    %1164 = vmatpush1.bf16.xpose.msra.mxu0 0
    %1165 = vmatprep.subr.bf16.mxu0 0
    %1166 = vmatpush1.bf16.xpose.msra.mxu0 0
    %1167 = vmatprep.subr.bf16.mxu0 0
    %1168 = vmatpush1.bf16.xpose.msra.mxu0 0
    %1169 = vmatprep.subr.bf16.mxu0 0
    %1170 = vmatpush1.bf16.xpose.msra.mxu0 0
    %1171 = vmatprep.subr.bf16.mxu0 0
    %1172 = vmatpush1.bf16.xpose.msra.mxu0 0
    %1173 = vmatprep.subr.bf16.mxu0 0
    %1174 = vmatpush1.bf16.xpose.msra.mxu0 0
    %1175 = vmatprep.subr.bf16.mxu0 0
    %1176 = vmatpush1.bf16.xpose.msra.mxu0 0
    %1177 = vmatprep.subr.bf16.mxu0 0
    %1178 = vmatpush1.bf16.xpose.msra.mxu0 0
    %1179 = vmatprep.subr.bf16.mxu0 0
    %1180 = vmatpush1.bf16.xpose.msra.mxu0 0
    %1181 = vmatprep.mubr.bf16.mxu0 0
    %1182 = vmatmul.mubr.bf16.gmra.mrb[0].mxu0 %v1144
    %v1183 = vpop.f32.mrb[0].mxu0
    %v1184 = vadd.f32 0.0, %v1183
    %v1185 = vpop.f32.mrb[0].mxu0
    %v1186 = vpop.f32.mrb[0].mxu0
    %v1187 = vpop.f32.mrb[0].mxu0
    %1188 = vdwg.mxu0
    %1189 = vrot.lane.b32.xlu0 %v240, 112
    %v1190 = vpop.permute.xlu0 %1189
    %1191 = vrot.lane.b32.xlu0 %v240, 80
    %v1192 = vpop.permute.xlu0 %1191
    %v1194 = vsel %vm246, %v1190, 0
    %v1197 = vsel %vm246, %v1192, 0
    %1199 = vmatprep.subr.bf16.mxu0 0
    %1200 = vmatpush1.bf16.xpose.msra.mxu0 %v1197
    %1201 = vmatprep.subr.bf16.mxu0 0
    %1202 = vmatpush1.bf16.xpose.msra.mxu0 0
    %1203 = vmatprep.subr.bf16.mxu0 0
    %1204 = vmatpush1.bf16.xpose.msra.mxu0 0
    %1205 = vmatprep.subr.bf16.mxu0 0
    %1206 = vmatpush1.bf16.xpose.msra.mxu0 0
    %1207 = vmatprep.subr.bf16.mxu0 0
    %1208 = vmatpush1.bf16.xpose.msra.mxu0 0
    %1209 = vmatprep.subr.bf16.mxu0 0
    %1210 = vmatpush1.bf16.xpose.msra.mxu0 0
    %1211 = vmatprep.subr.bf16.mxu0 0
    %1212 = vmatpush1.bf16.xpose.msra.mxu0 0
    %1213 = vmatprep.subr.bf16.mxu0 0
    %1214 = vmatpush1.bf16.xpose.msra.mxu0 0
    %1215 = vmatprep.subr.bf16.mxu0 0
    %1216 = vmatpush1.bf16.xpose.msra.mxu0 0
    %1217 = vmatprep.subr.bf16.mxu0 0
    %1218 = vmatpush1.bf16.xpose.msra.mxu0 0
    %1219 = vmatprep.subr.bf16.mxu0 0
    %1220 = vmatpush1.bf16.xpose.msra.mxu0 0
    %1221 = vmatprep.subr.bf16.mxu0 0
    %1222 = vmatpush1.bf16.xpose.msra.mxu0 0
    %1223 = vmatprep.subr.bf16.mxu0 0
    %1224 = vmatpush1.bf16.xpose.msra.mxu0 0
    %1225 = vmatprep.subr.bf16.mxu0 0
    %1226 = vmatpush1.bf16.xpose.msra.mxu0 0
    %1227 = vmatprep.subr.bf16.mxu0 0
    %1228 = vmatpush1.bf16.xpose.msra.mxu0 0
    %1229 = vmatprep.subr.bf16.mxu0 0
    %1230 = vmatpush1.bf16.xpose.msra.mxu0 0
    %1231 = vmatprep.mubr.bf16.mxu0 0
    %1232 = vmatmul.mubr.bf16.gmra.mrb[0].mxu0 %v1194
    %v1233 = vpop.f32.mrb[0].mxu0
    %v1234 = vadd.f32 0.0, %v1233
    %v1235 = vpop.f32.mrb[0].mxu0
    %v1236 = vpop.f32.mrb[0].mxu0
    %v1237 = vpop.f32.mrb[0].mxu0
    %1238 = vdwg.mxu0
    %1239 = vrot.lane.b32.xlu0 %v241, 112
    %v1240 = vpop.permute.xlu0 %1239
    %1241 = vrot.lane.b32.xlu0 %v241, 80
    %v1242 = vpop.permute.xlu0 %1241
    %v1244 = vsel %vm246, %v1240, 0
    %v1247 = vsel %vm246, %v1242, 0
    %1249 = vmatprep.subr.bf16.mxu0 0
    %1250 = vmatpush1.bf16.xpose.msra.mxu0 %v1247
    %1251 = vmatprep.subr.bf16.mxu0 0
    %1252 = vmatpush1.bf16.xpose.msra.mxu0 0
    %1253 = vmatprep.subr.bf16.mxu0 0
    %1254 = vmatpush1.bf16.xpose.msra.mxu0 0
    %1255 = vmatprep.subr.bf16.mxu0 0
    %1256 = vmatpush1.bf16.xpose.msra.mxu0 0
    %1257 = vmatprep.subr.bf16.mxu0 0
    %1258 = vmatpush1.bf16.xpose.msra.mxu0 0
    %1259 = vmatprep.subr.bf16.mxu0 0
    %1260 = vmatpush1.bf16.xpose.msra.mxu0 0
    %1261 = vmatprep.subr.bf16.mxu0 0
    %1262 = vmatpush1.bf16.xpose.msra.mxu0 0
    %1263 = vmatprep.subr.bf16.mxu0 0
    %1264 = vmatpush1.bf16.xpose.msra.mxu0 0
    %1265 = vmatprep.subr.bf16.mxu0 0
    %1266 = vmatpush1.bf16.xpose.msra.mxu0 0
    %1267 = vmatprep.subr.bf16.mxu0 0
    %1268 = vmatpush1.bf16.xpose.msra.mxu0 0
    %1269 = vmatprep.subr.bf16.mxu0 0
    %1270 = vmatpush1.bf16.xpose.msra.mxu0 0
    %1271 = vmatprep.subr.bf16.mxu0 0
    %1272 = vmatpush1.bf16.xpose.msra.mxu0 0
    %1273 = vmatprep.subr.bf16.mxu0 0
    %1274 = vmatpush1.bf16.xpose.msra.mxu0 0
    %1275 = vmatprep.subr.bf16.mxu0 0
    %1276 = vmatpush1.bf16.xpose.msra.mxu0 0
    %1277 = vmatprep.subr.bf16.mxu0 0
    %1278 = vmatpush1.bf16.xpose.msra.mxu0 0
    %1279 = vmatprep.subr.bf16.mxu0 0
    %1280 = vmatpush1.bf16.xpose.msra.mxu0 0
    %1281 = vmatprep.mubr.bf16.mxu0 0
    %1282 = vmatmul.mubr.bf16.gmra.mrb[0].mxu0 %v1244
    %v1283 = vpop.f32.mrb[0].mxu0
    %v1284 = vadd.f32 0.0, %v1283
    %v1285 = vpop.f32.mrb[0].mxu0
    %v1286 = vpop.f32.mrb[0].mxu0
    %v1287 = vpop.f32.mrb[0].mxu0
    %1288 = vdwg.mxu0
    %1289 = vrot.lane.b32.xlu0 %v242, 112
    %v1290 = vpop.permute.xlu0 %1289
    %1291 = vrot.lane.b32.xlu0 %v242, 80
    %v1292 = vpop.permute.xlu0 %1291
    %v1294 = vsel %vm246, %v1290, 0
    %v1297 = vsel %vm246, %v1292, 0
    %1299 = vmatprep.subr.bf16.mxu0 0
    %1300 = vmatpush1.bf16.xpose.msra.mxu0 %v1297
    %1301 = vmatprep.subr.bf16.mxu0 0
    %1302 = vmatpush1.bf16.xpose.msra.mxu0 0
    %1303 = vmatprep.subr.bf16.mxu0 0
    %1304 = vmatpush1.bf16.xpose.msra.mxu0 0
    %1305 = vmatprep.subr.bf16.mxu0 0
    %1306 = vmatpush1.bf16.xpose.msra.mxu0 0
    %1307 = vmatprep.subr.bf16.mxu0 0
    %1308 = vmatpush1.bf16.xpose.msra.mxu0 0
    %1309 = vmatprep.subr.bf16.mxu0 0
    %1310 = vmatpush1.bf16.xpose.msra.mxu0 0
    %1311 = vmatprep.subr.bf16.mxu0 0
    %1312 = vmatpush1.bf16.xpose.msra.mxu0 0
    %1313 = vmatprep.subr.bf16.mxu0 0
    %1314 = vmatpush1.bf16.xpose.msra.mxu0 0
    %1315 = vmatprep.subr.bf16.mxu0 0
    %1316 = vmatpush1.bf16.xpose.msra.mxu0 0
    %1317 = vmatprep.subr.bf16.mxu0 0
    %1318 = vmatpush1.bf16.xpose.msra.mxu0 0
    %1319 = vmatprep.subr.bf16.mxu0 0
    %1320 = vmatpush1.bf16.xpose.msra.mxu0 0
    %1321 = vmatprep.subr.bf16.mxu0 0
    %1322 = vmatpush1.bf16.xpose.msra.mxu0 0
    %1323 = vmatprep.subr.bf16.mxu0 0
    %1324 = vmatpush1.bf16.xpose.msra.mxu0 0
    %1325 = vmatprep.subr.bf16.mxu0 0
    %1326 = vmatpush1.bf16.xpose.msra.mxu0 0
    %1327 = vmatprep.subr.bf16.mxu0 0
    %1328 = vmatpush1.bf16.xpose.msra.mxu0 0
    %1329 = vmatprep.subr.bf16.mxu0 0
    %1330 = vmatpush1.bf16.xpose.msra.mxu0 0
    %1331 = vmatprep.mubr.bf16.mxu0 0
    %1332 = vmatmul.mubr.bf16.gmra.mrb[0].mxu0 %v1294
    %v1333 = vpop.f32.mrb[0].mxu0
    %v1334 = vadd.f32 0.0, %v1333
    %v1335 = vpop.f32.mrb[0].mxu0
    %v1336 = vpop.f32.mrb[0].mxu0
    %v1337 = vpop.f32.mrb[0].mxu0
    %1338 = vdwg.mxu0
    %v1339 = vmul.f32 %v1184, 0.35355338
    %v1340 = vmul.f32 %v1234, 0.35355338
    %v1341 = vmul.f32 %v1284, 0.35355338
    %v1342 = vmul.f32 %v1334, 0.35355338
    %v1343 = vsel %vm445, %v1339, -1e+30
    %v1344 = vsel %vm445, %v1340, -1e+30
    %v1345 = vsel %vm445, %v1341, -1e+30
    %v1346 = vsel %vm445, %v1342, -1e+30
    %v1347 = vsel %vm246, %v1343, -inf
    %1348 = vmax.xlane.f32.xlu0 %v1347
    %v1349 = vpop.xlane.xlu0 %1348
    %v1350 = vsel %vm246, %v1344, -inf
    %1351 = vmax.xlane.f32.xlu0 %v1350
    %v1352 = vpop.xlane.xlu0 %1351
    %v1353 = vsel %vm246, %v1345, -inf
    %1354 = vmax.xlane.f32.xlu0 %v1353
    %v1355 = vpop.xlane.xlu0 %1354
    %v1356 = vsel %vm246, %v1346, -inf
    %1357 = vmax.xlane.f32.xlu0 %v1356
    %v1358 = vpop.xlane.xlu0 %1357
    %v1359 = vsub.f32 %v1343, %v1349
    %v1360 = vsub.f32 %v1344, %v1352
    %v1361 = vsub.f32 %v1345, %v1355
    %v1362 = vsub.f32 %v1346, %v1358
    %v1363 = vmul.f32 %v1359, 1.442695
    %v1364 = vpow.pop %v1363
    %v1365 = vmul.f32 %v1360, 1.442695
    %v1366 = vpow.pop %v1365
    %v1367 = vmul.f32 %v1361, 1.442695
    %v1368 = vpow.pop %v1367
    %v1369 = vmul.f32 %v1362, 1.442695
    %v1370 = vpow.pop %v1369
    %v1371 = vsel %vm246, %v1364, 0.0
    %1372 = vadd.xlane.f32.xlu0 %v1371
    %v1373 = vpop.xlane.xlu0 %1372
    %v1374 = vsel %vm246, %v1366, 0.0
    %1375 = vadd.xlane.f32.xlu0 %v1374
    %v1376 = vpop.xlane.xlu0 %1375
    %v1377 = vsel %vm246, %v1368, 0.0
    %1378 = vadd.xlane.f32.xlu0 %v1377
    %v1379 = vpop.xlane.xlu0 %1378
    %v1380 = vsel %vm246, %v1370, 0.0
    %1381 = vadd.xlane.f32.xlu0 %v1380
    %v1382 = vpop.xlane.xlu0 %1381
    %v1383 = vrcp.pop %v1373
    %v1384 = vrcp.pop %v1376
    %v1385 = vrcp.pop %v1379
    %v1386 = vrcp.pop %v1382
    %v1387 = vmul.f32 %v1364, %v1383
    %v1388 = vmul.f32 %v1366, %v1384
    %v1389 = vmul.f32 %v1368, %v1385
    %v1390 = vmul.f32 %v1370, %v1386
    %v1391 = vpack.c.bf16 %v1387, %v1387
    %v1392 = vpack.c.bf16 %v1388, %v1388
    %v1393 = vpack.c.bf16 %v1389, %v1389
    %v1394 = vpack.c.bf16 %v1390, %v1390
    %1395 = vrot.lane.b32.xlu0 %v239, 48
    %v1396 = vpop.permute.xlu0 %1395
    %v1398 = vsel %vm246, %v1391, 0
    %v1401 = vsel %vm503, %v1396, 0
    %1403 = vmatprep.subr.bf16.mxu0 0
    %1404 = vmatpush1.bf16.msra.mxu0 %v1401
    %1405 = vmatprep.subr.bf16.mxu0 0
    %1406 = vmatpush1.bf16.msra.mxu0 0
    %1407 = vmatprep.subr.bf16.mxu0 0
    %1408 = vmatpush1.bf16.msra.mxu0 0
    %1409 = vmatprep.subr.bf16.mxu0 0
    %1410 = vmatpush1.bf16.msra.mxu0 0
    %1411 = vmatprep.subr.bf16.mxu0 0
    %1412 = vmatpush1.bf16.msra.mxu0 0
    %1413 = vmatprep.subr.bf16.mxu0 0
    %1414 = vmatpush1.bf16.msra.mxu0 0
    %1415 = vmatprep.subr.bf16.mxu0 0
    %1416 = vmatpush1.bf16.msra.mxu0 0
    %1417 = vmatprep.subr.bf16.mxu0 0
    %1418 = vmatpush1.bf16.msra.mxu0 0
    %1419 = vmatprep.subr.bf16.mxu0 0
    %1420 = vmatpush1.bf16.msra.mxu0 0
    %1421 = vmatprep.subr.bf16.mxu0 0
    %1422 = vmatpush1.bf16.msra.mxu0 0
    %1423 = vmatprep.subr.bf16.mxu0 0
    %1424 = vmatpush1.bf16.msra.mxu0 0
    %1425 = vmatprep.subr.bf16.mxu0 0
    %1426 = vmatpush1.bf16.msra.mxu0 0
    %1427 = vmatprep.subr.bf16.mxu0 0
    %1428 = vmatpush1.bf16.msra.mxu0 0
    %1429 = vmatprep.subr.bf16.mxu0 0
    %1430 = vmatpush1.bf16.msra.mxu0 0
    %1431 = vmatprep.subr.bf16.mxu0 0
    %1432 = vmatpush1.bf16.msra.mxu0 0
    %1433 = vmatprep.subr.bf16.mxu0 0
    %1434 = vmatpush1.bf16.msra.mxu0 0
    %1435 = vmatprep.mubr.bf16.mxu0 0
    %1436 = vmatmul.mubr.bf16.gmra.mrb[0].mxu0 %v1398
    %v1437 = vpop.f32.mrb[0].mxu0
    %v1438 = vadd.f32 0.0, %v1437
    %v1439 = vpop.f32.mrb[0].mxu0
    %v1440 = vpop.f32.mrb[0].mxu0
    %v1441 = vpop.f32.mrb[0].mxu0
    %1442 = vdwg.mxu0
    %1443 = vrot.lane.b32.xlu0 %v240, 48
    %v1444 = vpop.permute.xlu0 %1443
    %v1446 = vsel %vm246, %v1392, 0
    %v1449 = vsel %vm503, %v1444, 0
    %1451 = vmatprep.subr.bf16.mxu0 0
    %1452 = vmatpush1.bf16.msra.mxu0 %v1449
    %1453 = vmatprep.subr.bf16.mxu0 0
    %1454 = vmatpush1.bf16.msra.mxu0 0
    %1455 = vmatprep.subr.bf16.mxu0 0
    %1456 = vmatpush1.bf16.msra.mxu0 0
    %1457 = vmatprep.subr.bf16.mxu0 0
    %1458 = vmatpush1.bf16.msra.mxu0 0
    %1459 = vmatprep.subr.bf16.mxu0 0
    %1460 = vmatpush1.bf16.msra.mxu0 0
    %1461 = vmatprep.subr.bf16.mxu0 0
    %1462 = vmatpush1.bf16.msra.mxu0 0
    %1463 = vmatprep.subr.bf16.mxu0 0
    %1464 = vmatpush1.bf16.msra.mxu0 0
    %1465 = vmatprep.subr.bf16.mxu0 0
    %1466 = vmatpush1.bf16.msra.mxu0 0
    %1467 = vmatprep.subr.bf16.mxu0 0
    %1468 = vmatpush1.bf16.msra.mxu0 0
    %1469 = vmatprep.subr.bf16.mxu0 0
    %1470 = vmatpush1.bf16.msra.mxu0 0
    %1471 = vmatprep.subr.bf16.mxu0 0
    %1472 = vmatpush1.bf16.msra.mxu0 0
    %1473 = vmatprep.subr.bf16.mxu0 0
    %1474 = vmatpush1.bf16.msra.mxu0 0
    %1475 = vmatprep.subr.bf16.mxu0 0
    %1476 = vmatpush1.bf16.msra.mxu0 0
    %1477 = vmatprep.subr.bf16.mxu0 0
    %1478 = vmatpush1.bf16.msra.mxu0 0
    %1479 = vmatprep.subr.bf16.mxu0 0
    %1480 = vmatpush1.bf16.msra.mxu0 0
    %1481 = vmatprep.subr.bf16.mxu0 0
    %1482 = vmatpush1.bf16.msra.mxu0 0
    %1483 = vmatprep.mubr.bf16.mxu0 0
    %1484 = vmatmul.mubr.bf16.gmra.mrb[0].mxu0 %v1446
    %v1485 = vpop.f32.mrb[0].mxu0
    %v1486 = vadd.f32 0.0, %v1485
    %v1487 = vpop.f32.mrb[0].mxu0
    %v1488 = vpop.f32.mrb[0].mxu0
    %v1489 = vpop.f32.mrb[0].mxu0
    %1490 = vdwg.mxu0
    %1491 = vrot.lane.b32.xlu0 %v241, 48
    %v1492 = vpop.permute.xlu0 %1491
    %v1494 = vsel %vm246, %v1393, 0
    %v1497 = vsel %vm503, %v1492, 0
    %1499 = vmatprep.subr.bf16.mxu0 0
    %1500 = vmatpush1.bf16.msra.mxu0 %v1497
    %1501 = vmatprep.subr.bf16.mxu0 0
    %1502 = vmatpush1.bf16.msra.mxu0 0
    %1503 = vmatprep.subr.bf16.mxu0 0
    %1504 = vmatpush1.bf16.msra.mxu0 0
    %1505 = vmatprep.subr.bf16.mxu0 0
    %1506 = vmatpush1.bf16.msra.mxu0 0
    %1507 = vmatprep.subr.bf16.mxu0 0
    %1508 = vmatpush1.bf16.msra.mxu0 0
    %1509 = vmatprep.subr.bf16.mxu0 0
    %1510 = vmatpush1.bf16.msra.mxu0 0
    %1511 = vmatprep.subr.bf16.mxu0 0
    %1512 = vmatpush1.bf16.msra.mxu0 0
    %1513 = vmatprep.subr.bf16.mxu0 0
    %1514 = vmatpush1.bf16.msra.mxu0 0
    %1515 = vmatprep.subr.bf16.mxu0 0
    %1516 = vmatpush1.bf16.msra.mxu0 0
    %1517 = vmatprep.subr.bf16.mxu0 0
    %1518 = vmatpush1.bf16.msra.mxu0 0
    %1519 = vmatprep.subr.bf16.mxu0 0
    %1520 = vmatpush1.bf16.msra.mxu0 0
    %1521 = vmatprep.subr.bf16.mxu0 0
    %1522 = vmatpush1.bf16.msra.mxu0 0
    %1523 = vmatprep.subr.bf16.mxu0 0
    %1524 = vmatpush1.bf16.msra.mxu0 0
    %1525 = vmatprep.subr.bf16.mxu0 0
    %1526 = vmatpush1.bf16.msra.mxu0 0
    %1527 = vmatprep.subr.bf16.mxu0 0
    %1528 = vmatpush1.bf16.msra.mxu0 0
    %1529 = vmatprep.subr.bf16.mxu0 0
    %1530 = vmatpush1.bf16.msra.mxu0 0
    %1531 = vmatprep.mubr.bf16.mxu0 0
    %1532 = vmatmul.mubr.bf16.gmra.mrb[0].mxu0 %v1494
    %v1533 = vpop.f32.mrb[0].mxu0
    %v1534 = vadd.f32 0.0, %v1533
    %v1535 = vpop.f32.mrb[0].mxu0
    %v1536 = vpop.f32.mrb[0].mxu0
    %v1537 = vpop.f32.mrb[0].mxu0
    %1538 = vdwg.mxu0
    %1539 = vrot.lane.b32.xlu0 %v242, 48
    %v1540 = vpop.permute.xlu0 %1539
    %v1542 = vsel %vm246, %v1394, 0
    %v1545 = vsel %vm503, %v1540, 0
    %1547 = vmatprep.subr.bf16.mxu0 0
    %1548 = vmatpush1.bf16.msra.mxu0 %v1545
    %1549 = vmatprep.subr.bf16.mxu0 0
    %1550 = vmatpush1.bf16.msra.mxu0 0
    %1551 = vmatprep.subr.bf16.mxu0 0
    %1552 = vmatpush1.bf16.msra.mxu0 0
    %1553 = vmatprep.subr.bf16.mxu0 0
    %1554 = vmatpush1.bf16.msra.mxu0 0
    %1555 = vmatprep.subr.bf16.mxu0 0
    %1556 = vmatpush1.bf16.msra.mxu0 0
    %1557 = vmatprep.subr.bf16.mxu0 0
    %1558 = vmatpush1.bf16.msra.mxu0 0
    %1559 = vmatprep.subr.bf16.mxu0 0
    %1560 = vmatpush1.bf16.msra.mxu0 0
    %1561 = vmatprep.subr.bf16.mxu0 0
    %1562 = vmatpush1.bf16.msra.mxu0 0
    %1563 = vmatprep.subr.bf16.mxu0 0
    %1564 = vmatpush1.bf16.msra.mxu0 0
    %1565 = vmatprep.subr.bf16.mxu0 0
    %1566 = vmatpush1.bf16.msra.mxu0 0
    %1567 = vmatprep.subr.bf16.mxu0 0
    %1568 = vmatpush1.bf16.msra.mxu0 0
    %1569 = vmatprep.subr.bf16.mxu0 0
    %1570 = vmatpush1.bf16.msra.mxu0 0
    %1571 = vmatprep.subr.bf16.mxu0 0
    %1572 = vmatpush1.bf16.msra.mxu0 0
    %1573 = vmatprep.subr.bf16.mxu0 0
    %1574 = vmatpush1.bf16.msra.mxu0 0
    %1575 = vmatprep.subr.bf16.mxu0 0
    %1576 = vmatpush1.bf16.msra.mxu0 0
    %1577 = vmatprep.subr.bf16.mxu0 0
    %1578 = vmatpush1.bf16.msra.mxu0 0
    %1579 = vmatprep.mubr.bf16.mxu0 0
    %1580 = vmatmul.mubr.bf16.gmra.mrb[0].mxu0 %v1542
    %v1581 = vpop.f32.mrb[0].mxu0
    %v1582 = vadd.f32 0.0, %v1581
    %v1583 = vpop.f32.mrb[0].mxu0
    %v1584 = vpop.f32.mrb[0].mxu0
    %v1585 = vpop.f32.mrb[0].mxu0
    %1586 = vdwg.mxu0
    %1587 = vrot.lane.b32.xlu0 %v239, 104
    %v1588 = vpop.permute.xlu0 %1587
    %1589 = vrot.lane.b32.xlu0 %v239, 72
    %v1590 = vpop.permute.xlu0 %1589
    %v1592 = vsel %vm246, %v1588, 0
    %v1595 = vsel %vm246, %v1590, 0
    %1597 = vmatprep.subr.bf16.mxu0 0
    %1598 = vmatpush1.bf16.xpose.msra.mxu0 %v1595
    %1599 = vmatprep.subr.bf16.mxu0 0
    %1600 = vmatpush1.bf16.xpose.msra.mxu0 0
    %1601 = vmatprep.subr.bf16.mxu0 0
    %1602 = vmatpush1.bf16.xpose.msra.mxu0 0
    %1603 = vmatprep.subr.bf16.mxu0 0
    %1604 = vmatpush1.bf16.xpose.msra.mxu0 0
    %1605 = vmatprep.subr.bf16.mxu0 0
    %1606 = vmatpush1.bf16.xpose.msra.mxu0 0
    %1607 = vmatprep.subr.bf16.mxu0 0
    %1608 = vmatpush1.bf16.xpose.msra.mxu0 0
    %1609 = vmatprep.subr.bf16.mxu0 0
    %1610 = vmatpush1.bf16.xpose.msra.mxu0 0
    %1611 = vmatprep.subr.bf16.mxu0 0
    %1612 = vmatpush1.bf16.xpose.msra.mxu0 0
    %1613 = vmatprep.subr.bf16.mxu0 0
    %1614 = vmatpush1.bf16.xpose.msra.mxu0 0
    %1615 = vmatprep.subr.bf16.mxu0 0
    %1616 = vmatpush1.bf16.xpose.msra.mxu0 0
    %1617 = vmatprep.subr.bf16.mxu0 0
    %1618 = vmatpush1.bf16.xpose.msra.mxu0 0
    %1619 = vmatprep.subr.bf16.mxu0 0
    %1620 = vmatpush1.bf16.xpose.msra.mxu0 0
    %1621 = vmatprep.subr.bf16.mxu0 0
    %1622 = vmatpush1.bf16.xpose.msra.mxu0 0
    %1623 = vmatprep.subr.bf16.mxu0 0
    %1624 = vmatpush1.bf16.xpose.msra.mxu0 0
    %1625 = vmatprep.subr.bf16.mxu0 0
    %1626 = vmatpush1.bf16.xpose.msra.mxu0 0
    %1627 = vmatprep.subr.bf16.mxu0 0
    %1628 = vmatpush1.bf16.xpose.msra.mxu0 0
    %1629 = vmatprep.mubr.bf16.mxu0 0
    %1630 = vmatmul.mubr.bf16.gmra.mrb[0].mxu0 %v1592
    %v1631 = vpop.f32.mrb[0].mxu0
    %v1632 = vadd.f32 0.0, %v1631
    %v1633 = vpop.f32.mrb[0].mxu0
    %v1634 = vpop.f32.mrb[0].mxu0
    %v1635 = vpop.f32.mrb[0].mxu0
    %1636 = vdwg.mxu0
    %1637 = vrot.lane.b32.xlu0 %v240, 104
    %v1638 = vpop.permute.xlu0 %1637
    %1639 = vrot.lane.b32.xlu0 %v240, 72
    %v1640 = vpop.permute.xlu0 %1639
    %v1642 = vsel %vm246, %v1638, 0
    %v1645 = vsel %vm246, %v1640, 0
    %1647 = vmatprep.subr.bf16.mxu0 0
    %1648 = vmatpush1.bf16.xpose.msra.mxu0 %v1645
    %1649 = vmatprep.subr.bf16.mxu0 0
    %1650 = vmatpush1.bf16.xpose.msra.mxu0 0
    %1651 = vmatprep.subr.bf16.mxu0 0
    %1652 = vmatpush1.bf16.xpose.msra.mxu0 0
    %1653 = vmatprep.subr.bf16.mxu0 0
    %1654 = vmatpush1.bf16.xpose.msra.mxu0 0
    %1655 = vmatprep.subr.bf16.mxu0 0
    %1656 = vmatpush1.bf16.xpose.msra.mxu0 0
    %1657 = vmatprep.subr.bf16.mxu0 0
    %1658 = vmatpush1.bf16.xpose.msra.mxu0 0
    %1659 = vmatprep.subr.bf16.mxu0 0
    %1660 = vmatpush1.bf16.xpose.msra.mxu0 0
    %1661 = vmatprep.subr.bf16.mxu0 0
    %1662 = vmatpush1.bf16.xpose.msra.mxu0 0
    %1663 = vmatprep.subr.bf16.mxu0 0
    %1664 = vmatpush1.bf16.xpose.msra.mxu0 0
    %1665 = vmatprep.subr.bf16.mxu0 0
    %1666 = vmatpush1.bf16.xpose.msra.mxu0 0
    %1667 = vmatprep.subr.bf16.mxu0 0
    %1668 = vmatpush1.bf16.xpose.msra.mxu0 0
    %1669 = vmatprep.subr.bf16.mxu0 0
    %1670 = vmatpush1.bf16.xpose.msra.mxu0 0
    %1671 = vmatprep.subr.bf16.mxu0 0
    %1672 = vmatpush1.bf16.xpose.msra.mxu0 0
    %1673 = vmatprep.subr.bf16.mxu0 0
    %1674 = vmatpush1.bf16.xpose.msra.mxu0 0
    %1675 = vmatprep.subr.bf16.mxu0 0
    %1676 = vmatpush1.bf16.xpose.msra.mxu0 0
    %1677 = vmatprep.subr.bf16.mxu0 0
    %1678 = vmatpush1.bf16.xpose.msra.mxu0 0
    %1679 = vmatprep.mubr.bf16.mxu0 0
    %1680 = vmatmul.mubr.bf16.gmra.mrb[0].mxu0 %v1642
    %v1681 = vpop.f32.mrb[0].mxu0
    %v1682 = vadd.f32 0.0, %v1681
    %v1683 = vpop.f32.mrb[0].mxu0
    %v1684 = vpop.f32.mrb[0].mxu0
    %v1685 = vpop.f32.mrb[0].mxu0
    %1686 = vdwg.mxu0
    %1687 = vrot.lane.b32.xlu0 %v241, 104
    %v1688 = vpop.permute.xlu0 %1687
    %1689 = vrot.lane.b32.xlu0 %v241, 72
    %v1690 = vpop.permute.xlu0 %1689
    %v1692 = vsel %vm246, %v1688, 0
    %v1695 = vsel %vm246, %v1690, 0
    %1697 = vmatprep.subr.bf16.mxu0 0
    %1698 = vmatpush1.bf16.xpose.msra.mxu0 %v1695
    %1699 = vmatprep.subr.bf16.mxu0 0
    %1700 = vmatpush1.bf16.xpose.msra.mxu0 0
    %1701 = vmatprep.subr.bf16.mxu0 0
    %1702 = vmatpush1.bf16.xpose.msra.mxu0 0
    %1703 = vmatprep.subr.bf16.mxu0 0
    %1704 = vmatpush1.bf16.xpose.msra.mxu0 0
    %1705 = vmatprep.subr.bf16.mxu0 0
    %1706 = vmatpush1.bf16.xpose.msra.mxu0 0
    %1707 = vmatprep.subr.bf16.mxu0 0
    %1708 = vmatpush1.bf16.xpose.msra.mxu0 0
    %1709 = vmatprep.subr.bf16.mxu0 0
    %1710 = vmatpush1.bf16.xpose.msra.mxu0 0
    %1711 = vmatprep.subr.bf16.mxu0 0
    %1712 = vmatpush1.bf16.xpose.msra.mxu0 0
    %1713 = vmatprep.subr.bf16.mxu0 0
    %1714 = vmatpush1.bf16.xpose.msra.mxu0 0
    %1715 = vmatprep.subr.bf16.mxu0 0
    %1716 = vmatpush1.bf16.xpose.msra.mxu0 0
    %1717 = vmatprep.subr.bf16.mxu0 0
    %1718 = vmatpush1.bf16.xpose.msra.mxu0 0
    %1719 = vmatprep.subr.bf16.mxu0 0
    %1720 = vmatpush1.bf16.xpose.msra.mxu0 0
    %1721 = vmatprep.subr.bf16.mxu0 0
    %1722 = vmatpush1.bf16.xpose.msra.mxu0 0
    %1723 = vmatprep.subr.bf16.mxu0 0
    %1724 = vmatpush1.bf16.xpose.msra.mxu0 0
    %1725 = vmatprep.subr.bf16.mxu0 0
    %1726 = vmatpush1.bf16.xpose.msra.mxu0 0
    %1727 = vmatprep.subr.bf16.mxu0 0
    %1728 = vmatpush1.bf16.xpose.msra.mxu0 0
    %1729 = vmatprep.mubr.bf16.mxu0 0
    %1730 = vmatmul.mubr.bf16.gmra.mrb[0].mxu0 %v1692
    %v1731 = vpop.f32.mrb[0].mxu0
    %v1732 = vadd.f32 0.0, %v1731
    %v1733 = vpop.f32.mrb[0].mxu0
    %v1734 = vpop.f32.mrb[0].mxu0
    %v1735 = vpop.f32.mrb[0].mxu0
    %1736 = vdwg.mxu0
    %1737 = vrot.lane.b32.xlu0 %v242, 104
    %v1738 = vpop.permute.xlu0 %1737
    %1739 = vrot.lane.b32.xlu0 %v242, 72
    %v1740 = vpop.permute.xlu0 %1739
    %v1742 = vsel %vm246, %v1738, 0
    %v1745 = vsel %vm246, %v1740, 0
    %1747 = vmatprep.subr.bf16.mxu0 0
    %1748 = vmatpush1.bf16.xpose.msra.mxu0 %v1745
    %1749 = vmatprep.subr.bf16.mxu0 0
    %1750 = vmatpush1.bf16.xpose.msra.mxu0 0
    %1751 = vmatprep.subr.bf16.mxu0 0
    %1752 = vmatpush1.bf16.xpose.msra.mxu0 0
    %1753 = vmatprep.subr.bf16.mxu0 0
    %1754 = vmatpush1.bf16.xpose.msra.mxu0 0
    %1755 = vmatprep.subr.bf16.mxu0 0
    %1756 = vmatpush1.bf16.xpose.msra.mxu0 0
    %1757 = vmatprep.subr.bf16.mxu0 0
    %1758 = vmatpush1.bf16.xpose.msra.mxu0 0
    %1759 = vmatprep.subr.bf16.mxu0 0
    %1760 = vmatpush1.bf16.xpose.msra.mxu0 0
    %1761 = vmatprep.subr.bf16.mxu0 0
    %1762 = vmatpush1.bf16.xpose.msra.mxu0 0
    %1763 = vmatprep.subr.bf16.mxu0 0
    %1764 = vmatpush1.bf16.xpose.msra.mxu0 0
    %1765 = vmatprep.subr.bf16.mxu0 0
    %1766 = vmatpush1.bf16.xpose.msra.mxu0 0
    %1767 = vmatprep.subr.bf16.mxu0 0
    %1768 = vmatpush1.bf16.xpose.msra.mxu0 0
    %1769 = vmatprep.subr.bf16.mxu0 0
    %1770 = vmatpush1.bf16.xpose.msra.mxu0 0
    %1771 = vmatprep.subr.bf16.mxu0 0
    %1772 = vmatpush1.bf16.xpose.msra.mxu0 0
    %1773 = vmatprep.subr.bf16.mxu0 0
    %1774 = vmatpush1.bf16.xpose.msra.mxu0 0
    %1775 = vmatprep.subr.bf16.mxu0 0
    %1776 = vmatpush1.bf16.xpose.msra.mxu0 0
    %1777 = vmatprep.subr.bf16.mxu0 0
    %1778 = vmatpush1.bf16.xpose.msra.mxu0 0
    %1779 = vmatprep.mubr.bf16.mxu0 0
    %1780 = vmatmul.mubr.bf16.gmra.mrb[0].mxu0 %v1742
    %v1781 = vpop.f32.mrb[0].mxu0
    %v1782 = vadd.f32 0.0, %v1781
    %v1783 = vpop.f32.mrb[0].mxu0
    %v1784 = vpop.f32.mrb[0].mxu0
    %v1785 = vpop.f32.mrb[0].mxu0
    %1786 = vdwg.mxu0
    %v1787 = vmul.f32 %v1632, 0.35355338
    %v1788 = vmul.f32 %v1682, 0.35355338
    %v1789 = vmul.f32 %v1732, 0.35355338
    %v1790 = vmul.f32 %v1782, 0.35355338
    %v1791 = vsel %vm445, %v1787, -1e+30
    %v1792 = vsel %vm445, %v1788, -1e+30
    %v1793 = vsel %vm445, %v1789, -1e+30
    %v1794 = vsel %vm445, %v1790, -1e+30
    %v1795 = vsel %vm246, %v1791, -inf
    %1796 = vmax.xlane.f32.xlu0 %v1795
    %v1797 = vpop.xlane.xlu0 %1796
    %v1798 = vsel %vm246, %v1792, -inf
    %1799 = vmax.xlane.f32.xlu0 %v1798
    %v1800 = vpop.xlane.xlu0 %1799
    %v1801 = vsel %vm246, %v1793, -inf
    %1802 = vmax.xlane.f32.xlu0 %v1801
    %v1803 = vpop.xlane.xlu0 %1802
    %v1804 = vsel %vm246, %v1794, -inf
    %1805 = vmax.xlane.f32.xlu0 %v1804
    %v1806 = vpop.xlane.xlu0 %1805
    %v1807 = vsub.f32 %v1791, %v1797
    %v1808 = vsub.f32 %v1792, %v1800
    %v1809 = vsub.f32 %v1793, %v1803
    %v1810 = vsub.f32 %v1794, %v1806
    %v1811 = vmul.f32 %v1807, 1.442695
    %v1812 = vpow.pop %v1811
    %v1813 = vmul.f32 %v1808, 1.442695
    %v1814 = vpow.pop %v1813
    %v1815 = vmul.f32 %v1809, 1.442695
    %v1816 = vpow.pop %v1815
    %v1817 = vmul.f32 %v1810, 1.442695
    %v1818 = vpow.pop %v1817
    %v1819 = vsel %vm246, %v1812, 0.0
    %1820 = vadd.xlane.f32.xlu0 %v1819
    %v1821 = vpop.xlane.xlu0 %1820
    %v1822 = vsel %vm246, %v1814, 0.0
    %1823 = vadd.xlane.f32.xlu0 %v1822
    %v1824 = vpop.xlane.xlu0 %1823
    %v1825 = vsel %vm246, %v1816, 0.0
    %1826 = vadd.xlane.f32.xlu0 %v1825
    %v1827 = vpop.xlane.xlu0 %1826
    %v1828 = vsel %vm246, %v1818, 0.0
    %1829 = vadd.xlane.f32.xlu0 %v1828
    %v1830 = vpop.xlane.xlu0 %1829
    %v1831 = vrcp.pop %v1821
    %v1832 = vrcp.pop %v1824
    %v1833 = vrcp.pop %v1827
    %v1834 = vrcp.pop %v1830
    %v1835 = vmul.f32 %v1812, %v1831
    %v1836 = vmul.f32 %v1814, %v1832
    %v1837 = vmul.f32 %v1816, %v1833
    %v1838 = vmul.f32 %v1818, %v1834
    %v1839 = vpack.c.bf16 %v1835, %v1835
    %v1840 = vpack.c.bf16 %v1836, %v1836
    %v1841 = vpack.c.bf16 %v1837, %v1837
    %v1842 = vpack.c.bf16 %v1838, %v1838
    %1843 = vrot.lane.b32.xlu0 %v239, 40
    %v1844 = vpop.permute.xlu0 %1843
    %v1846 = vsel %vm246, %v1839, 0
    %v1849 = vsel %vm503, %v1844, 0
    %1851 = vmatprep.subr.bf16.mxu0 0
    %1852 = vmatpush1.bf16.msra.mxu0 %v1849
    %1853 = vmatprep.subr.bf16.mxu0 0
    %1854 = vmatpush1.bf16.msra.mxu0 0
    %1855 = vmatprep.subr.bf16.mxu0 0
    %1856 = vmatpush1.bf16.msra.mxu0 0
    %1857 = vmatprep.subr.bf16.mxu0 0
    %1858 = vmatpush1.bf16.msra.mxu0 0
    %1859 = vmatprep.subr.bf16.mxu0 0
    %1860 = vmatpush1.bf16.msra.mxu0 0
    %1861 = vmatprep.subr.bf16.mxu0 0
    %1862 = vmatpush1.bf16.msra.mxu0 0
    %1863 = vmatprep.subr.bf16.mxu0 0
    %1864 = vmatpush1.bf16.msra.mxu0 0
    %1865 = vmatprep.subr.bf16.mxu0 0
    %1866 = vmatpush1.bf16.msra.mxu0 0
    %1867 = vmatprep.subr.bf16.mxu0 0
    %1868 = vmatpush1.bf16.msra.mxu0 0
    %1869 = vmatprep.subr.bf16.mxu0 0
    %1870 = vmatpush1.bf16.msra.mxu0 0
    %1871 = vmatprep.subr.bf16.mxu0 0
    %1872 = vmatpush1.bf16.msra.mxu0 0
    %1873 = vmatprep.subr.bf16.mxu0 0
    %1874 = vmatpush1.bf16.msra.mxu0 0
    %1875 = vmatprep.subr.bf16.mxu0 0
    %1876 = vmatpush1.bf16.msra.mxu0 0
    %1877 = vmatprep.subr.bf16.mxu0 0
    %1878 = vmatpush1.bf16.msra.mxu0 0
    %1879 = vmatprep.subr.bf16.mxu0 0
    %1880 = vmatpush1.bf16.msra.mxu0 0
    %1881 = vmatprep.subr.bf16.mxu0 0
    %1882 = vmatpush1.bf16.msra.mxu0 0
    %1883 = vmatprep.mubr.bf16.mxu0 0
    %1884 = vmatmul.mubr.bf16.gmra.mrb[0].mxu0 %v1846
    %v1885 = vpop.f32.mrb[0].mxu0
    %v1886 = vadd.f32 0.0, %v1885
    %v1887 = vpop.f32.mrb[0].mxu0
    %v1888 = vpop.f32.mrb[0].mxu0
    %v1889 = vpop.f32.mrb[0].mxu0
    %1890 = vdwg.mxu0
    %1891 = vrot.lane.b32.xlu0 %v240, 40
    %v1892 = vpop.permute.xlu0 %1891
    %v1894 = vsel %vm246, %v1840, 0
    %v1897 = vsel %vm503, %v1892, 0
    %1899 = vmatprep.subr.bf16.mxu0 0
    %1900 = vmatpush1.bf16.msra.mxu0 %v1897
    %1901 = vmatprep.subr.bf16.mxu0 0
    %1902 = vmatpush1.bf16.msra.mxu0 0
    %1903 = vmatprep.subr.bf16.mxu0 0
    %1904 = vmatpush1.bf16.msra.mxu0 0
    %1905 = vmatprep.subr.bf16.mxu0 0
    %1906 = vmatpush1.bf16.msra.mxu0 0
    %1907 = vmatprep.subr.bf16.mxu0 0
    %1908 = vmatpush1.bf16.msra.mxu0 0
    %1909 = vmatprep.subr.bf16.mxu0 0
    %1910 = vmatpush1.bf16.msra.mxu0 0
    %1911 = vmatprep.subr.bf16.mxu0 0
    %1912 = vmatpush1.bf16.msra.mxu0 0
    %1913 = vmatprep.subr.bf16.mxu0 0
    %1914 = vmatpush1.bf16.msra.mxu0 0
    %1915 = vmatprep.subr.bf16.mxu0 0
    %1916 = vmatpush1.bf16.msra.mxu0 0
    %1917 = vmatprep.subr.bf16.mxu0 0
    %1918 = vmatpush1.bf16.msra.mxu0 0
    %1919 = vmatprep.subr.bf16.mxu0 0
    %1920 = vmatpush1.bf16.msra.mxu0 0
    %1921 = vmatprep.subr.bf16.mxu0 0
    %1922 = vmatpush1.bf16.msra.mxu0 0
    %1923 = vmatprep.subr.bf16.mxu0 0
    %1924 = vmatpush1.bf16.msra.mxu0 0
    %1925 = vmatprep.subr.bf16.mxu0 0
    %1926 = vmatpush1.bf16.msra.mxu0 0
    %1927 = vmatprep.subr.bf16.mxu0 0
    %1928 = vmatpush1.bf16.msra.mxu0 0
    %1929 = vmatprep.subr.bf16.mxu0 0
    %1930 = vmatpush1.bf16.msra.mxu0 0
    %1931 = vmatprep.mubr.bf16.mxu0 0
    %1932 = vmatmul.mubr.bf16.gmra.mrb[0].mxu0 %v1894
    %v1933 = vpop.f32.mrb[0].mxu0
    %v1934 = vadd.f32 0.0, %v1933
    %v1935 = vpop.f32.mrb[0].mxu0
    %v1936 = vpop.f32.mrb[0].mxu0
    %v1937 = vpop.f32.mrb[0].mxu0
    %1938 = vdwg.mxu0
    %1939 = vrot.lane.b32.xlu0 %v241, 40
    %v1940 = vpop.permute.xlu0 %1939
    %v1942 = vsel %vm246, %v1841, 0
    %v1945 = vsel %vm503, %v1940, 0
    %1947 = vmatprep.subr.bf16.mxu0 0
    %1948 = vmatpush1.bf16.msra.mxu0 %v1945
    %1949 = vmatprep.subr.bf16.mxu0 0
    %1950 = vmatpush1.bf16.msra.mxu0 0
    %1951 = vmatprep.subr.bf16.mxu0 0
    %1952 = vmatpush1.bf16.msra.mxu0 0
    %1953 = vmatprep.subr.bf16.mxu0 0
    %1954 = vmatpush1.bf16.msra.mxu0 0
    %1955 = vmatprep.subr.bf16.mxu0 0
    %1956 = vmatpush1.bf16.msra.mxu0 0
    %1957 = vmatprep.subr.bf16.mxu0 0
    %1958 = vmatpush1.bf16.msra.mxu0 0
    %1959 = vmatprep.subr.bf16.mxu0 0
    %1960 = vmatpush1.bf16.msra.mxu0 0
    %1961 = vmatprep.subr.bf16.mxu0 0
    %1962 = vmatpush1.bf16.msra.mxu0 0
    %1963 = vmatprep.subr.bf16.mxu0 0
    %1964 = vmatpush1.bf16.msra.mxu0 0
    %1965 = vmatprep.subr.bf16.mxu0 0
    %1966 = vmatpush1.bf16.msra.mxu0 0
    %1967 = vmatprep.subr.bf16.mxu0 0
    %1968 = vmatpush1.bf16.msra.mxu0 0
    %1969 = vmatprep.subr.bf16.mxu0 0
    %1970 = vmatpush1.bf16.msra.mxu0 0
    %1971 = vmatprep.subr.bf16.mxu0 0
    %1972 = vmatpush1.bf16.msra.mxu0 0
    %1973 = vmatprep.subr.bf16.mxu0 0
    %1974 = vmatpush1.bf16.msra.mxu0 0
    %1975 = vmatprep.subr.bf16.mxu0 0
    %1976 = vmatpush1.bf16.msra.mxu0 0
    %1977 = vmatprep.subr.bf16.mxu0 0
    %1978 = vmatpush1.bf16.msra.mxu0 0
    %1979 = vmatprep.mubr.bf16.mxu0 0
    %1980 = vmatmul.mubr.bf16.gmra.mrb[0].mxu0 %v1942
    %v1981 = vpop.f32.mrb[0].mxu0
    %v1982 = vadd.f32 0.0, %v1981
    %v1983 = vpop.f32.mrb[0].mxu0
    %v1984 = vpop.f32.mrb[0].mxu0
    %v1985 = vpop.f32.mrb[0].mxu0
    %1986 = vdwg.mxu0
    %1987 = vrot.lane.b32.xlu0 %v242, 40
    %v1988 = vpop.permute.xlu0 %1987
    %v1990 = vsel %vm246, %v1842, 0
    %v1993 = vsel %vm503, %v1988, 0
    %1995 = vmatprep.subr.bf16.mxu0 0
    %1996 = vmatpush1.bf16.msra.mxu0 %v1993
    %1997 = vmatprep.subr.bf16.mxu0 0
    %1998 = vmatpush1.bf16.msra.mxu0 0
    %1999 = vmatprep.subr.bf16.mxu0 0
    %2000 = vmatpush1.bf16.msra.mxu0 0
    %2001 = vmatprep.subr.bf16.mxu0 0
    %2002 = vmatpush1.bf16.msra.mxu0 0
    %2003 = vmatprep.subr.bf16.mxu0 0
    %2004 = vmatpush1.bf16.msra.mxu0 0
    %2005 = vmatprep.subr.bf16.mxu0 0
    %2006 = vmatpush1.bf16.msra.mxu0 0
    %2007 = vmatprep.subr.bf16.mxu0 0
    %2008 = vmatpush1.bf16.msra.mxu0 0
    %2009 = vmatprep.subr.bf16.mxu0 0
    %2010 = vmatpush1.bf16.msra.mxu0 0
    %2011 = vmatprep.subr.bf16.mxu0 0
    %2012 = vmatpush1.bf16.msra.mxu0 0
    %2013 = vmatprep.subr.bf16.mxu0 0
    %2014 = vmatpush1.bf16.msra.mxu0 0
    %2015 = vmatprep.subr.bf16.mxu0 0
    %2016 = vmatpush1.bf16.msra.mxu0 0
    %2017 = vmatprep.subr.bf16.mxu0 0
    %2018 = vmatpush1.bf16.msra.mxu0 0
    %2019 = vmatprep.subr.bf16.mxu0 0
    %2020 = vmatpush1.bf16.msra.mxu0 0
    %2021 = vmatprep.subr.bf16.mxu0 0
    %2022 = vmatpush1.bf16.msra.mxu0 0
    %2023 = vmatprep.subr.bf16.mxu0 0
    %2024 = vmatpush1.bf16.msra.mxu0 0
    %2025 = vmatprep.subr.bf16.mxu0 0
    %2026 = vmatpush1.bf16.msra.mxu0 0
    %2027 = vmatprep.mubr.bf16.mxu0 0
    %2028 = vmatmul.mubr.bf16.gmra.mrb[0].mxu0 %v1990
    %v2029 = vpop.f32.mrb[0].mxu0
    %v2030 = vadd.f32 0.0, %v2029
    %v2031 = vpop.f32.mrb[0].mxu0
    %v2032 = vpop.f32.mrb[0].mxu0
    %v2033 = vpop.f32.mrb[0].mxu0
    %2034 = vdwg.mxu0
    %2039 = vrot.lane.b32.xlu0 %v990, 8
    %v2040 = vpop.permute.xlu0 %2039
    %2041 = vrot.lane.b32.xlu0 %v1038, 8
    %v2042 = vpop.permute.xlu0 %2041
    %2043 = vrot.lane.b32.xlu0 %v1086, 8
    %v2044 = vpop.permute.xlu0 %2043
    %2045 = vrot.lane.b32.xlu0 %v1134, 8
    %v2046 = vpop.permute.xlu0 %2045
    %2055 = vrot.lane.b32.xlu0 %v1438, 16
    %v2056 = vpop.permute.xlu0 %2055
    %2057 = vrot.lane.b32.xlu0 %v1486, 16
    %v2058 = vpop.permute.xlu0 %2057
    %2059 = vrot.lane.b32.xlu0 %v1534, 16
    %v2060 = vpop.permute.xlu0 %2059
    %2061 = vrot.lane.b32.xlu0 %v1582, 16
    %v2062 = vpop.permute.xlu0 %2061
    %2071 = vrot.lane.b32.xlu0 %v1886, 24
    %v2072 = vpop.permute.xlu0 %2071
    %2073 = vrot.lane.b32.xlu0 %v1934, 24
    %v2074 = vpop.permute.xlu0 %2073
    %2075 = vrot.lane.b32.xlu0 %v1982, 24
    %v2076 = vpop.permute.xlu0 %2075
    %2077 = vrot.lane.b32.xlu0 %v2030, 24
    %v2078 = vpop.permute.xlu0 %2077
    %v2083 = vsel %vm246, %v542, %v2040
    %v2084 = vsel %vm246, %v590, %v2042
    %v2085 = vsel %vm246, %v638, %v2044
    %v2086 = vsel %vm246, %v686, %v2046
    %vm2087 = vcmask 130048
    %v2088 = vsel %vm2087, %v2083, %v2056
    %v2089 = vsel %vm2087, %v2084, %v2058
    %v2090 = vsel %vm2087, %v2085, %v2060
    %v2091 = vsel %vm2087, %v2086, %v2062
    %vm2092 = vcmask 195584
    %v2093 = vsel %vm2092, %v2088, %v2072
    %v2094 = vsel %vm2092, %v2089, %v2074
    %v2095 = vsel %vm2092, %v2090, %v2076
    %v2096 = vsel %vm2092, %v2091, %v2078
    %v2097 = vpack.c.bf16 %v2094, %v2093
    %v2098 = vpack.c.bf16 %v2096, %v2095
    %2099 = vrot.lane.b32.xlu0 %v180, 32
    %v2100 = vpop.permute.xlu0 %2099
    %2101 = vrot.lane.b32.xlu0 %v181, 32
    %v2102 = vpop.permute.xlu0 %2101
    %2106 = vrot.lane.b32.xlu0 %v171, 32
    %v2107 = vpop.permute.xlu0 %2106
    %v2110 = vsel %vm96, %v2097, 0
    %v2113 = vsel %vm96, %v2098, 0
    %2115 = vmatprep.subr.bf16.mxu0 0
    %2116 = vmatpush1.bf16.msra.mxu0 %v2100
    %2117 = vmatprep.subr.bf16.mxu0 0
    %2118 = vmatpush1.bf16.msra.mxu0 %v2102
    %2119 = vmatprep.subr.bf16.mxu0 0
    %2120 = vmatpush1.bf16.msra.mxu0 0
    %2121 = vmatprep.subr.bf16.mxu0 0
    %2122 = vmatpush1.bf16.msra.mxu0 0
    %2123 = vmatprep.subr.bf16.mxu0 0
    %2124 = vmatpush1.bf16.msra.mxu0 0
    %2125 = vmatprep.subr.bf16.mxu0 0
    %2126 = vmatpush1.bf16.msra.mxu0 0
    %2127 = vmatprep.subr.bf16.mxu0 0
    %2128 = vmatpush1.bf16.msra.mxu0 0
    %2129 = vmatprep.subr.bf16.mxu0 0
    %2130 = vmatpush1.bf16.msra.mxu0 0
    %2131 = vmatprep.subr.bf16.mxu0 0
    %2132 = vmatpush1.bf16.msra.mxu0 0
    %2133 = vmatprep.subr.bf16.mxu0 0
    %2134 = vmatpush1.bf16.msra.mxu0 0
    %2135 = vmatprep.subr.bf16.mxu0 0
    %2136 = vmatpush1.bf16.msra.mxu0 0
    %2137 = vmatprep.subr.bf16.mxu0 0
    %2138 = vmatpush1.bf16.msra.mxu0 0
    %2139 = vmatprep.subr.bf16.mxu0 0
    %2140 = vmatpush1.bf16.msra.mxu0 0
    %2141 = vmatprep.subr.bf16.mxu0 0
    %2142 = vmatpush1.bf16.msra.mxu0 0
    %2143 = vmatprep.subr.bf16.mxu0 0
    %2144 = vmatpush1.bf16.msra.mxu0 0
    %2145 = vmatprep.subr.bf16.mxu0 0
    %2146 = vmatpush1.bf16.msra.mxu0 0
    %2147 = vmatprep.mubr.bf16.mxu0 0
    %2148 = vmatmul.mubr.bf16.gmra.mrb[0].mxu0 %v2110
    %v2149 = vpop.f32.mrb[0].mxu0
    %v2150 = vadd.f32 %v2107, %v2149
    %v2151 = vpop.f32.mrb[0].mxu0
    %v2152 = vpop.f32.mrb[0].mxu0
    %v2153 = vadd.f32 %v2107, %v2152
    %v2154 = vpop.f32.mrb[0].mxu0
    %2155 = vmatprep.mubr.bf16.mxu0 0
    %2156 = vmatmul.mubr.bf16.gmra.mrb[0].mxu0 %v2113
    %v2157 = vpop.f32.mrb[0].mxu0
    %v2158 = vadd.f32 %v2107, %v2157
    %v2159 = vpop.f32.mrb[0].mxu0
    %v2160 = vpop.f32.mrb[0].mxu0
    %v2161 = vadd.f32 %v2107, %v2160
    %v2162 = vpop.f32.mrb[0].mxu0
    %2163 = vdwg.mxu0
    %v2164 = vadd.f32 %v61, %v2150
    %v2165 = vadd.f32 %v62, %v2153
    %v2166 = vadd.f32 %v63, %v2158
    %v2167 = vadd.f32 %v64, %v2161
    %v2168 = vsel %vm96, %v2164, 0.0
    %2169 = vadd.xlane.f32.xlu0 %v2168
    %v2170 = vpop.xlane.xlu0 %2169
    %v2171 = vsel %vm96, %v2165, 0.0
    %2172 = vadd.xlane.f32.xlu0 %v2171
    %v2173 = vpop.xlane.xlu0 %2172
    %v2174 = vsel %vm96, %v2166, 0.0
    %2175 = vadd.xlane.f32.xlu0 %v2174
    %v2176 = vpop.xlane.xlu0 %2175
    %v2177 = vsel %vm96, %v2167, 0.0
    %2178 = vadd.xlane.f32.xlu0 %v2177
    %v2179 = vpop.xlane.xlu0 %2178
    %v2180 = vmul.f32 %v2170, %v109
    %v2181 = vmul.f32 %v2173, %v109
    %v2182 = vmul.f32 %v2176, %v109
    %v2183 = vmul.f32 %v2179, %v109
    %v2184 = vsub.f32 %v2164, %v2180
    %v2185 = vsub.f32 %v2165, %v2181
    %v2186 = vsub.f32 %v2166, %v2182
    %v2187 = vsub.f32 %v2167, %v2183
    %v2188 = vmul.f32 %v2184, %v2184
    %v2189 = vmul.f32 %v2185, %v2185
    %v2190 = vmul.f32 %v2186, %v2186
    %v2191 = vmul.f32 %v2187, %v2187
    %v2192 = vsel %vm96, %v2188, 0.0
    %2193 = vadd.xlane.f32.xlu0 %v2192
    %v2194 = vpop.xlane.xlu0 %2193
    %v2195 = vsel %vm96, %v2189, 0.0
    %2196 = vadd.xlane.f32.xlu0 %v2195
    %v2197 = vpop.xlane.xlu0 %2196
    %v2198 = vsel %vm96, %v2190, 0.0
    %2199 = vadd.xlane.f32.xlu0 %v2198
    %v2200 = vpop.xlane.xlu0 %2199
    %v2201 = vsel %vm96, %v2191, 0.0
    %2202 = vadd.xlane.f32.xlu0 %v2201
    %v2203 = vpop.xlane.xlu0 %2202
    %v2204 = vmul.f32 %v2194, %v109
    %v2205 = vmul.f32 %v2197, %v109
    %v2206 = vmul.f32 %v2200, %v109
    %v2207 = vmul.f32 %v2203, %v109
    %v2208 = vadd.f32 %v2204, 1e-05
    %v2209 = vadd.f32 %v2205, 1e-05
    %v2210 = vadd.f32 %v2206, 1e-05
    %v2211 = vadd.f32 %v2207, 1e-05
    %v2212 = vrsqrt.pop %v2208
    %v2213 = vrsqrt.pop %v2209
    %v2214 = vrsqrt.pop %v2210
    %v2215 = vrsqrt.pop %v2211
    %v2216 = vmul.f32 %v2184, %v2212
    %v2217 = vmul.f32 %v2185, %v2213
    %v2218 = vmul.f32 %v2186, %v2214
    %v2219 = vmul.f32 %v2187, %v2215
    %2220 = vrot.lane.b32.xlu0 %v153, 64
    %v2221 = vpop.permute.xlu0 %2220
    %v2223 = vmul.f32 %v2216, %v2221
    %v2224 = vmul.f32 %v2217, %v2221
    %v2225 = vmul.f32 %v2218, %v2221
    %v2226 = vmul.f32 %v2219, %v2221
    %2227 = vrot.lane.b32.xlu0 %v153, 32
    %v2228 = vpop.permute.xlu0 %2227
    %v2230 = vadd.f32 %v2223, %v2228
    %v2231 = vadd.f32 %v2224, %v2228
    %v2232 = vadd.f32 %v2225, %v2228
    %v2233 = vadd.f32 %v2226, %v2228
    %v2234 = vpack.c.bf16 %v2231, %v2230
    %v2235 = vpack.c.bf16 %v2233, %v2232
    %v2236 = vlaneseq
    %v2237 = vshrl.u32 %v2236, 7
    %v2238 = vsub.s32 2, %v2237
    %v2239 = vrot.slane %v65, %v2238
    %v2244 = vunpack.c.l.b16 %v76
    %v2245 = vunpack.c.l.b16 %v77
    %v2246 = vunpack.c.l.b16 %v78
    %v2247 = vunpack.c.l.b16 %v79
    %v2248 = vpack.c.b16 %v2245, %v2244
    %v2249 = vpack.c.b16 %v2247, %v2246
    %v2253 = vsel %vm96, %v2234, 0
    %v2256 = vsel %vm96, %v2235, 0
    %2258 = vmatprep.subr.bf16.mxu0 0
    %2259 = vmatpush1.bf16.msra.mxu0 %v2248
    %2260 = vmatprep.subr.bf16.mxu0 0
    %2261 = vmatpush1.bf16.msra.mxu0 %v2249
    %2262 = vmatprep.subr.bf16.mxu0 0
    %2263 = vmatpush1.bf16.msra.mxu0 0
    %2264 = vmatprep.subr.bf16.mxu0 0
    %2265 = vmatpush1.bf16.msra.mxu0 0
    %2266 = vmatprep.subr.bf16.mxu0 0
    %2267 = vmatpush1.bf16.msra.mxu0 0
    %2268 = vmatprep.subr.bf16.mxu0 0
    %2269 = vmatpush1.bf16.msra.mxu0 0
    %2270 = vmatprep.subr.bf16.mxu0 0
    %2271 = vmatpush1.bf16.msra.mxu0 0
    %2272 = vmatprep.subr.bf16.mxu0 0
    %2273 = vmatpush1.bf16.msra.mxu0 0
    %2274 = vmatprep.subr.bf16.mxu0 0
    %2275 = vmatpush1.bf16.msra.mxu0 0
    %2276 = vmatprep.subr.bf16.mxu0 0
    %2277 = vmatpush1.bf16.msra.mxu0 0
    %2278 = vmatprep.subr.bf16.mxu0 0
    %2279 = vmatpush1.bf16.msra.mxu0 0
    %2280 = vmatprep.subr.bf16.mxu0 0
    %2281 = vmatpush1.bf16.msra.mxu0 0
    %2282 = vmatprep.subr.bf16.mxu0 0
    %2283 = vmatpush1.bf16.msra.mxu0 0
    %2284 = vmatprep.subr.bf16.mxu0 0
    %2285 = vmatpush1.bf16.msra.mxu0 0
    %2286 = vmatprep.subr.bf16.mxu0 0
    %2287 = vmatpush1.bf16.msra.mxu0 0
    %2288 = vmatprep.subr.bf16.mxu0 0
    %2289 = vmatpush1.bf16.msra.mxu0 0
    %2290 = vmatprep.mubr.bf16.mxu0 0
    %2291 = vmatmul.mubr.bf16.gmra.mrb[0].mxu0 %v2253
    %v2292 = vpop.f32.mrb[0].mxu0
    %v2293 = vadd.f32 %v2239, %v2292
    %v2294 = vpop.f32.mrb[0].mxu0
    %v2295 = vpop.f32.mrb[0].mxu0
    %v2296 = vadd.f32 %v2239, %v2295
    %v2297 = vpop.f32.mrb[0].mxu0
    %2298 = vmatprep.mubr.bf16.mxu0 0
    %2299 = vmatmul.mubr.bf16.gmra.mrb[0].mxu0 %v2256
    %v2300 = vpop.f32.mrb[0].mxu0
    %v2301 = vadd.f32 %v2239, %v2300
    %v2302 = vpop.f32.mrb[0].mxu0
    %v2303 = vpop.f32.mrb[0].mxu0
    %v2304 = vadd.f32 %v2239, %v2303
    %v2305 = vpop.f32.mrb[0].mxu0
    %2306 = vdwg.mxu0
    %v2307 = vmul.f32 %v2293, %v2293
    %v2308 = vmul.f32 %v2296, %v2296
    %v2309 = vmul.f32 %v2301, %v2301
    %v2310 = vmul.f32 %v2304, %v2304
    %v2311 = vmul.f32 %v2293, %v2307
    %v2312 = vmul.f32 %v2296, %v2308
    %v2313 = vmul.f32 %v2301, %v2309
    %v2314 = vmul.f32 %v2304, %v2310
    %v2315 = vmul.f32 %v2311, 0.044715
    %v2316 = vmul.f32 %v2312, 0.044715
    %v2317 = vmul.f32 %v2313, 0.044715
    %v2318 = vmul.f32 %v2314, 0.044715
    %v2319 = vadd.f32 %v2293, %v2315
    %v2320 = vadd.f32 %v2296, %v2316
    %v2321 = vadd.f32 %v2301, %v2317
    %v2322 = vadd.f32 %v2304, %v2318
    %v2323 = vmul.f32 %v2319, 0.7978846
    %v2324 = vmul.f32 %v2320, 0.7978846
    %v2325 = vmul.f32 %v2321, 0.7978846
    %v2326 = vmul.f32 %v2322, 0.7978846
    %v2327 = vtanh.pop %v2323
    %v2328 = vtanh.pop %v2324
    %v2329 = vtanh.pop %v2325
    %v2330 = vtanh.pop %v2326
    %v2331 = vadd.f32 %v2327, 1.0
    %v2332 = vadd.f32 %v2328, 1.0
    %v2333 = vadd.f32 %v2329, 1.0
    %v2334 = vadd.f32 %v2330, 1.0
    %v2335 = vmul.f32 %v2331, 0.5
    %v2336 = vmul.f32 %v2332, 0.5
    %v2337 = vmul.f32 %v2333, 0.5
    %v2338 = vmul.f32 %v2334, 0.5
    %v2339 = vmul.f32 %v2293, %v2335
    %v2340 = vmul.f32 %v2296, %v2336
    %v2341 = vmul.f32 %v2301, %v2337
    %v2342 = vmul.f32 %v2304, %v2338
    %v2343 = vpack.c.bf16 %v2340, %v2339
    %v2344 = vpack.c.bf16 %v2342, %v2341
    %v2361 = vunpack.c.l.b16 %v80
    %v2362 = vunpack.c.l.b16 %v81
    %v2363 = vunpack.c.l.b16 %v82
    %v2364 = vunpack.c.l.b16 %v83
    %v2365 = vunpack.c.l.b16 %v84
    %v2366 = vunpack.c.l.b16 %v85
    %v2367 = vunpack.c.l.b16 %v86
    %v2368 = vunpack.c.l.b16 %v87
    %v2369 = vunpack.c.l.b16 %v88
    %v2370 = vunpack.c.l.b16 %v89
    %v2371 = vunpack.c.l.b16 %v90
    %v2372 = vunpack.c.l.b16 %v91
    %v2373 = vunpack.c.l.b16 %v92
    %v2374 = vunpack.c.l.b16 %v93
    %v2375 = vunpack.c.l.b16 %v94
    %v2376 = vunpack.c.l.b16 %v95
    %v2377 = vpack.c.b16 %v2362, %v2361
    %v2378 = vpack.c.b16 %v2364, %v2363
    %v2379 = vpack.c.b16 %v2366, %v2365
    %v2380 = vpack.c.b16 %v2368, %v2367
    %v2381 = vpack.c.b16 %v2370, %v2369
    %v2382 = vpack.c.b16 %v2372, %v2371
    %v2383 = vpack.c.b16 %v2374, %v2373
    %v2384 = vpack.c.b16 %v2376, %v2375
    %2393 = vmatprep.subr.bf16.mxu0 0
    %2394 = vmatpush1.bf16.msra.mxu0 %v2377
    %2395 = vmatprep.subr.bf16.mxu0 0
    %2396 = vmatpush1.bf16.msra.mxu0 %v2378
    %2397 = vmatprep.subr.bf16.mxu0 0
    %2398 = vmatpush1.bf16.msra.mxu0 %v2379
    %2399 = vmatprep.subr.bf16.mxu0 0
    %2400 = vmatpush1.bf16.msra.mxu0 %v2380
    %2401 = vmatprep.subr.bf16.mxu0 0
    %2402 = vmatpush1.bf16.msra.mxu0 %v2381
    %2403 = vmatprep.subr.bf16.mxu0 0
    %2404 = vmatpush1.bf16.msra.mxu0 %v2382
    %2405 = vmatprep.subr.bf16.mxu0 0
    %2406 = vmatpush1.bf16.msra.mxu0 %v2383
    %2407 = vmatprep.subr.bf16.mxu0 0
    %2408 = vmatpush1.bf16.msra.mxu0 %v2384
    %2409 = vmatprep.subr.bf16.mxu0 0
    %2410 = vmatpush1.bf16.msra.mxu0 0
    %2411 = vmatprep.subr.bf16.mxu0 0
    %2412 = vmatpush1.bf16.msra.mxu0 0
    %2413 = vmatprep.subr.bf16.mxu0 0
    %2414 = vmatpush1.bf16.msra.mxu0 0
    %2415 = vmatprep.subr.bf16.mxu0 0
    %2416 = vmatpush1.bf16.msra.mxu0 0
    %2417 = vmatprep.subr.bf16.mxu0 0
    %2418 = vmatpush1.bf16.msra.mxu0 0
    %2419 = vmatprep.subr.bf16.mxu0 0
    %2420 = vmatpush1.bf16.msra.mxu0 0
    %2421 = vmatprep.subr.bf16.mxu0 0
    %2422 = vmatpush1.bf16.msra.mxu0 0
    %2423 = vmatprep.subr.bf16.mxu0 0
    %2424 = vmatpush1.bf16.msra.mxu0 0
    %2425 = vmatprep.mubr.bf16.mxu0 0
    %2426 = vmatmul.mubr.bf16.gmra.mrb[0].mxu0 %v2343
    %v2427 = vpop.f32.mrb[0].mxu0
    %v2428 = vadd.f32 0.0, %v2427
    %v2429 = vpop.f32.mrb[0].mxu0
    %v2430 = vpop.f32.mrb[0].mxu0
    %v2431 = vadd.f32 0.0, %v2430
    %v2432 = vpop.f32.mrb[0].mxu0
    %2433 = vmatprep.mubr.bf16.mxu0 0
    %2434 = vmatmul.mubr.bf16.gmra.mrb[0].mxu0 %v2344
    %v2435 = vpop.f32.mrb[0].mxu0
    %v2436 = vadd.f32 0.0, %v2435
    %v2437 = vpop.f32.mrb[0].mxu0
    %v2438 = vpop.f32.mrb[0].mxu0
    %v2439 = vadd.f32 0.0, %v2438
    %v2440 = vpop.f32.mrb[0].mxu0
    %2441 = vdwg.mxu0
    %v2442 = vadd.f32 %v2164, %v2428
    %v2443 = vadd.f32 %v2165, %v2431
    %v2444 = vadd.f32 %v2166, %v2436
    %v2445 = vadd.f32 %v2167, %v2439
    %v2446 = vlaneseq
    %v2447 = vshrl.u32 %v2446, 7
    %v2448 = vsub.s32 3, %v2447
    %v2449 = vrot.slane %v65, %v2448
    %v2450 = vadd.f32 %v2442, %v2449
    %v2451 = vadd.f32 %v2443, %v2449
    %v2452 = vadd.f32 %v2444, %v2449
    %v2453 = vadd.f32 %v2445, %v2449
    %v2454 = vld [vmem:[#allocation5 + $0x60] sm:$0xf]
    %v2455 = vld [vmem:[#allocation5 + $0x64] sm:$0xf]
    %v2456 = vld [vmem:[#allocation5 + $0x68] sm:$0xf]
    %v2457 = vld [vmem:[#allocation5 + $0x6c] sm:$0xf]
    %v2458 = vld [vmem:[#allocation5 + $0x70] sm:$0xf]
    %v2459 = vld [vmem:[#allocation5 + $0x74] sm:$0xf]
    %v2460 = vld [vmem:[#allocation5 + $0x78] sm:$0xf]
    %v2461 = vld [vmem:[#allocation5 + $0x7c] sm:$0xf]
    %v2462 = vld [vmem:[#allocation5 + $0x80] sm:$0xf]
    %v2463 = vld [vmem:[#allocation5 + $0x84] sm:$0xf]
    %v2464 = vld [vmem:[#allocation5 + $0x88] sm:$0xf]
    %v2465 = vld [vmem:[#allocation5 + $0x8c] sm:$0xf]
    %v2466 = vld [vmem:[#allocation5 + $0x90] sm:$0xf]
    %v2467 = vld [vmem:[#allocation5 + $0x94] sm:$0xf]
    %v2468 = vld [vmem:[#allocation5 + $0x98] sm:$0xf]
    %v2469 = vld [vmem:[#allocation5 + $0x9c] sm:$0xf]
    %v2470 = vld [vmem:[#allocation5 + $0xa0] sm:$0xf]
    %v2471 = vld [vmem:[#allocation5 + $0xa4] sm:$0xf]
    %v2472 = vld [vmem:[#allocation5 + $0xa8] sm:$0xf]
    %v2473 = vld [vmem:[#allocation5 + $0xac] sm:$0xf]
    %v2474 = vld [vmem:[#allocation5 + $0xb0] sm:$0xf]
    %v2475 = vld [vmem:[#allocation5 + $0xb4] sm:$0xf]
    %v2476 = vld [vmem:[#allocation5 + $0xb8] sm:$0xf]
    %v2477 = vld [vmem:[#allocation5 + $0xbc] sm:$0xf]
    %v2478 = vsel %vm96, %v2450, 0.0
    %2479 = vadd.xlane.f32.xlu0 %v2478
    %v2480 = vpop.xlane.xlu0 %2479
    %v2481 = vsel %vm96, %v2451, 0.0
    %2482 = vadd.xlane.f32.xlu0 %v2481
    %v2483 = vpop.xlane.xlu0 %2482
    %v2484 = vsel %vm96, %v2452, 0.0
    %2485 = vadd.xlane.f32.xlu0 %v2484
    %v2486 = vpop.xlane.xlu0 %2485
    %v2487 = vsel %vm96, %v2453, 0.0
    %2488 = vadd.xlane.f32.xlu0 %v2487
    %v2489 = vpop.xlane.xlu0 %2488
    %v2490 = vmul.f32 %v2480, %v109
    %v2491 = vmul.f32 %v2483, %v109
    %v2492 = vmul.f32 %v2486, %v109
    %v2493 = vmul.f32 %v2489, %v109
    %v2494 = vsub.f32 %v2450, %v2490
    %v2495 = vsub.f32 %v2451, %v2491
    %v2496 = vsub.f32 %v2452, %v2492
    %v2497 = vsub.f32 %v2453, %v2493
    %v2498 = vmul.f32 %v2494, %v2494
    %v2499 = vmul.f32 %v2495, %v2495
    %v2500 = vmul.f32 %v2496, %v2496
    %v2501 = vmul.f32 %v2497, %v2497
    %v2502 = vsel %vm96, %v2498, 0.0
    %2503 = vadd.xlane.f32.xlu0 %v2502
    %v2504 = vpop.xlane.xlu0 %2503
    %v2505 = vsel %vm96, %v2499, 0.0
    %2506 = vadd.xlane.f32.xlu0 %v2505
    %v2507 = vpop.xlane.xlu0 %2506
    %v2508 = vsel %vm96, %v2500, 0.0
    %2509 = vadd.xlane.f32.xlu0 %v2508
    %v2510 = vpop.xlane.xlu0 %2509
    %v2511 = vsel %vm96, %v2501, 0.0
    %2512 = vadd.xlane.f32.xlu0 %v2511
    %v2513 = vpop.xlane.xlu0 %2512
    %v2514 = vmul.f32 %v2504, %v109
    %v2515 = vmul.f32 %v2507, %v109
    %v2516 = vmul.f32 %v2510, %v109
    %v2517 = vmul.f32 %v2513, %v109
    %v2518 = vadd.f32 %v2514, 1e-05
    %v2519 = vadd.f32 %v2515, 1e-05
    %v2520 = vadd.f32 %v2516, 1e-05
    %v2521 = vadd.f32 %v2517, 1e-05
    %v2522 = vrsqrt.pop %v2518
    %v2523 = vrsqrt.pop %v2519
    %v2524 = vrsqrt.pop %v2520
    %v2525 = vrsqrt.pop %v2521
    %v2526 = vmul.f32 %v2494, %v2522
    %v2527 = vmul.f32 %v2495, %v2523
    %v2528 = vmul.f32 %v2496, %v2524
    %v2529 = vmul.f32 %v2497, %v2525
    %v2530 = vlaneseq
    %v2531 = vshrl.u32 %v2530, 7
    %v2532 = vsub.s32 4, %v2531
    %v2533 = vrot.slane %v65, %v2532
    %v2534 = vmul.f32 %v2526, %v2533
    %v2535 = vmul.f32 %v2527, %v2533
    %v2536 = vmul.f32 %v2528, %v2533
    %v2537 = vmul.f32 %v2529, %v2533
    %2539 = vrot.lane.b32.xlu0 %v2533, 96
    %v2540 = vpop.permute.xlu0 %2539
    %v2542 = vadd.f32 %v2534, %v2540
    %v2543 = vadd.f32 %v2535, %v2540
    %v2544 = vadd.f32 %v2536, %v2540
    %v2545 = vadd.f32 %v2537, %v2540
    %v2546 = vpack.c.bf16 %v2543, %v2542
    %v2547 = vpack.c.bf16 %v2545, %v2544
    %v2548 = vlaneseq
    %v2549 = vshrl.u32 %v2548, 7
    %v2550 = vsub.s32 5, %v2549
    %v2551 = vrot.slane %v65, %v2550
    %v2556 = vunpack.c.l.b16 %v2454
    %v2557 = vunpack.c.l.b16 %v2455
    %v2558 = vunpack.c.l.b16 %v2456
    %v2559 = vunpack.c.l.b16 %v2457
    %v2560 = vpack.c.b16 %v2557, %v2556
    %v2561 = vpack.c.b16 %v2559, %v2558
    %v2565 = vsel %vm96, %v2546, 0
    %v2568 = vsel %vm96, %v2547, 0
    %2570 = vmatprep.subr.bf16.mxu0 0
    %2571 = vmatpush1.bf16.msra.mxu0 %v2560
    %2572 = vmatprep.subr.bf16.mxu0 0
    %2573 = vmatpush1.bf16.msra.mxu0 %v2561
    %2574 = vmatprep.subr.bf16.mxu0 0
    %2575 = vmatpush1.bf16.msra.mxu0 0
    %2576 = vmatprep.subr.bf16.mxu0 0
    %2577 = vmatpush1.bf16.msra.mxu0 0
    %2578 = vmatprep.subr.bf16.mxu0 0
    %2579 = vmatpush1.bf16.msra.mxu0 0
    %2580 = vmatprep.subr.bf16.mxu0 0
    %2581 = vmatpush1.bf16.msra.mxu0 0
    %2582 = vmatprep.subr.bf16.mxu0 0
    %2583 = vmatpush1.bf16.msra.mxu0 0
    %2584 = vmatprep.subr.bf16.mxu0 0
    %2585 = vmatpush1.bf16.msra.mxu0 0
    %2586 = vmatprep.subr.bf16.mxu0 0
    %2587 = vmatpush1.bf16.msra.mxu0 0
    %2588 = vmatprep.subr.bf16.mxu0 0
    %2589 = vmatpush1.bf16.msra.mxu0 0
    %2590 = vmatprep.subr.bf16.mxu0 0
    %2591 = vmatpush1.bf16.msra.mxu0 0
    %2592 = vmatprep.subr.bf16.mxu0 0
    %2593 = vmatpush1.bf16.msra.mxu0 0
    %2594 = vmatprep.subr.bf16.mxu0 0
    %2595 = vmatpush1.bf16.msra.mxu0 0
    %2596 = vmatprep.subr.bf16.mxu0 0
    %2597 = vmatpush1.bf16.msra.mxu0 0
    %2598 = vmatprep.subr.bf16.mxu0 0
    %2599 = vmatpush1.bf16.msra.mxu0 0
    %2600 = vmatprep.subr.bf16.mxu0 0
    %2601 = vmatpush1.bf16.msra.mxu0 0
    %2602 = vmatprep.mubr.bf16.mxu0 0
    %2603 = vmatmul.mubr.bf16.gmra.mrb[0].mxu0 %v2565
    %v2604 = vpop.f32.mrb[0].mxu0
    %v2605 = vadd.f32 %v2551, %v2604
    %v2606 = vpop.f32.mrb[0].mxu0
    %v2607 = vpop.f32.mrb[0].mxu0
    %v2608 = vadd.f32 %v2551, %v2607
    %v2609 = vpop.f32.mrb[0].mxu0
    %2610 = vmatprep.mubr.bf16.mxu0 0
    %2611 = vmatmul.mubr.bf16.gmra.mrb[0].mxu0 %v2568
    %v2612 = vpop.f32.mrb[0].mxu0
    %v2613 = vadd.f32 %v2551, %v2612
    %v2614 = vpop.f32.mrb[0].mxu0
    %v2615 = vpop.f32.mrb[0].mxu0
    %v2616 = vadd.f32 %v2551, %v2615
    %v2617 = vpop.f32.mrb[0].mxu0
    %2618 = vdwg.mxu0
    %v2619 = vpack.c.bf16 %v2605, %v2605
    %v2620 = vpack.c.bf16 %v2608, %v2608
    %v2621 = vpack.c.bf16 %v2613, %v2613
    %v2622 = vpack.c.bf16 %v2616, %v2616
    %2624 = vrot.lane.b32.xlu0 %v2619, 96
    %v2625 = vpop.permute.xlu0 %2624
    %v2627 = vsel %vm246, %v2619, 0
    %v2630 = vsel %vm246, %v2625, 0
    %2632 = vmatprep.subr.bf16.mxu0 0
    %2633 = vmatpush1.bf16.xpose.msra.mxu0 %v2630
    %2634 = vmatprep.subr.bf16.mxu0 0
    %2635 = vmatpush1.bf16.xpose.msra.mxu0 0
    %2636 = vmatprep.subr.bf16.mxu0 0
    %2637 = vmatpush1.bf16.xpose.msra.mxu0 0
    %2638 = vmatprep.subr.bf16.mxu0 0
    %2639 = vmatpush1.bf16.xpose.msra.mxu0 0
    %2640 = vmatprep.subr.bf16.mxu0 0
    %2641 = vmatpush1.bf16.xpose.msra.mxu0 0
    %2642 = vmatprep.subr.bf16.mxu0 0
    %2643 = vmatpush1.bf16.xpose.msra.mxu0 0
    %2644 = vmatprep.subr.bf16.mxu0 0
    %2645 = vmatpush1.bf16.xpose.msra.mxu0 0
    %2646 = vmatprep.subr.bf16.mxu0 0
    %2647 = vmatpush1.bf16.xpose.msra.mxu0 0
    %2648 = vmatprep.subr.bf16.mxu0 0
    %2649 = vmatpush1.bf16.xpose.msra.mxu0 0
    %2650 = vmatprep.subr.bf16.mxu0 0
    %2651 = vmatpush1.bf16.xpose.msra.mxu0 0
    %2652 = vmatprep.subr.bf16.mxu0 0
    %2653 = vmatpush1.bf16.xpose.msra.mxu0 0
    %2654 = vmatprep.subr.bf16.mxu0 0
    %2655 = vmatpush1.bf16.xpose.msra.mxu0 0
    %2656 = vmatprep.subr.bf16.mxu0 0
    %2657 = vmatpush1.bf16.xpose.msra.mxu0 0
    %2658 = vmatprep.subr.bf16.mxu0 0
    %2659 = vmatpush1.bf16.xpose.msra.mxu0 0
    %2660 = vmatprep.subr.bf16.mxu0 0
    %2661 = vmatpush1.bf16.xpose.msra.mxu0 0
    %2662 = vmatprep.subr.bf16.mxu0 0
    %2663 = vmatpush1.bf16.xpose.msra.mxu0 0
    %2664 = vmatprep.mubr.bf16.mxu0 0
    %2665 = vmatmul.mubr.bf16.gmra.mrb[0].mxu0 %v2627
    %v2666 = vpop.f32.mrb[0].mxu0
    %v2667 = vadd.f32 0.0, %v2666
    %v2668 = vpop.f32.mrb[0].mxu0
    %v2669 = vpop.f32.mrb[0].mxu0
    %v2670 = vpop.f32.mrb[0].mxu0
    %2671 = vdwg.mxu0
    %2673 = vrot.lane.b32.xlu0 %v2620, 96
    %v2674 = vpop.permute.xlu0 %2673
    %v2676 = vsel %vm246, %v2620, 0
    %v2679 = vsel %vm246, %v2674, 0
    %2681 = vmatprep.subr.bf16.mxu0 0
    %2682 = vmatpush1.bf16.xpose.msra.mxu0 %v2679
    %2683 = vmatprep.subr.bf16.mxu0 0
    %2684 = vmatpush1.bf16.xpose.msra.mxu0 0
    %2685 = vmatprep.subr.bf16.mxu0 0
    %2686 = vmatpush1.bf16.xpose.msra.mxu0 0
    %2687 = vmatprep.subr.bf16.mxu0 0
    %2688 = vmatpush1.bf16.xpose.msra.mxu0 0
    %2689 = vmatprep.subr.bf16.mxu0 0
    %2690 = vmatpush1.bf16.xpose.msra.mxu0 0
    %2691 = vmatprep.subr.bf16.mxu0 0
    %2692 = vmatpush1.bf16.xpose.msra.mxu0 0
    %2693 = vmatprep.subr.bf16.mxu0 0
    %2694 = vmatpush1.bf16.xpose.msra.mxu0 0
    %2695 = vmatprep.subr.bf16.mxu0 0
    %2696 = vmatpush1.bf16.xpose.msra.mxu0 0
    %2697 = vmatprep.subr.bf16.mxu0 0
    %2698 = vmatpush1.bf16.xpose.msra.mxu0 0
    %2699 = vmatprep.subr.bf16.mxu0 0
    %2700 = vmatpush1.bf16.xpose.msra.mxu0 0
    %2701 = vmatprep.subr.bf16.mxu0 0
    %2702 = vmatpush1.bf16.xpose.msra.mxu0 0
    %2703 = vmatprep.subr.bf16.mxu0 0
    %2704 = vmatpush1.bf16.xpose.msra.mxu0 0
    %2705 = vmatprep.subr.bf16.mxu0 0
    %2706 = vmatpush1.bf16.xpose.msra.mxu0 0
    %2707 = vmatprep.subr.bf16.mxu0 0
    %2708 = vmatpush1.bf16.xpose.msra.mxu0 0
    %2709 = vmatprep.subr.bf16.mxu0 0
    %2710 = vmatpush1.bf16.xpose.msra.mxu0 0
    %2711 = vmatprep.subr.bf16.mxu0 0
    %2712 = vmatpush1.bf16.xpose.msra.mxu0 0
    %2713 = vmatprep.mubr.bf16.mxu0 0
    %2714 = vmatmul.mubr.bf16.gmra.mrb[0].mxu0 %v2676
    %v2715 = vpop.f32.mrb[0].mxu0
    %v2716 = vadd.f32 0.0, %v2715
    %v2717 = vpop.f32.mrb[0].mxu0
    %v2718 = vpop.f32.mrb[0].mxu0
    %v2719 = vpop.f32.mrb[0].mxu0
    %2720 = vdwg.mxu0
    %2722 = vrot.lane.b32.xlu0 %v2621, 96
    %v2723 = vpop.permute.xlu0 %2722
    %v2725 = vsel %vm246, %v2621, 0
    %v2728 = vsel %vm246, %v2723, 0
    %2730 = vmatprep.subr.bf16.mxu0 0
    %2731 = vmatpush1.bf16.xpose.msra.mxu0 %v2728
    %2732 = vmatprep.subr.bf16.mxu0 0
    %2733 = vmatpush1.bf16.xpose.msra.mxu0 0
    %2734 = vmatprep.subr.bf16.mxu0 0
    %2735 = vmatpush1.bf16.xpose.msra.mxu0 0
    %2736 = vmatprep.subr.bf16.mxu0 0
    %2737 = vmatpush1.bf16.xpose.msra.mxu0 0
    %2738 = vmatprep.subr.bf16.mxu0 0
    %2739 = vmatpush1.bf16.xpose.msra.mxu0 0
    %2740 = vmatprep.subr.bf16.mxu0 0
    %2741 = vmatpush1.bf16.xpose.msra.mxu0 0
    %2742 = vmatprep.subr.bf16.mxu0 0
    %2743 = vmatpush1.bf16.xpose.msra.mxu0 0
    %2744 = vmatprep.subr.bf16.mxu0 0
    %2745 = vmatpush1.bf16.xpose.msra.mxu0 0
    %2746 = vmatprep.subr.bf16.mxu0 0
    %2747 = vmatpush1.bf16.xpose.msra.mxu0 0
    %2748 = vmatprep.subr.bf16.mxu0 0
    %2749 = vmatpush1.bf16.xpose.msra.mxu0 0
    %2750 = vmatprep.subr.bf16.mxu0 0
    %2751 = vmatpush1.bf16.xpose.msra.mxu0 0
    %2752 = vmatprep.subr.bf16.mxu0 0
    %2753 = vmatpush1.bf16.xpose.msra.mxu0 0
    %2754 = vmatprep.subr.bf16.mxu0 0
    %2755 = vmatpush1.bf16.xpose.msra.mxu0 0
    %2756 = vmatprep.subr.bf16.mxu0 0
    %2757 = vmatpush1.bf16.xpose.msra.mxu0 0
    %2758 = vmatprep.subr.bf16.mxu0 0
    %2759 = vmatpush1.bf16.xpose.msra.mxu0 0
    %2760 = vmatprep.subr.bf16.mxu0 0
    %2761 = vmatpush1.bf16.xpose.msra.mxu0 0
    %2762 = vmatprep.mubr.bf16.mxu0 0
    %2763 = vmatmul.mubr.bf16.gmra.mrb[0].mxu0 %v2725
    %v2764 = vpop.f32.mrb[0].mxu0
    %v2765 = vadd.f32 0.0, %v2764
    %v2766 = vpop.f32.mrb[0].mxu0
    %v2767 = vpop.f32.mrb[0].mxu0
    %v2768 = vpop.f32.mrb[0].mxu0
    %2769 = vdwg.mxu0
    %2771 = vrot.lane.b32.xlu0 %v2622, 96
    %v2772 = vpop.permute.xlu0 %2771
    %v2774 = vsel %vm246, %v2622, 0
    %v2777 = vsel %vm246, %v2772, 0
    %2779 = vmatprep.subr.bf16.mxu0 0
    %2780 = vmatpush1.bf16.xpose.msra.mxu0 %v2777
    %2781 = vmatprep.subr.bf16.mxu0 0
    %2782 = vmatpush1.bf16.xpose.msra.mxu0 0
    %2783 = vmatprep.subr.bf16.mxu0 0
    %2784 = vmatpush1.bf16.xpose.msra.mxu0 0
    %2785 = vmatprep.subr.bf16.mxu0 0
    %2786 = vmatpush1.bf16.xpose.msra.mxu0 0
    %2787 = vmatprep.subr.bf16.mxu0 0
    %2788 = vmatpush1.bf16.xpose.msra.mxu0 0
    %2789 = vmatprep.subr.bf16.mxu0 0
    %2790 = vmatpush1.bf16.xpose.msra.mxu0 0
    %2791 = vmatprep.subr.bf16.mxu0 0
    %2792 = vmatpush1.bf16.xpose.msra.mxu0 0
    %2793 = vmatprep.subr.bf16.mxu0 0
    %2794 = vmatpush1.bf16.xpose.msra.mxu0 0
    %2795 = vmatprep.subr.bf16.mxu0 0
    %2796 = vmatpush1.bf16.xpose.msra.mxu0 0
    %2797 = vmatprep.subr.bf16.mxu0 0
    %2798 = vmatpush1.bf16.xpose.msra.mxu0 0
    %2799 = vmatprep.subr.bf16.mxu0 0
    %2800 = vmatpush1.bf16.xpose.msra.mxu0 0
    %2801 = vmatprep.subr.bf16.mxu0 0
    %2802 = vmatpush1.bf16.xpose.msra.mxu0 0
    %2803 = vmatprep.subr.bf16.mxu0 0
    %2804 = vmatpush1.bf16.xpose.msra.mxu0 0
    %2805 = vmatprep.subr.bf16.mxu0 0
    %2806 = vmatpush1.bf16.xpose.msra.mxu0 0
    %2807 = vmatprep.subr.bf16.mxu0 0
    %2808 = vmatpush1.bf16.xpose.msra.mxu0 0
    %2809 = vmatprep.subr.bf16.mxu0 0
    %2810 = vmatpush1.bf16.xpose.msra.mxu0 0
    %2811 = vmatprep.mubr.bf16.mxu0 0
    %2812 = vmatmul.mubr.bf16.gmra.mrb[0].mxu0 %v2774
    %v2813 = vpop.f32.mrb[0].mxu0
    %v2814 = vadd.f32 0.0, %v2813
    %v2815 = vpop.f32.mrb[0].mxu0
    %v2816 = vpop.f32.mrb[0].mxu0
    %v2817 = vpop.f32.mrb[0].mxu0
    %2818 = vdwg.mxu0
    %v2819 = vmul.f32 %v2667, 0.35355338
    %v2820 = vmul.f32 %v2716, 0.35355338
    %v2821 = vmul.f32 %v2765, 0.35355338
    %v2822 = vmul.f32 %v2814, 0.35355338
    %v2823 = vsel %vm445, %v2819, -1e+30
    %v2824 = vsel %vm445, %v2820, -1e+30
    %v2825 = vsel %vm445, %v2821, -1e+30
    %v2826 = vsel %vm445, %v2822, -1e+30
    %v2827 = vsel %vm246, %v2823, -inf
    %2828 = vmax.xlane.f32.xlu0 %v2827
    %v2829 = vpop.xlane.xlu0 %2828
    %v2830 = vsel %vm246, %v2824, -inf
    %2831 = vmax.xlane.f32.xlu0 %v2830
    %v2832 = vpop.xlane.xlu0 %2831
    %v2833 = vsel %vm246, %v2825, -inf
    %2834 = vmax.xlane.f32.xlu0 %v2833
    %v2835 = vpop.xlane.xlu0 %2834
    %v2836 = vsel %vm246, %v2826, -inf
    %2837 = vmax.xlane.f32.xlu0 %v2836
    %v2838 = vpop.xlane.xlu0 %2837
    %v2839 = vsub.f32 %v2823, %v2829
    %v2840 = vsub.f32 %v2824, %v2832
    %v2841 = vsub.f32 %v2825, %v2835
    %v2842 = vsub.f32 %v2826, %v2838
    %v2843 = vmul.f32 %v2839, 1.442695
    %v2844 = vpow.pop %v2843
    %v2845 = vmul.f32 %v2840, 1.442695
    %v2846 = vpow.pop %v2845
    %v2847 = vmul.f32 %v2841, 1.442695
    %v2848 = vpow.pop %v2847
    %v2849 = vmul.f32 %v2842, 1.442695
    %v2850 = vpow.pop %v2849
    %v2851 = vsel %vm246, %v2844, 0.0
    %2852 = vadd.xlane.f32.xlu0 %v2851
    %v2853 = vpop.xlane.xlu0 %2852
    %v2854 = vsel %vm246, %v2846, 0.0
    %2855 = vadd.xlane.f32.xlu0 %v2854
    %v2856 = vpop.xlane.xlu0 %2855
    %v2857 = vsel %vm246, %v2848, 0.0
    %2858 = vadd.xlane.f32.xlu0 %v2857
    %v2859 = vpop.xlane.xlu0 %2858
    %v2860 = vsel %vm246, %v2850, 0.0
    %2861 = vadd.xlane.f32.xlu0 %v2860
    %v2862 = vpop.xlane.xlu0 %2861
    %v2863 = vrcp.pop %v2853
    %v2864 = vrcp.pop %v2856
    %v2865 = vrcp.pop %v2859
    %v2866 = vrcp.pop %v2862
    %v2867 = vmul.f32 %v2844, %v2863
    %v2868 = vmul.f32 %v2846, %v2864
    %v2869 = vmul.f32 %v2848, %v2865
    %v2870 = vmul.f32 %v2850, %v2866
    %v2871 = vpack.c.bf16 %v2867, %v2867
    %v2872 = vpack.c.bf16 %v2868, %v2868
    %v2873 = vpack.c.bf16 %v2869, %v2869
    %v2874 = vpack.c.bf16 %v2870, %v2870
    %2875 = vrot.lane.b32.xlu0 %v2619, 64
    %v2876 = vpop.permute.xlu0 %2875
    %v2878 = vsel %vm246, %v2871, 0
    %v2881 = vsel %vm503, %v2876, 0
    %2883 = vmatprep.subr.bf16.mxu0 0
    %2884 = vmatpush1.bf16.msra.mxu0 %v2881
    %2885 = vmatprep.subr.bf16.mxu0 0
    %2886 = vmatpush1.bf16.msra.mxu0 0
    %2887 = vmatprep.subr.bf16.mxu0 0
    %2888 = vmatpush1.bf16.msra.mxu0 0
    %2889 = vmatprep.subr.bf16.mxu0 0
    %2890 = vmatpush1.bf16.msra.mxu0 0
    %2891 = vmatprep.subr.bf16.mxu0 0
    %2892 = vmatpush1.bf16.msra.mxu0 0
    %2893 = vmatprep.subr.bf16.mxu0 0
    %2894 = vmatpush1.bf16.msra.mxu0 0
    %2895 = vmatprep.subr.bf16.mxu0 0
    %2896 = vmatpush1.bf16.msra.mxu0 0
    %2897 = vmatprep.subr.bf16.mxu0 0
    %2898 = vmatpush1.bf16.msra.mxu0 0
    %2899 = vmatprep.subr.bf16.mxu0 0
    %2900 = vmatpush1.bf16.msra.mxu0 0
    %2901 = vmatprep.subr.bf16.mxu0 0
    %2902 = vmatpush1.bf16.msra.mxu0 0
    %2903 = vmatprep.subr.bf16.mxu0 0
    %2904 = vmatpush1.bf16.msra.mxu0 0
    %2905 = vmatprep.subr.bf16.mxu0 0
    %2906 = vmatpush1.bf16.msra.mxu0 0
    %2907 = vmatprep.subr.bf16.mxu0 0
    %2908 = vmatpush1.bf16.msra.mxu0 0
    %2909 = vmatprep.subr.bf16.mxu0 0
    %2910 = vmatpush1.bf16.msra.mxu0 0
    %2911 = vmatprep.subr.bf16.mxu0 0
    %2912 = vmatpush1.bf16.msra.mxu0 0
    %2913 = vmatprep.subr.bf16.mxu0 0
    %2914 = vmatpush1.bf16.msra.mxu0 0
    %2915 = vmatprep.mubr.bf16.mxu0 0
    %2916 = vmatmul.mubr.bf16.gmra.mrb[0].mxu0 %v2878
    %v2917 = vpop.f32.mrb[0].mxu0
    %v2918 = vadd.f32 0.0, %v2917
    %v2919 = vpop.f32.mrb[0].mxu0
    %v2920 = vpop.f32.mrb[0].mxu0
    %v2921 = vpop.f32.mrb[0].mxu0
    %2922 = vdwg.mxu0
    %2923 = vrot.lane.b32.xlu0 %v2620, 64
    %v2924 = vpop.permute.xlu0 %2923
    %v2926 = vsel %vm246, %v2872, 0
    %v2929 = vsel %vm503, %v2924, 0
    %2931 = vmatprep.subr.bf16.mxu0 0
    %2932 = vmatpush1.bf16.msra.mxu0 %v2929
    %2933 = vmatprep.subr.bf16.mxu0 0
    %2934 = vmatpush1.bf16.msra.mxu0 0
    %2935 = vmatprep.subr.bf16.mxu0 0
    %2936 = vmatpush1.bf16.msra.mxu0 0
    %2937 = vmatprep.subr.bf16.mxu0 0
    %2938 = vmatpush1.bf16.msra.mxu0 0
    %2939 = vmatprep.subr.bf16.mxu0 0
    %2940 = vmatpush1.bf16.msra.mxu0 0
    %2941 = vmatprep.subr.bf16.mxu0 0
    %2942 = vmatpush1.bf16.msra.mxu0 0
    %2943 = vmatprep.subr.bf16.mxu0 0
    %2944 = vmatpush1.bf16.msra.mxu0 0
    %2945 = vmatprep.subr.bf16.mxu0 0
    %2946 = vmatpush1.bf16.msra.mxu0 0
    %2947 = vmatprep.subr.bf16.mxu0 0
    %2948 = vmatpush1.bf16.msra.mxu0 0
    %2949 = vmatprep.subr.bf16.mxu0 0
    %2950 = vmatpush1.bf16.msra.mxu0 0
    %2951 = vmatprep.subr.bf16.mxu0 0
    %2952 = vmatpush1.bf16.msra.mxu0 0
    %2953 = vmatprep.subr.bf16.mxu0 0
    %2954 = vmatpush1.bf16.msra.mxu0 0
    %2955 = vmatprep.subr.bf16.mxu0 0
    %2956 = vmatpush1.bf16.msra.mxu0 0
    %2957 = vmatprep.subr.bf16.mxu0 0
    %2958 = vmatpush1.bf16.msra.mxu0 0
    %2959 = vmatprep.subr.bf16.mxu0 0
    %2960 = vmatpush1.bf16.msra.mxu0 0
    %2961 = vmatprep.subr.bf16.mxu0 0
    %2962 = vmatpush1.bf16.msra.mxu0 0
    %2963 = vmatprep.mubr.bf16.mxu0 0
    %2964 = vmatmul.mubr.bf16.gmra.mrb[0].mxu0 %v2926
    %v2965 = vpop.f32.mrb[0].mxu0
    %v2966 = vadd.f32 0.0, %v2965
    %v2967 = vpop.f32.mrb[0].mxu0
    %v2968 = vpop.f32.mrb[0].mxu0
    %v2969 = vpop.f32.mrb[0].mxu0
    %2970 = vdwg.mxu0
    %2971 = vrot.lane.b32.xlu0 %v2621, 64
    %v2972 = vpop.permute.xlu0 %2971
    %v2974 = vsel %vm246, %v2873, 0
    %v2977 = vsel %vm503, %v2972, 0
    %2979 = vmatprep.subr.bf16.mxu0 0
    %2980 = vmatpush1.bf16.msra.mxu0 %v2977
    %2981 = vmatprep.subr.bf16.mxu0 0
    %2982 = vmatpush1.bf16.msra.mxu0 0
    %2983 = vmatprep.subr.bf16.mxu0 0
    %2984 = vmatpush1.bf16.msra.mxu0 0
    %2985 = vmatprep.subr.bf16.mxu0 0
    %2986 = vmatpush1.bf16.msra.mxu0 0
    %2987 = vmatprep.subr.bf16.mxu0 0
    %2988 = vmatpush1.bf16.msra.mxu0 0
    %2989 = vmatprep.subr.bf16.mxu0 0
    %2990 = vmatpush1.bf16.msra.mxu0 0
    %2991 = vmatprep.subr.bf16.mxu0 0
    %2992 = vmatpush1.bf16.msra.mxu0 0
    %2993 = vmatprep.subr.bf16.mxu0 0
    %2994 = vmatpush1.bf16.msra.mxu0 0
    %2995 = vmatprep.subr.bf16.mxu0 0
    %2996 = vmatpush1.bf16.msra.mxu0 0
    %2997 = vmatprep.subr.bf16.mxu0 0
    %2998 = vmatpush1.bf16.msra.mxu0 0
    %2999 = vmatprep.subr.bf16.mxu0 0
    %3000 = vmatpush1.bf16.msra.mxu0 0
    %3001 = vmatprep.subr.bf16.mxu0 0
    %3002 = vmatpush1.bf16.msra.mxu0 0
    %3003 = vmatprep.subr.bf16.mxu0 0
    %3004 = vmatpush1.bf16.msra.mxu0 0
    %3005 = vmatprep.subr.bf16.mxu0 0
    %3006 = vmatpush1.bf16.msra.mxu0 0
    %3007 = vmatprep.subr.bf16.mxu0 0
    %3008 = vmatpush1.bf16.msra.mxu0 0
    %3009 = vmatprep.subr.bf16.mxu0 0
    %3010 = vmatpush1.bf16.msra.mxu0 0
    %3011 = vmatprep.mubr.bf16.mxu0 0
    %3012 = vmatmul.mubr.bf16.gmra.mrb[0].mxu0 %v2974
    %v3013 = vpop.f32.mrb[0].mxu0
    %v3014 = vadd.f32 0.0, %v3013
    %v3015 = vpop.f32.mrb[0].mxu0
    %v3016 = vpop.f32.mrb[0].mxu0
    %v3017 = vpop.f32.mrb[0].mxu0
    %3018 = vdwg.mxu0
    %3019 = vrot.lane.b32.xlu0 %v2622, 64
    %v3020 = vpop.permute.xlu0 %3019
    %v3022 = vsel %vm246, %v2874, 0
    %v3025 = vsel %vm503, %v3020, 0
    %3027 = vmatprep.subr.bf16.mxu0 0
    %3028 = vmatpush1.bf16.msra.mxu0 %v3025
    %3029 = vmatprep.subr.bf16.mxu0 0
    %3030 = vmatpush1.bf16.msra.mxu0 0
    %3031 = vmatprep.subr.bf16.mxu0 0
    %3032 = vmatpush1.bf16.msra.mxu0 0
    %3033 = vmatprep.subr.bf16.mxu0 0
    %3034 = vmatpush1.bf16.msra.mxu0 0
    %3035 = vmatprep.subr.bf16.mxu0 0
    %3036 = vmatpush1.bf16.msra.mxu0 0
    %3037 = vmatprep.subr.bf16.mxu0 0
    %3038 = vmatpush1.bf16.msra.mxu0 0
    %3039 = vmatprep.subr.bf16.mxu0 0
    %3040 = vmatpush1.bf16.msra.mxu0 0
    %3041 = vmatprep.subr.bf16.mxu0 0
    %3042 = vmatpush1.bf16.msra.mxu0 0
    %3043 = vmatprep.subr.bf16.mxu0 0
    %3044 = vmatpush1.bf16.msra.mxu0 0
    %3045 = vmatprep.subr.bf16.mxu0 0
    %3046 = vmatpush1.bf16.msra.mxu0 0
    %3047 = vmatprep.subr.bf16.mxu0 0
    %3048 = vmatpush1.bf16.msra.mxu0 0
    %3049 = vmatprep.subr.bf16.mxu0 0
    %3050 = vmatpush1.bf16.msra.mxu0 0
    %3051 = vmatprep.subr.bf16.mxu0 0
    %3052 = vmatpush1.bf16.msra.mxu0 0
    %3053 = vmatprep.subr.bf16.mxu0 0
    %3054 = vmatpush1.bf16.msra.mxu0 0
    %3055 = vmatprep.subr.bf16.mxu0 0
    %3056 = vmatpush1.bf16.msra.mxu0 0
    %3057 = vmatprep.subr.bf16.mxu0 0
    %3058 = vmatpush1.bf16.msra.mxu0 0
    %3059 = vmatprep.mubr.bf16.mxu0 0
    %3060 = vmatmul.mubr.bf16.gmra.mrb[0].mxu0 %v3022
    %v3061 = vpop.f32.mrb[0].mxu0
    %v3062 = vadd.f32 0.0, %v3061
    %v3063 = vpop.f32.mrb[0].mxu0
    %v3064 = vpop.f32.mrb[0].mxu0
    %v3065 = vpop.f32.mrb[0].mxu0
    %3066 = vdwg.mxu0
    %3067 = vrot.lane.b32.xlu0 %v2619, 120
    %v3068 = vpop.permute.xlu0 %3067
    %3069 = vrot.lane.b32.xlu0 %v2619, 88
    %v3070 = vpop.permute.xlu0 %3069
    %v3072 = vsel %vm246, %v3068, 0
    %v3075 = vsel %vm246, %v3070, 0
    %3077 = vmatprep.subr.bf16.mxu0 0
    %3078 = vmatpush1.bf16.xpose.msra.mxu0 %v3075
    %3079 = vmatprep.subr.bf16.mxu0 0
    %3080 = vmatpush1.bf16.xpose.msra.mxu0 0
    %3081 = vmatprep.subr.bf16.mxu0 0
    %3082 = vmatpush1.bf16.xpose.msra.mxu0 0
    %3083 = vmatprep.subr.bf16.mxu0 0
    %3084 = vmatpush1.bf16.xpose.msra.mxu0 0
    %3085 = vmatprep.subr.bf16.mxu0 0
    %3086 = vmatpush1.bf16.xpose.msra.mxu0 0
    %3087 = vmatprep.subr.bf16.mxu0 0
    %3088 = vmatpush1.bf16.xpose.msra.mxu0 0
    %3089 = vmatprep.subr.bf16.mxu0 0
    %3090 = vmatpush1.bf16.xpose.msra.mxu0 0
    %3091 = vmatprep.subr.bf16.mxu0 0
    %3092 = vmatpush1.bf16.xpose.msra.mxu0 0
    %3093 = vmatprep.subr.bf16.mxu0 0
    %3094 = vmatpush1.bf16.xpose.msra.mxu0 0
    %3095 = vmatprep.subr.bf16.mxu0 0
    %3096 = vmatpush1.bf16.xpose.msra.mxu0 0
    %3097 = vmatprep.subr.bf16.mxu0 0
    %3098 = vmatpush1.bf16.xpose.msra.mxu0 0
    %3099 = vmatprep.subr.bf16.mxu0 0
    %3100 = vmatpush1.bf16.xpose.msra.mxu0 0
    %3101 = vmatprep.subr.bf16.mxu0 0
    %3102 = vmatpush1.bf16.xpose.msra.mxu0 0
    %3103 = vmatprep.subr.bf16.mxu0 0
    %3104 = vmatpush1.bf16.xpose.msra.mxu0 0
    %3105 = vmatprep.subr.bf16.mxu0 0
    %3106 = vmatpush1.bf16.xpose.msra.mxu0 0
    %3107 = vmatprep.subr.bf16.mxu0 0
    %3108 = vmatpush1.bf16.xpose.msra.mxu0 0
    %3109 = vmatprep.mubr.bf16.mxu0 0
    %3110 = vmatmul.mubr.bf16.gmra.mrb[0].mxu0 %v3072
    %v3111 = vpop.f32.mrb[0].mxu0
    %v3112 = vadd.f32 0.0, %v3111
    %v3113 = vpop.f32.mrb[0].mxu0
    %v3114 = vpop.f32.mrb[0].mxu0
    %v3115 = vpop.f32.mrb[0].mxu0
    %3116 = vdwg.mxu0
    %3117 = vrot.lane.b32.xlu0 %v2620, 120
    %v3118 = vpop.permute.xlu0 %3117
    %3119 = vrot.lane.b32.xlu0 %v2620, 88
    %v3120 = vpop.permute.xlu0 %3119
    %v3122 = vsel %vm246, %v3118, 0
    %v3125 = vsel %vm246, %v3120, 0
    %3127 = vmatprep.subr.bf16.mxu0 0
    %3128 = vmatpush1.bf16.xpose.msra.mxu0 %v3125
    %3129 = vmatprep.subr.bf16.mxu0 0
    %3130 = vmatpush1.bf16.xpose.msra.mxu0 0
    %3131 = vmatprep.subr.bf16.mxu0 0
    %3132 = vmatpush1.bf16.xpose.msra.mxu0 0
    %3133 = vmatprep.subr.bf16.mxu0 0
    %3134 = vmatpush1.bf16.xpose.msra.mxu0 0
    %3135 = vmatprep.subr.bf16.mxu0 0
    %3136 = vmatpush1.bf16.xpose.msra.mxu0 0
    %3137 = vmatprep.subr.bf16.mxu0 0
    %3138 = vmatpush1.bf16.xpose.msra.mxu0 0
    %3139 = vmatprep.subr.bf16.mxu0 0
    %3140 = vmatpush1.bf16.xpose.msra.mxu0 0
    %3141 = vmatprep.subr.bf16.mxu0 0
    %3142 = vmatpush1.bf16.xpose.msra.mxu0 0
    %3143 = vmatprep.subr.bf16.mxu0 0
    %3144 = vmatpush1.bf16.xpose.msra.mxu0 0
    %3145 = vmatprep.subr.bf16.mxu0 0
    %3146 = vmatpush1.bf16.xpose.msra.mxu0 0
    %3147 = vmatprep.subr.bf16.mxu0 0
    %3148 = vmatpush1.bf16.xpose.msra.mxu0 0
    %3149 = vmatprep.subr.bf16.mxu0 0
    %3150 = vmatpush1.bf16.xpose.msra.mxu0 0
    %3151 = vmatprep.subr.bf16.mxu0 0
    %3152 = vmatpush1.bf16.xpose.msra.mxu0 0
    %3153 = vmatprep.subr.bf16.mxu0 0
    %3154 = vmatpush1.bf16.xpose.msra.mxu0 0
    %3155 = vmatprep.subr.bf16.mxu0 0
    %3156 = vmatpush1.bf16.xpose.msra.mxu0 0
    %3157 = vmatprep.subr.bf16.mxu0 0
    %3158 = vmatpush1.bf16.xpose.msra.mxu0 0
    %3159 = vmatprep.mubr.bf16.mxu0 0
    %3160 = vmatmul.mubr.bf16.gmra.mrb[0].mxu0 %v3122
    %v3161 = vpop.f32.mrb[0].mxu0
    %v3162 = vadd.f32 0.0, %v3161
    %v3163 = vpop.f32.mrb[0].mxu0
    %v3164 = vpop.f32.mrb[0].mxu0
    %v3165 = vpop.f32.mrb[0].mxu0
    %3166 = vdwg.mxu0
    %3167 = vrot.lane.b32.xlu0 %v2621, 120
    %v3168 = vpop.permute.xlu0 %3167
    %3169 = vrot.lane.b32.xlu0 %v2621, 88
    %v3170 = vpop.permute.xlu0 %3169
    %v3172 = vsel %vm246, %v3168, 0
    %v3175 = vsel %vm246, %v3170, 0
    %3177 = vmatprep.subr.bf16.mxu0 0
    %3178 = vmatpush1.bf16.xpose.msra.mxu0 %v3175
    %3179 = vmatprep.subr.bf16.mxu0 0
    %3180 = vmatpush1.bf16.xpose.msra.mxu0 0
    %3181 = vmatprep.subr.bf16.mxu0 0
    %3182 = vmatpush1.bf16.xpose.msra.mxu0 0
    %3183 = vmatprep.subr.bf16.mxu0 0
    %3184 = vmatpush1.bf16.xpose.msra.mxu0 0
    %3185 = vmatprep.subr.bf16.mxu0 0
    %3186 = vmatpush1.bf16.xpose.msra.mxu0 0
    %3187 = vmatprep.subr.bf16.mxu0 0
    %3188 = vmatpush1.bf16.xpose.msra.mxu0 0
    %3189 = vmatprep.subr.bf16.mxu0 0
    %3190 = vmatpush1.bf16.xpose.msra.mxu0 0
    %3191 = vmatprep.subr.bf16.mxu0 0
    %3192 = vmatpush1.bf16.xpose.msra.mxu0 0
    %3193 = vmatprep.subr.bf16.mxu0 0
    %3194 = vmatpush1.bf16.xpose.msra.mxu0 0
    %3195 = vmatprep.subr.bf16.mxu0 0
    %3196 = vmatpush1.bf16.xpose.msra.mxu0 0
    %3197 = vmatprep.subr.bf16.mxu0 0
    %3198 = vmatpush1.bf16.xpose.msra.mxu0 0
    %3199 = vmatprep.subr.bf16.mxu0 0
    %3200 = vmatpush1.bf16.xpose.msra.mxu0 0
    %3201 = vmatprep.subr.bf16.mxu0 0
    %3202 = vmatpush1.bf16.xpose.msra.mxu0 0
    %3203 = vmatprep.subr.bf16.mxu0 0
    %3204 = vmatpush1.bf16.xpose.msra.mxu0 0
    %3205 = vmatprep.subr.bf16.mxu0 0
    %3206 = vmatpush1.bf16.xpose.msra.mxu0 0
    %3207 = vmatprep.subr.bf16.mxu0 0
    %3208 = vmatpush1.bf16.xpose.msra.mxu0 0
    %3209 = vmatprep.mubr.bf16.mxu0 0
    %3210 = vmatmul.mubr.bf16.gmra.mrb[0].mxu0 %v3172
    %v3211 = vpop.f32.mrb[0].mxu0
    %v3212 = vadd.f32 0.0, %v3211
    %v3213 = vpop.f32.mrb[0].mxu0
    %v3214 = vpop.f32.mrb[0].mxu0
    %v3215 = vpop.f32.mrb[0].mxu0
    %3216 = vdwg.mxu0
    %3217 = vrot.lane.b32.xlu0 %v2622, 120
    %v3218 = vpop.permute.xlu0 %3217
    %3219 = vrot.lane.b32.xlu0 %v2622, 88
    %v3220 = vpop.permute.xlu0 %3219
    %v3222 = vsel %vm246, %v3218, 0
    %v3225 = vsel %vm246, %v3220, 0
    %3227 = vmatprep.subr.bf16.mxu0 0
    %3228 = vmatpush1.bf16.xpose.msra.mxu0 %v3225
    %3229 = vmatprep.subr.bf16.mxu0 0
    %3230 = vmatpush1.bf16.xpose.msra.mxu0 0
    %3231 = vmatprep.subr.bf16.mxu0 0
    %3232 = vmatpush1.bf16.xpose.msra.mxu0 0
    %3233 = vmatprep.subr.bf16.mxu0 0
    %3234 = vmatpush1.bf16.xpose.msra.mxu0 0
    %3235 = vmatprep.subr.bf16.mxu0 0
    %3236 = vmatpush1.bf16.xpose.msra.mxu0 0
    %3237 = vmatprep.subr.bf16.mxu0 0
    %3238 = vmatpush1.bf16.xpose.msra.mxu0 0
    %3239 = vmatprep.subr.bf16.mxu0 0
    %3240 = vmatpush1.bf16.xpose.msra.mxu0 0
    %3241 = vmatprep.subr.bf16.mxu0 0
    %3242 = vmatpush1.bf16.xpose.msra.mxu0 0
    %3243 = vmatprep.subr.bf16.mxu0 0
    %3244 = vmatpush1.bf16.xpose.msra.mxu0 0
    %3245 = vmatprep.subr.bf16.mxu0 0
    %3246 = vmatpush1.bf16.xpose.msra.mxu0 0
    %3247 = vmatprep.subr.bf16.mxu0 0
    %3248 = vmatpush1.bf16.xpose.msra.mxu0 0
    %3249 = vmatprep.subr.bf16.mxu0 0
    %3250 = vmatpush1.bf16.xpose.msra.mxu0 0
    %3251 = vmatprep.subr.bf16.mxu0 0
    %3252 = vmatpush1.bf16.xpose.msra.mxu0 0
    %3253 = vmatprep.subr.bf16.mxu0 0
    %3254 = vmatpush1.bf16.xpose.msra.mxu0 0
    %3255 = vmatprep.subr.bf16.mxu0 0
    %3256 = vmatpush1.bf16.xpose.msra.mxu0 0
    %3257 = vmatprep.subr.bf16.mxu0 0
    %3258 = vmatpush1.bf16.xpose.msra.mxu0 0
    %3259 = vmatprep.mubr.bf16.mxu0 0
    %3260 = vmatmul.mubr.bf16.gmra.mrb[0].mxu0 %v3222
    %v3261 = vpop.f32.mrb[0].mxu0
    %v3262 = vadd.f32 0.0, %v3261
    %v3263 = vpop.f32.mrb[0].mxu0
    %v3264 = vpop.f32.mrb[0].mxu0
    %v3265 = vpop.f32.mrb[0].mxu0
    %3266 = vdwg.mxu0
    %v3267 = vmul.f32 %v3112, 0.35355338
    %v3268 = vmul.f32 %v3162, 0.35355338
    %v3269 = vmul.f32 %v3212, 0.35355338
    %v3270 = vmul.f32 %v3262, 0.35355338
    %v3271 = vsel %vm445, %v3267, -1e+30
    %v3272 = vsel %vm445, %v3268, -1e+30
    %v3273 = vsel %vm445, %v3269, -1e+30
    %v3274 = vsel %vm445, %v3270, -1e+30
    %v3275 = vsel %vm246, %v3271, -inf
    %3276 = vmax.xlane.f32.xlu0 %v3275
    %v3277 = vpop.xlane.xlu0 %3276
    %v3278 = vsel %vm246, %v3272, -inf
    %3279 = vmax.xlane.f32.xlu0 %v3278
    %v3280 = vpop.xlane.xlu0 %3279
    %v3281 = vsel %vm246, %v3273, -inf
    %3282 = vmax.xlane.f32.xlu0 %v3281
    %v3283 = vpop.xlane.xlu0 %3282
    %v3284 = vsel %vm246, %v3274, -inf
    %3285 = vmax.xlane.f32.xlu0 %v3284
    %v3286 = vpop.xlane.xlu0 %3285
    %v3287 = vsub.f32 %v3271, %v3277
    %v3288 = vsub.f32 %v3272, %v3280
    %v3289 = vsub.f32 %v3273, %v3283
    %v3290 = vsub.f32 %v3274, %v3286
    %v3291 = vmul.f32 %v3287, 1.442695
    %v3292 = vpow.pop %v3291
    %v3293 = vmul.f32 %v3288, 1.442695
    %v3294 = vpow.pop %v3293
    %v3295 = vmul.f32 %v3289, 1.442695
    %v3296 = vpow.pop %v3295
    %v3297 = vmul.f32 %v3290, 1.442695
    %v3298 = vpow.pop %v3297
    %v3299 = vsel %vm246, %v3292, 0.0
    %3300 = vadd.xlane.f32.xlu0 %v3299
    %v3301 = vpop.xlane.xlu0 %3300
    %v3302 = vsel %vm246, %v3294, 0.0
    %3303 = vadd.xlane.f32.xlu0 %v3302
    %v3304 = vpop.xlane.xlu0 %3303
    %v3305 = vsel %vm246, %v3296, 0.0
    %3306 = vadd.xlane.f32.xlu0 %v3305
    %v3307 = vpop.xlane.xlu0 %3306
    %v3308 = vsel %vm246, %v3298, 0.0
    %3309 = vadd.xlane.f32.xlu0 %v3308
    %v3310 = vpop.xlane.xlu0 %3309
    %v3311 = vrcp.pop %v3301
    %v3312 = vrcp.pop %v3304
    %v3313 = vrcp.pop %v3307
    %v3314 = vrcp.pop %v3310
    %v3315 = vmul.f32 %v3292, %v3311
    %v3316 = vmul.f32 %v3294, %v3312
    %v3317 = vmul.f32 %v3296, %v3313
    %v3318 = vmul.f32 %v3298, %v3314
    %v3319 = vpack.c.bf16 %v3315, %v3315
    %v3320 = vpack.c.bf16 %v3316, %v3316
    %v3321 = vpack.c.bf16 %v3317, %v3317
    %v3322 = vpack.c.bf16 %v3318, %v3318
    %3323 = vrot.lane.b32.xlu0 %v2619, 56
    %v3324 = vpop.permute.xlu0 %3323
    %v3326 = vsel %vm246, %v3319, 0
    %v3329 = vsel %vm503, %v3324, 0
    %3331 = vmatprep.subr.bf16.mxu0 0
    %3332 = vmatpush1.bf16.msra.mxu0 %v3329
    %3333 = vmatprep.subr.bf16.mxu0 0
    %3334 = vmatpush1.bf16.msra.mxu0 0
    %3335 = vmatprep.subr.bf16.mxu0 0
    %3336 = vmatpush1.bf16.msra.mxu0 0
    %3337 = vmatprep.subr.bf16.mxu0 0
    %3338 = vmatpush1.bf16.msra.mxu0 0
    %3339 = vmatprep.subr.bf16.mxu0 0
    %3340 = vmatpush1.bf16.msra.mxu0 0
    %3341 = vmatprep.subr.bf16.mxu0 0
    %3342 = vmatpush1.bf16.msra.mxu0 0
    %3343 = vmatprep.subr.bf16.mxu0 0
    %3344 = vmatpush1.bf16.msra.mxu0 0
    %3345 = vmatprep.subr.bf16.mxu0 0
    %3346 = vmatpush1.bf16.msra.mxu0 0
    %3347 = vmatprep.subr.bf16.mxu0 0
    %3348 = vmatpush1.bf16.msra.mxu0 0
    %3349 = vmatprep.subr.bf16.mxu0 0
    %3350 = vmatpush1.bf16.msra.mxu0 0
    %3351 = vmatprep.subr.bf16.mxu0 0
    %3352 = vmatpush1.bf16.msra.mxu0 0
    %3353 = vmatprep.subr.bf16.mxu0 0
    %3354 = vmatpush1.bf16.msra.mxu0 0
    %3355 = vmatprep.subr.bf16.mxu0 0
    %3356 = vmatpush1.bf16.msra.mxu0 0
    %3357 = vmatprep.subr.bf16.mxu0 0
    %3358 = vmatpush1.bf16.msra.mxu0 0
    %3359 = vmatprep.subr.bf16.mxu0 0
    %3360 = vmatpush1.bf16.msra.mxu0 0
    %3361 = vmatprep.subr.bf16.mxu0 0
    %3362 = vmatpush1.bf16.msra.mxu0 0
    %3363 = vmatprep.mubr.bf16.mxu0 0
    %3364 = vmatmul.mubr.bf16.gmra.mrb[0].mxu0 %v3326
    %v3365 = vpop.f32.mrb[0].mxu0
    %v3366 = vadd.f32 0.0, %v3365
    %v3367 = vpop.f32.mrb[0].mxu0
    %v3368 = vpop.f32.mrb[0].mxu0
    %v3369 = vpop.f32.mrb[0].mxu0
    %3370 = vdwg.mxu0
    %3371 = vrot.lane.b32.xlu0 %v2620, 56
    %v3372 = vpop.permute.xlu0 %3371
    %v3374 = vsel %vm246, %v3320, 0
    %v3377 = vsel %vm503, %v3372, 0
    %3379 = vmatprep.subr.bf16.mxu0 0
    %3380 = vmatpush1.bf16.msra.mxu0 %v3377
    %3381 = vmatprep.subr.bf16.mxu0 0
    %3382 = vmatpush1.bf16.msra.mxu0 0
    %3383 = vmatprep.subr.bf16.mxu0 0
    %3384 = vmatpush1.bf16.msra.mxu0 0
    %3385 = vmatprep.subr.bf16.mxu0 0
    %3386 = vmatpush1.bf16.msra.mxu0 0
    %3387 = vmatprep.subr.bf16.mxu0 0
    %3388 = vmatpush1.bf16.msra.mxu0 0
    %3389 = vmatprep.subr.bf16.mxu0 0
    %3390 = vmatpush1.bf16.msra.mxu0 0
    %3391 = vmatprep.subr.bf16.mxu0 0
    %3392 = vmatpush1.bf16.msra.mxu0 0
    %3393 = vmatprep.subr.bf16.mxu0 0
    %3394 = vmatpush1.bf16.msra.mxu0 0
    %3395 = vmatprep.subr.bf16.mxu0 0
    %3396 = vmatpush1.bf16.msra.mxu0 0
    %3397 = vmatprep.subr.bf16.mxu0 0
    %3398 = vmatpush1.bf16.msra.mxu0 0
    %3399 = vmatprep.subr.bf16.mxu0 0
    %3400 = vmatpush1.bf16.msra.mxu0 0
    %3401 = vmatprep.subr.bf16.mxu0 0
    %3402 = vmatpush1.bf16.msra.mxu0 0
    %3403 = vmatprep.subr.bf16.mxu0 0
    %3404 = vmatpush1.bf16.msra.mxu0 0
    %3405 = vmatprep.subr.bf16.mxu0 0
    %3406 = vmatpush1.bf16.msra.mxu0 0
    %3407 = vmatprep.subr.bf16.mxu0 0
    %3408 = vmatpush1.bf16.msra.mxu0 0
    %3409 = vmatprep.subr.bf16.mxu0 0
    %3410 = vmatpush1.bf16.msra.mxu0 0
    %3411 = vmatprep.mubr.bf16.mxu0 0
    %3412 = vmatmul.mubr.bf16.gmra.mrb[0].mxu0 %v3374
    %v3413 = vpop.f32.mrb[0].mxu0
    %v3414 = vadd.f32 0.0, %v3413
    %v3415 = vpop.f32.mrb[0].mxu0
    %v3416 = vpop.f32.mrb[0].mxu0
    %v3417 = vpop.f32.mrb[0].mxu0
    %3418 = vdwg.mxu0
    %3419 = vrot.lane.b32.xlu0 %v2621, 56
    %v3420 = vpop.permute.xlu0 %3419
    %v3422 = vsel %vm246, %v3321, 0
    %v3425 = vsel %vm503, %v3420, 0
    %3427 = vmatprep.subr.bf16.mxu0 0
    %3428 = vmatpush1.bf16.msra.mxu0 %v3425
    %3429 = vmatprep.subr.bf16.mxu0 0
    %3430 = vmatpush1.bf16.msra.mxu0 0
    %3431 = vmatprep.subr.bf16.mxu0 0
    %3432 = vmatpush1.bf16.msra.mxu0 0
    %3433 = vmatprep.subr.bf16.mxu0 0
    %3434 = vmatpush1.bf16.msra.mxu0 0
    %3435 = vmatprep.subr.bf16.mxu0 0
    %3436 = vmatpush1.bf16.msra.mxu0 0
    %3437 = vmatprep.subr.bf16.mxu0 0
    %3438 = vmatpush1.bf16.msra.mxu0 0
    %3439 = vmatprep.subr.bf16.mxu0 0
    %3440 = vmatpush1.bf16.msra.mxu0 0
    %3441 = vmatprep.subr.bf16.mxu0 0
    %3442 = vmatpush1.bf16.msra.mxu0 0
    %3443 = vmatprep.subr.bf16.mxu0 0
    %3444 = vmatpush1.bf16.msra.mxu0 0
    %3445 = vmatprep.subr.bf16.mxu0 0
    %3446 = vmatpush1.bf16.msra.mxu0 0
    %3447 = vmatprep.subr.bf16.mxu0 0
    %3448 = vmatpush1.bf16.msra.mxu0 0
    %3449 = vmatprep.subr.bf16.mxu0 0
    %3450 = vmatpush1.bf16.msra.mxu0 0
    %3451 = vmatprep.subr.bf16.mxu0 0
    %3452 = vmatpush1.bf16.msra.mxu0 0
    %3453 = vmatprep.subr.bf16.mxu0 0
    %3454 = vmatpush1.bf16.msra.mxu0 0
    %3455 = vmatprep.subr.bf16.mxu0 0
    %3456 = vmatpush1.bf16.msra.mxu0 0
    %3457 = vmatprep.subr.bf16.mxu0 0
    %3458 = vmatpush1.bf16.msra.mxu0 0
    %3459 = vmatprep.mubr.bf16.mxu0 0
    %3460 = vmatmul.mubr.bf16.gmra.mrb[0].mxu0 %v3422
    %v3461 = vpop.f32.mrb[0].mxu0
    %v3462 = vadd.f32 0.0, %v3461
    %v3463 = vpop.f32.mrb[0].mxu0
    %v3464 = vpop.f32.mrb[0].mxu0
    %v3465 = vpop.f32.mrb[0].mxu0
    %3466 = vdwg.mxu0
    %3467 = vrot.lane.b32.xlu0 %v2622, 56
    %v3468 = vpop.permute.xlu0 %3467
    %v3470 = vsel %vm246, %v3322, 0
    %v3473 = vsel %vm503, %v3468, 0
    %3475 = vmatprep.subr.bf16.mxu0 0
    %3476 = vmatpush1.bf16.msra.mxu0 %v3473
    %3477 = vmatprep.subr.bf16.mxu0 0
    %3478 = vmatpush1.bf16.msra.mxu0 0
    %3479 = vmatprep.subr.bf16.mxu0 0
    %3480 = vmatpush1.bf16.msra.mxu0 0
    %3481 = vmatprep.subr.bf16.mxu0 0
    %3482 = vmatpush1.bf16.msra.mxu0 0
    %3483 = vmatprep.subr.bf16.mxu0 0
    %3484 = vmatpush1.bf16.msra.mxu0 0
    %3485 = vmatprep.subr.bf16.mxu0 0
    %3486 = vmatpush1.bf16.msra.mxu0 0
    %3487 = vmatprep.subr.bf16.mxu0 0
    %3488 = vmatpush1.bf16.msra.mxu0 0
    %3489 = vmatprep.subr.bf16.mxu0 0
    %3490 = vmatpush1.bf16.msra.mxu0 0
    %3491 = vmatprep.subr.bf16.mxu0 0
    %3492 = vmatpush1.bf16.msra.mxu0 0
    %3493 = vmatprep.subr.bf16.mxu0 0
    %3494 = vmatpush1.bf16.msra.mxu0 0
    %3495 = vmatprep.subr.bf16.mxu0 0
    %3496 = vmatpush1.bf16.msra.mxu0 0
    %3497 = vmatprep.subr.bf16.mxu0 0
    %3498 = vmatpush1.bf16.msra.mxu0 0
    %3499 = vmatprep.subr.bf16.mxu0 0
    %3500 = vmatpush1.bf16.msra.mxu0 0
    %3501 = vmatprep.subr.bf16.mxu0 0
    %3502 = vmatpush1.bf16.msra.mxu0 0
    %3503 = vmatprep.subr.bf16.mxu0 0
    %3504 = vmatpush1.bf16.msra.mxu0 0
    %3505 = vmatprep.subr.bf16.mxu0 0
    %3506 = vmatpush1.bf16.msra.mxu0 0
    %3507 = vmatprep.mubr.bf16.mxu0 0
    %3508 = vmatmul.mubr.bf16.gmra.mrb[0].mxu0 %v3470
    %v3509 = vpop.f32.mrb[0].mxu0
    %v3510 = vadd.f32 0.0, %v3509
    %v3511 = vpop.f32.mrb[0].mxu0
    %v3512 = vpop.f32.mrb[0].mxu0
    %v3513 = vpop.f32.mrb[0].mxu0
    %3514 = vdwg.mxu0
    %3515 = vrot.lane.b32.xlu0 %v2619, 112
    %v3516 = vpop.permute.xlu0 %3515
    %3517 = vrot.lane.b32.xlu0 %v2619, 80
    %v3518 = vpop.permute.xlu0 %3517
    %v3520 = vsel %vm246, %v3516, 0
    %v3523 = vsel %vm246, %v3518, 0
    %3525 = vmatprep.subr.bf16.mxu0 0
    %3526 = vmatpush1.bf16.xpose.msra.mxu0 %v3523
    %3527 = vmatprep.subr.bf16.mxu0 0
    %3528 = vmatpush1.bf16.xpose.msra.mxu0 0
    %3529 = vmatprep.subr.bf16.mxu0 0
    %3530 = vmatpush1.bf16.xpose.msra.mxu0 0
    %3531 = vmatprep.subr.bf16.mxu0 0
    %3532 = vmatpush1.bf16.xpose.msra.mxu0 0
    %3533 = vmatprep.subr.bf16.mxu0 0
    %3534 = vmatpush1.bf16.xpose.msra.mxu0 0
    %3535 = vmatprep.subr.bf16.mxu0 0
    %3536 = vmatpush1.bf16.xpose.msra.mxu0 0
    %3537 = vmatprep.subr.bf16.mxu0 0
    %3538 = vmatpush1.bf16.xpose.msra.mxu0 0
    %3539 = vmatprep.subr.bf16.mxu0 0
    %3540 = vmatpush1.bf16.xpose.msra.mxu0 0
    %3541 = vmatprep.subr.bf16.mxu0 0
    %3542 = vmatpush1.bf16.xpose.msra.mxu0 0
    %3543 = vmatprep.subr.bf16.mxu0 0
    %3544 = vmatpush1.bf16.xpose.msra.mxu0 0
    %3545 = vmatprep.subr.bf16.mxu0 0
    %3546 = vmatpush1.bf16.xpose.msra.mxu0 0
    %3547 = vmatprep.subr.bf16.mxu0 0
    %3548 = vmatpush1.bf16.xpose.msra.mxu0 0
    %3549 = vmatprep.subr.bf16.mxu0 0
    %3550 = vmatpush1.bf16.xpose.msra.mxu0 0
    %3551 = vmatprep.subr.bf16.mxu0 0
    %3552 = vmatpush1.bf16.xpose.msra.mxu0 0
    %3553 = vmatprep.subr.bf16.mxu0 0
    %3554 = vmatpush1.bf16.xpose.msra.mxu0 0
    %3555 = vmatprep.subr.bf16.mxu0 0
    %3556 = vmatpush1.bf16.xpose.msra.mxu0 0
    %3557 = vmatprep.mubr.bf16.mxu0 0
    %3558 = vmatmul.mubr.bf16.gmra.mrb[0].mxu0 %v3520
    %v3559 = vpop.f32.mrb[0].mxu0
    %v3560 = vadd.f32 0.0, %v3559
    %v3561 = vpop.f32.mrb[0].mxu0
    %v3562 = vpop.f32.mrb[0].mxu0
    %v3563 = vpop.f32.mrb[0].mxu0
    %3564 = vdwg.mxu0
    %3565 = vrot.lane.b32.xlu0 %v2620, 112
    %v3566 = vpop.permute.xlu0 %3565
    %3567 = vrot.lane.b32.xlu0 %v2620, 80
    %v3568 = vpop.permute.xlu0 %3567
    %v3570 = vsel %vm246, %v3566, 0
    %v3573 = vsel %vm246, %v3568, 0
    %3575 = vmatprep.subr.bf16.mxu0 0
    %3576 = vmatpush1.bf16.xpose.msra.mxu0 %v3573
    %3577 = vmatprep.subr.bf16.mxu0 0
    %3578 = vmatpush1.bf16.xpose.msra.mxu0 0
    %3579 = vmatprep.subr.bf16.mxu0 0
    %3580 = vmatpush1.bf16.xpose.msra.mxu0 0
    %3581 = vmatprep.subr.bf16.mxu0 0
    %3582 = vmatpush1.bf16.xpose.msra.mxu0 0
    %3583 = vmatprep.subr.bf16.mxu0 0
    %3584 = vmatpush1.bf16.xpose.msra.mxu0 0
    %3585 = vmatprep.subr.bf16.mxu0 0
    %3586 = vmatpush1.bf16.xpose.msra.mxu0 0
    %3587 = vmatprep.subr.bf16.mxu0 0
    %3588 = vmatpush1.bf16.xpose.msra.mxu0 0
    %3589 = vmatprep.subr.bf16.mxu0 0
    %3590 = vmatpush1.bf16.xpose.msra.mxu0 0
    %3591 = vmatprep.subr.bf16.mxu0 0
    %3592 = vmatpush1.bf16.xpose.msra.mxu0 0
    %3593 = vmatprep.subr.bf16.mxu0 0
    %3594 = vmatpush1.bf16.xpose.msra.mxu0 0
    %3595 = vmatprep.subr.bf16.mxu0 0
    %3596 = vmatpush1.bf16.xpose.msra.mxu0 0
    %3597 = vmatprep.subr.bf16.mxu0 0
    %3598 = vmatpush1.bf16.xpose.msra.mxu0 0
    %3599 = vmatprep.subr.bf16.mxu0 0
    %3600 = vmatpush1.bf16.xpose.msra.mxu0 0
    %3601 = vmatprep.subr.bf16.mxu0 0
    %3602 = vmatpush1.bf16.xpose.msra.mxu0 0
    %3603 = vmatprep.subr.bf16.mxu0 0
    %3604 = vmatpush1.bf16.xpose.msra.mxu0 0
    %3605 = vmatprep.subr.bf16.mxu0 0
    %3606 = vmatpush1.bf16.xpose.msra.mxu0 0
    %3607 = vmatprep.mubr.bf16.mxu0 0
    %3608 = vmatmul.mubr.bf16.gmra.mrb[0].mxu0 %v3570
    %v3609 = vpop.f32.mrb[0].mxu0
    %v3610 = vadd.f32 0.0, %v3609
    %v3611 = vpop.f32.mrb[0].mxu0
    %v3612 = vpop.f32.mrb[0].mxu0
    %v3613 = vpop.f32.mrb[0].mxu0
    %3614 = vdwg.mxu0
    %3615 = vrot.lane.b32.xlu0 %v2621, 112
    %v3616 = vpop.permute.xlu0 %3615
    %3617 = vrot.lane.b32.xlu0 %v2621, 80
    %v3618 = vpop.permute.xlu0 %3617
    %v3620 = vsel %vm246, %v3616, 0
    %v3623 = vsel %vm246, %v3618, 0
    %3625 = vmatprep.subr.bf16.mxu0 0
    %3626 = vmatpush1.bf16.xpose.msra.mxu0 %v3623
    %3627 = vmatprep.subr.bf16.mxu0 0
    %3628 = vmatpush1.bf16.xpose.msra.mxu0 0
    %3629 = vmatprep.subr.bf16.mxu0 0
    %3630 = vmatpush1.bf16.xpose.msra.mxu0 0
    %3631 = vmatprep.subr.bf16.mxu0 0
    %3632 = vmatpush1.bf16.xpose.msra.mxu0 0
    %3633 = vmatprep.subr.bf16.mxu0 0
    %3634 = vmatpush1.bf16.xpose.msra.mxu0 0
    %3635 = vmatprep.subr.bf16.mxu0 0
    %3636 = vmatpush1.bf16.xpose.msra.mxu0 0
    %3637 = vmatprep.subr.bf16.mxu0 0
    %3638 = vmatpush1.bf16.xpose.msra.mxu0 0
    %3639 = vmatprep.subr.bf16.mxu0 0
    %3640 = vmatpush1.bf16.xpose.msra.mxu0 0
    %3641 = vmatprep.subr.bf16.mxu0 0
    %3642 = vmatpush1.bf16.xpose.msra.mxu0 0
    %3643 = vmatprep.subr.bf16.mxu0 0
    %3644 = vmatpush1.bf16.xpose.msra.mxu0 0
    %3645 = vmatprep.subr.bf16.mxu0 0
    %3646 = vmatpush1.bf16.xpose.msra.mxu0 0
    %3647 = vmatprep.subr.bf16.mxu0 0
    %3648 = vmatpush1.bf16.xpose.msra.mxu0 0
    %3649 = vmatprep.subr.bf16.mxu0 0
    %3650 = vmatpush1.bf16.xpose.msra.mxu0 0
    %3651 = vmatprep.subr.bf16.mxu0 0
    %3652 = vmatpush1.bf16.xpose.msra.mxu0 0
    %3653 = vmatprep.subr.bf16.mxu0 0
    %3654 = vmatpush1.bf16.xpose.msra.mxu0 0
    %3655 = vmatprep.subr.bf16.mxu0 0
    %3656 = vmatpush1.bf16.xpose.msra.mxu0 0
    %3657 = vmatprep.mubr.bf16.mxu0 0
    %3658 = vmatmul.mubr.bf16.gmra.mrb[0].mxu0 %v3620
    %v3659 = vpop.f32.mrb[0].mxu0
    %v3660 = vadd.f32 0.0, %v3659
    %v3661 = vpop.f32.mrb[0].mxu0
    %v3662 = vpop.f32.mrb[0].mxu0
    %v3663 = vpop.f32.mrb[0].mxu0
    %3664 = vdwg.mxu0
    %3665 = vrot.lane.b32.xlu0 %v2622, 112
    %v3666 = vpop.permute.xlu0 %3665
    %3667 = vrot.lane.b32.xlu0 %v2622, 80
    %v3668 = vpop.permute.xlu0 %3667
    %v3670 = vsel %vm246, %v3666, 0
    %v3673 = vsel %vm246, %v3668, 0
    %3675 = vmatprep.subr.bf16.mxu0 0
    %3676 = vmatpush1.bf16.xpose.msra.mxu0 %v3673
    %3677 = vmatprep.subr.bf16.mxu0 0
    %3678 = vmatpush1.bf16.xpose.msra.mxu0 0
    %3679 = vmatprep.subr.bf16.mxu0 0
    %3680 = vmatpush1.bf16.xpose.msra.mxu0 0
    %3681 = vmatprep.subr.bf16.mxu0 0
    %3682 = vmatpush1.bf16.xpose.msra.mxu0 0
    %3683 = vmatprep.subr.bf16.mxu0 0
    %3684 = vmatpush1.bf16.xpose.msra.mxu0 0
    %3685 = vmatprep.subr.bf16.mxu0 0
    %3686 = vmatpush1.bf16.xpose.msra.mxu0 0
    %3687 = vmatprep.subr.bf16.mxu0 0
    %3688 = vmatpush1.bf16.xpose.msra.mxu0 0
    %3689 = vmatprep.subr.bf16.mxu0 0
    %3690 = vmatpush1.bf16.xpose.msra.mxu0 0
    %3691 = vmatprep.subr.bf16.mxu0 0
    %3692 = vmatpush1.bf16.xpose.msra.mxu0 0
    %3693 = vmatprep.subr.bf16.mxu0 0
    %3694 = vmatpush1.bf16.xpose.msra.mxu0 0
    %3695 = vmatprep.subr.bf16.mxu0 0
    %3696 = vmatpush1.bf16.xpose.msra.mxu0 0
    %3697 = vmatprep.subr.bf16.mxu0 0
    %3698 = vmatpush1.bf16.xpose.msra.mxu0 0
    %3699 = vmatprep.subr.bf16.mxu0 0
    %3700 = vmatpush1.bf16.xpose.msra.mxu0 0
    %3701 = vmatprep.subr.bf16.mxu0 0
    %3702 = vmatpush1.bf16.xpose.msra.mxu0 0
    %3703 = vmatprep.subr.bf16.mxu0 0
    %3704 = vmatpush1.bf16.xpose.msra.mxu0 0
    %3705 = vmatprep.subr.bf16.mxu0 0
    %3706 = vmatpush1.bf16.xpose.msra.mxu0 0
    %3707 = vmatprep.mubr.bf16.mxu0 0
    %3708 = vmatmul.mubr.bf16.gmra.mrb[0].mxu0 %v3670
    %v3709 = vpop.f32.mrb[0].mxu0
    %v3710 = vadd.f32 0.0, %v3709
    %v3711 = vpop.f32.mrb[0].mxu0
    %v3712 = vpop.f32.mrb[0].mxu0
    %v3713 = vpop.f32.mrb[0].mxu0
    %3714 = vdwg.mxu0
    %v3715 = vmul.f32 %v3560, 0.35355338
    %v3716 = vmul.f32 %v3610, 0.35355338
    %v3717 = vmul.f32 %v3660, 0.35355338
    %v3718 = vmul.f32 %v3710, 0.35355338
    %v3719 = vsel %vm445, %v3715, -1e+30
    %v3720 = vsel %vm445, %v3716, -1e+30
    %v3721 = vsel %vm445, %v3717, -1e+30
    %v3722 = vsel %vm445, %v3718, -1e+30
    %v3723 = vsel %vm246, %v3719, -inf
    %3724 = vmax.xlane.f32.xlu0 %v3723
    %v3725 = vpop.xlane.xlu0 %3724
    %v3726 = vsel %vm246, %v3720, -inf
    %3727 = vmax.xlane.f32.xlu0 %v3726
    %v3728 = vpop.xlane.xlu0 %3727
    %v3729 = vsel %vm246, %v3721, -inf
    %3730 = vmax.xlane.f32.xlu0 %v3729
    %v3731 = vpop.xlane.xlu0 %3730
    %v3732 = vsel %vm246, %v3722, -inf
    %3733 = vmax.xlane.f32.xlu0 %v3732
    %v3734 = vpop.xlane.xlu0 %3733
    %v3735 = vsub.f32 %v3719, %v3725
    %v3736 = vsub.f32 %v3720, %v3728
    %v3737 = vsub.f32 %v3721, %v3731
    %v3738 = vsub.f32 %v3722, %v3734
    %v3739 = vmul.f32 %v3735, 1.442695
    %v3740 = vpow.pop %v3739
    %v3741 = vmul.f32 %v3736, 1.442695
    %v3742 = vpow.pop %v3741
    %v3743 = vmul.f32 %v3737, 1.442695
    %v3744 = vpow.pop %v3743
    %v3745 = vmul.f32 %v3738, 1.442695
    %v3746 = vpow.pop %v3745
    %v3747 = vsel %vm246, %v3740, 0.0
    %3748 = vadd.xlane.f32.xlu0 %v3747
    %v3749 = vpop.xlane.xlu0 %3748
    %v3750 = vsel %vm246, %v3742, 0.0
    %3751 = vadd.xlane.f32.xlu0 %v3750
    %v3752 = vpop.xlane.xlu0 %3751
    %v3753 = vsel %vm246, %v3744, 0.0
    %3754 = vadd.xlane.f32.xlu0 %v3753
    %v3755 = vpop.xlane.xlu0 %3754
    %v3756 = vsel %vm246, %v3746, 0.0
    %3757 = vadd.xlane.f32.xlu0 %v3756
    %v3758 = vpop.xlane.xlu0 %3757
    %v3759 = vrcp.pop %v3749
    %v3760 = vrcp.pop %v3752
    %v3761 = vrcp.pop %v3755
    %v3762 = vrcp.pop %v3758
    %v3763 = vmul.f32 %v3740, %v3759
    %v3764 = vmul.f32 %v3742, %v3760
    %v3765 = vmul.f32 %v3744, %v3761
    %v3766 = vmul.f32 %v3746, %v3762
    %v3767 = vpack.c.bf16 %v3763, %v3763
    %v3768 = vpack.c.bf16 %v3764, %v3764
    %v3769 = vpack.c.bf16 %v3765, %v3765
    %v3770 = vpack.c.bf16 %v3766, %v3766
    %3771 = vrot.lane.b32.xlu0 %v2619, 48
    %v3772 = vpop.permute.xlu0 %3771
    %v3774 = vsel %vm246, %v3767, 0
    %v3777 = vsel %vm503, %v3772, 0
    %3779 = vmatprep.subr.bf16.mxu0 0
    %3780 = vmatpush1.bf16.msra.mxu0 %v3777
    %3781 = vmatprep.subr.bf16.mxu0 0
    %3782 = vmatpush1.bf16.msra.mxu0 0
    %3783 = vmatprep.subr.bf16.mxu0 0
    %3784 = vmatpush1.bf16.msra.mxu0 0
    %3785 = vmatprep.subr.bf16.mxu0 0
    %3786 = vmatpush1.bf16.msra.mxu0 0
    %3787 = vmatprep.subr.bf16.mxu0 0
    %3788 = vmatpush1.bf16.msra.mxu0 0
    %3789 = vmatprep.subr.bf16.mxu0 0
    %3790 = vmatpush1.bf16.msra.mxu0 0
    %3791 = vmatprep.subr.bf16.mxu0 0
    %3792 = vmatpush1.bf16.msra.mxu0 0
    %3793 = vmatprep.subr.bf16.mxu0 0
    %3794 = vmatpush1.bf16.msra.mxu0 0
    %3795 = vmatprep.subr.bf16.mxu0 0
    %3796 = vmatpush1.bf16.msra.mxu0 0
    %3797 = vmatprep.subr.bf16.mxu0 0
    %3798 = vmatpush1.bf16.msra.mxu0 0
    %3799 = vmatprep.subr.bf16.mxu0 0
    %3800 = vmatpush1.bf16.msra.mxu0 0
    %3801 = vmatprep.subr.bf16.mxu0 0
    %3802 = vmatpush1.bf16.msra.mxu0 0
    %3803 = vmatprep.subr.bf16.mxu0 0
    %3804 = vmatpush1.bf16.msra.mxu0 0
    %3805 = vmatprep.subr.bf16.mxu0 0
    %3806 = vmatpush1.bf16.msra.mxu0 0
    %3807 = vmatprep.subr.bf16.mxu0 0
    %3808 = vmatpush1.bf16.msra.mxu0 0
    %3809 = vmatprep.subr.bf16.mxu0 0
    %3810 = vmatpush1.bf16.msra.mxu0 0
    %3811 = vmatprep.mubr.bf16.mxu0 0
    %3812 = vmatmul.mubr.bf16.gmra.mrb[0].mxu0 %v3774
    %v3813 = vpop.f32.mrb[0].mxu0
    %v3814 = vadd.f32 0.0, %v3813
    %v3815 = vpop.f32.mrb[0].mxu0
    %v3816 = vpop.f32.mrb[0].mxu0
    %v3817 = vpop.f32.mrb[0].mxu0
    %3818 = vdwg.mxu0
    %3819 = vrot.lane.b32.xlu0 %v2620, 48
    %v3820 = vpop.permute.xlu0 %3819
    %v3822 = vsel %vm246, %v3768, 0
    %v3825 = vsel %vm503, %v3820, 0
    %3827 = vmatprep.subr.bf16.mxu0 0
    %3828 = vmatpush1.bf16.msra.mxu0 %v3825
    %3829 = vmatprep.subr.bf16.mxu0 0
    %3830 = vmatpush1.bf16.msra.mxu0 0
    %3831 = vmatprep.subr.bf16.mxu0 0
    %3832 = vmatpush1.bf16.msra.mxu0 0
    %3833 = vmatprep.subr.bf16.mxu0 0
    %3834 = vmatpush1.bf16.msra.mxu0 0
    %3835 = vmatprep.subr.bf16.mxu0 0
    %3836 = vmatpush1.bf16.msra.mxu0 0
    %3837 = vmatprep.subr.bf16.mxu0 0
    %3838 = vmatpush1.bf16.msra.mxu0 0
    %3839 = vmatprep.subr.bf16.mxu0 0
    %3840 = vmatpush1.bf16.msra.mxu0 0
    %3841 = vmatprep.subr.bf16.mxu0 0
    %3842 = vmatpush1.bf16.msra.mxu0 0
    %3843 = vmatprep.subr.bf16.mxu0 0
    %3844 = vmatpush1.bf16.msra.mxu0 0
    %3845 = vmatprep.subr.bf16.mxu0 0
    %3846 = vmatpush1.bf16.msra.mxu0 0
    %3847 = vmatprep.subr.bf16.mxu0 0
    %3848 = vmatpush1.bf16.msra.mxu0 0
    %3849 = vmatprep.subr.bf16.mxu0 0
    %3850 = vmatpush1.bf16.msra.mxu0 0
    %3851 = vmatprep.subr.bf16.mxu0 0
    %3852 = vmatpush1.bf16.msra.mxu0 0
    %3853 = vmatprep.subr.bf16.mxu0 0
    %3854 = vmatpush1.bf16.msra.mxu0 0
    %3855 = vmatprep.subr.bf16.mxu0 0
    %3856 = vmatpush1.bf16.msra.mxu0 0
    %3857 = vmatprep.subr.bf16.mxu0 0
    %3858 = vmatpush1.bf16.msra.mxu0 0
    %3859 = vmatprep.mubr.bf16.mxu0 0
    %3860 = vmatmul.mubr.bf16.gmra.mrb[0].mxu0 %v3822
    %v3861 = vpop.f32.mrb[0].mxu0
    %v3862 = vadd.f32 0.0, %v3861
    %v3863 = vpop.f32.mrb[0].mxu0
    %v3864 = vpop.f32.mrb[0].mxu0
    %v3865 = vpop.f32.mrb[0].mxu0
    %3866 = vdwg.mxu0
    %3867 = vrot.lane.b32.xlu0 %v2621, 48
    %v3868 = vpop.permute.xlu0 %3867
    %v3870 = vsel %vm246, %v3769, 0
    %v3873 = vsel %vm503, %v3868, 0
    %3875 = vmatprep.subr.bf16.mxu0 0
    %3876 = vmatpush1.bf16.msra.mxu0 %v3873
    %3877 = vmatprep.subr.bf16.mxu0 0
    %3878 = vmatpush1.bf16.msra.mxu0 0
    %3879 = vmatprep.subr.bf16.mxu0 0
    %3880 = vmatpush1.bf16.msra.mxu0 0
    %3881 = vmatprep.subr.bf16.mxu0 0
    %3882 = vmatpush1.bf16.msra.mxu0 0
    %3883 = vmatprep.subr.bf16.mxu0 0
    %3884 = vmatpush1.bf16.msra.mxu0 0
    %3885 = vmatprep.subr.bf16.mxu0 0
    %3886 = vmatpush1.bf16.msra.mxu0 0
    %3887 = vmatprep.subr.bf16.mxu0 0
    %3888 = vmatpush1.bf16.msra.mxu0 0
    %3889 = vmatprep.subr.bf16.mxu0 0
    %3890 = vmatpush1.bf16.msra.mxu0 0
    %3891 = vmatprep.subr.bf16.mxu0 0
    %3892 = vmatpush1.bf16.msra.mxu0 0
    %3893 = vmatprep.subr.bf16.mxu0 0
    %3894 = vmatpush1.bf16.msra.mxu0 0
    %3895 = vmatprep.subr.bf16.mxu0 0
    %3896 = vmatpush1.bf16.msra.mxu0 0
    %3897 = vmatprep.subr.bf16.mxu0 0
    %3898 = vmatpush1.bf16.msra.mxu0 0
    %3899 = vmatprep.subr.bf16.mxu0 0
    %3900 = vmatpush1.bf16.msra.mxu0 0
    %3901 = vmatprep.subr.bf16.mxu0 0
    %3902 = vmatpush1.bf16.msra.mxu0 0
    %3903 = vmatprep.subr.bf16.mxu0 0
    %3904 = vmatpush1.bf16.msra.mxu0 0
    %3905 = vmatprep.subr.bf16.mxu0 0
    %3906 = vmatpush1.bf16.msra.mxu0 0
    %3907 = vmatprep.mubr.bf16.mxu0 0
    %3908 = vmatmul.mubr.bf16.gmra.mrb[0].mxu0 %v3870
    %v3909 = vpop.f32.mrb[0].mxu0
    %v3910 = vadd.f32 0.0, %v3909
    %v3911 = vpop.f32.mrb[0].mxu0
    %v3912 = vpop.f32.mrb[0].mxu0
    %v3913 = vpop.f32.mrb[0].mxu0
    %3914 = vdwg.mxu0
    %3915 = vrot.lane.b32.xlu0 %v2622, 48
    %v3916 = vpop.permute.xlu0 %3915
    %v3918 = vsel %vm246, %v3770, 0
    %v3921 = vsel %vm503, %v3916, 0
    %3923 = vmatprep.subr.bf16.mxu0 0
    %3924 = vmatpush1.bf16.msra.mxu0 %v3921
    %3925 = vmatprep.subr.bf16.mxu0 0
    %3926 = vmatpush1.bf16.msra.mxu0 0
    %3927 = vmatprep.subr.bf16.mxu0 0
    %3928 = vmatpush1.bf16.msra.mxu0 0
    %3929 = vmatprep.subr.bf16.mxu0 0
    %3930 = vmatpush1.bf16.msra.mxu0 0
    %3931 = vmatprep.subr.bf16.mxu0 0
    %3932 = vmatpush1.bf16.msra.mxu0 0
    %3933 = vmatprep.subr.bf16.mxu0 0
    %3934 = vmatpush1.bf16.msra.mxu0 0
    %3935 = vmatprep.subr.bf16.mxu0 0
    %3936 = vmatpush1.bf16.msra.mxu0 0
    %3937 = vmatprep.subr.bf16.mxu0 0
    %3938 = vmatpush1.bf16.msra.mxu0 0
    %3939 = vmatprep.subr.bf16.mxu0 0
    %3940 = vmatpush1.bf16.msra.mxu0 0
    %3941 = vmatprep.subr.bf16.mxu0 0
    %3942 = vmatpush1.bf16.msra.mxu0 0
    %3943 = vmatprep.subr.bf16.mxu0 0
    %3944 = vmatpush1.bf16.msra.mxu0 0
    %3945 = vmatprep.subr.bf16.mxu0 0
    %3946 = vmatpush1.bf16.msra.mxu0 0
    %3947 = vmatprep.subr.bf16.mxu0 0
    %3948 = vmatpush1.bf16.msra.mxu0 0
    %3949 = vmatprep.subr.bf16.mxu0 0
    %3950 = vmatpush1.bf16.msra.mxu0 0
    %3951 = vmatprep.subr.bf16.mxu0 0
    %3952 = vmatpush1.bf16.msra.mxu0 0
    %3953 = vmatprep.subr.bf16.mxu0 0
    %3954 = vmatpush1.bf16.msra.mxu0 0
    %3955 = vmatprep.mubr.bf16.mxu0 0
    %3956 = vmatmul.mubr.bf16.gmra.mrb[0].mxu0 %v3918
    %v3957 = vpop.f32.mrb[0].mxu0
    %v3958 = vadd.f32 0.0, %v3957
    %v3959 = vpop.f32.mrb[0].mxu0
    %v3960 = vpop.f32.mrb[0].mxu0
    %v3961 = vpop.f32.mrb[0].mxu0
    %3962 = vdwg.mxu0
    %3963 = vrot.lane.b32.xlu0 %v2619, 104
    %v3964 = vpop.permute.xlu0 %3963
    %3965 = vrot.lane.b32.xlu0 %v2619, 72
    %v3966 = vpop.permute.xlu0 %3965
    %v3968 = vsel %vm246, %v3964, 0
    %v3971 = vsel %vm246, %v3966, 0
    %3973 = vmatprep.subr.bf16.mxu0 0
    %3974 = vmatpush1.bf16.xpose.msra.mxu0 %v3971
    %3975 = vmatprep.subr.bf16.mxu0 0
    %3976 = vmatpush1.bf16.xpose.msra.mxu0 0
    %3977 = vmatprep.subr.bf16.mxu0 0
    %3978 = vmatpush1.bf16.xpose.msra.mxu0 0
    %3979 = vmatprep.subr.bf16.mxu0 0
    %3980 = vmatpush1.bf16.xpose.msra.mxu0 0
    %3981 = vmatprep.subr.bf16.mxu0 0
    %3982 = vmatpush1.bf16.xpose.msra.mxu0 0
    %3983 = vmatprep.subr.bf16.mxu0 0
    %3984 = vmatpush1.bf16.xpose.msra.mxu0 0
    %3985 = vmatprep.subr.bf16.mxu0 0
    %3986 = vmatpush1.bf16.xpose.msra.mxu0 0
    %3987 = vmatprep.subr.bf16.mxu0 0
    %3988 = vmatpush1.bf16.xpose.msra.mxu0 0
    %3989 = vmatprep.subr.bf16.mxu0 0
    %3990 = vmatpush1.bf16.xpose.msra.mxu0 0
    %3991 = vmatprep.subr.bf16.mxu0 0
    %3992 = vmatpush1.bf16.xpose.msra.mxu0 0
    %3993 = vmatprep.subr.bf16.mxu0 0
    %3994 = vmatpush1.bf16.xpose.msra.mxu0 0
    %3995 = vmatprep.subr.bf16.mxu0 0
    %3996 = vmatpush1.bf16.xpose.msra.mxu0 0
    %3997 = vmatprep.subr.bf16.mxu0 0
    %3998 = vmatpush1.bf16.xpose.msra.mxu0 0
    %3999 = vmatprep.subr.bf16.mxu0 0
    %4000 = vmatpush1.bf16.xpose.msra.mxu0 0
    %4001 = vmatprep.subr.bf16.mxu0 0
    %4002 = vmatpush1.bf16.xpose.msra.mxu0 0
    %4003 = vmatprep.subr.bf16.mxu0 0
    %4004 = vmatpush1.bf16.xpose.msra.mxu0 0
    %4005 = vmatprep.mubr.bf16.mxu0 0
    %4006 = vmatmul.mubr.bf16.gmra.mrb[0].mxu0 %v3968
    %v4007 = vpop.f32.mrb[0].mxu0
    %v4008 = vadd.f32 0.0, %v4007
    %v4009 = vpop.f32.mrb[0].mxu0
    %v4010 = vpop.f32.mrb[0].mxu0
    %v4011 = vpop.f32.mrb[0].mxu0
    %4012 = vdwg.mxu0
    %4013 = vrot.lane.b32.xlu0 %v2620, 104
    %v4014 = vpop.permute.xlu0 %4013
    %4015 = vrot.lane.b32.xlu0 %v2620, 72
    %v4016 = vpop.permute.xlu0 %4015
    %v4018 = vsel %vm246, %v4014, 0
    %v4021 = vsel %vm246, %v4016, 0
    %4023 = vmatprep.subr.bf16.mxu0 0
    %4024 = vmatpush1.bf16.xpose.msra.mxu0 %v4021
    %4025 = vmatprep.subr.bf16.mxu0 0
    %4026 = vmatpush1.bf16.xpose.msra.mxu0 0
    %4027 = vmatprep.subr.bf16.mxu0 0
    %4028 = vmatpush1.bf16.xpose.msra.mxu0 0
    %4029 = vmatprep.subr.bf16.mxu0 0
    %4030 = vmatpush1.bf16.xpose.msra.mxu0 0
    %4031 = vmatprep.subr.bf16.mxu0 0
    %4032 = vmatpush1.bf16.xpose.msra.mxu0 0
    %4033 = vmatprep.subr.bf16.mxu0 0
    %4034 = vmatpush1.bf16.xpose.msra.mxu0 0
    %4035 = vmatprep.subr.bf16.mxu0 0
    %4036 = vmatpush1.bf16.xpose.msra.mxu0 0
    %4037 = vmatprep.subr.bf16.mxu0 0
    %4038 = vmatpush1.bf16.xpose.msra.mxu0 0
    %4039 = vmatprep.subr.bf16.mxu0 0
    %4040 = vmatpush1.bf16.xpose.msra.mxu0 0
    %4041 = vmatprep.subr.bf16.mxu0 0
    %4042 = vmatpush1.bf16.xpose.msra.mxu0 0
    %4043 = vmatprep.subr.bf16.mxu0 0
    %4044 = vmatpush1.bf16.xpose.msra.mxu0 0
    %4045 = vmatprep.subr.bf16.mxu0 0
    %4046 = vmatpush1.bf16.xpose.msra.mxu0 0
    %4047 = vmatprep.subr.bf16.mxu0 0
    %4048 = vmatpush1.bf16.xpose.msra.mxu0 0
    %4049 = vmatprep.subr.bf16.mxu0 0
    %4050 = vmatpush1.bf16.xpose.msra.mxu0 0
    %4051 = vmatprep.subr.bf16.mxu0 0
    %4052 = vmatpush1.bf16.xpose.msra.mxu0 0
    %4053 = vmatprep.subr.bf16.mxu0 0
    %4054 = vmatpush1.bf16.xpose.msra.mxu0 0
    %4055 = vmatprep.mubr.bf16.mxu0 0
    %4056 = vmatmul.mubr.bf16.gmra.mrb[0].mxu0 %v4018
    %v4057 = vpop.f32.mrb[0].mxu0
    %v4058 = vadd.f32 0.0, %v4057
    %v4059 = vpop.f32.mrb[0].mxu0
    %v4060 = vpop.f32.mrb[0].mxu0
    %v4061 = vpop.f32.mrb[0].mxu0
    %4062 = vdwg.mxu0
    %4063 = vrot.lane.b32.xlu0 %v2621, 104
    %v4064 = vpop.permute.xlu0 %4063
    %4065 = vrot.lane.b32.xlu0 %v2621, 72
    %v4066 = vpop.permute.xlu0 %4065
    %v4068 = vsel %vm246, %v4064, 0
    %v4071 = vsel %vm246, %v4066, 0
    %4073 = vmatprep.subr.bf16.mxu0 0
    %4074 = vmatpush1.bf16.xpose.msra.mxu0 %v4071
    %4075 = vmatprep.subr.bf16.mxu0 0
    %4076 = vmatpush1.bf16.xpose.msra.mxu0 0
    %4077 = vmatprep.subr.bf16.mxu0 0
    %4078 = vmatpush1.bf16.xpose.msra.mxu0 0
    %4079 = vmatprep.subr.bf16.mxu0 0
    %4080 = vmatpush1.bf16.xpose.msra.mxu0 0
    %4081 = vmatprep.subr.bf16.mxu0 0
    %4082 = vmatpush1.bf16.xpose.msra.mxu0 0
    %4083 = vmatprep.subr.bf16.mxu0 0
    %4084 = vmatpush1.bf16.xpose.msra.mxu0 0
    %4085 = vmatprep.subr.bf16.mxu0 0
    %4086 = vmatpush1.bf16.xpose.msra.mxu0 0
    %4087 = vmatprep.subr.bf16.mxu0 0
    %4088 = vmatpush1.bf16.xpose.msra.mxu0 0
    %4089 = vmatprep.subr.bf16.mxu0 0
    %4090 = vmatpush1.bf16.xpose.msra.mxu0 0
    %4091 = vmatprep.subr.bf16.mxu0 0
    %4092 = vmatpush1.bf16.xpose.msra.mxu0 0
    %4093 = vmatprep.subr.bf16.mxu0 0
    %4094 = vmatpush1.bf16.xpose.msra.mxu0 0
    %4095 = vmatprep.subr.bf16.mxu0 0
    %4096 = vmatpush1.bf16.xpose.msra.mxu0 0
    %4097 = vmatprep.subr.bf16.mxu0 0
    %4098 = vmatpush1.bf16.xpose.msra.mxu0 0
    %4099 = vmatprep.subr.bf16.mxu0 0
    %4100 = vmatpush1.bf16.xpose.msra.mxu0 0
    %4101 = vmatprep.subr.bf16.mxu0 0
    %4102 = vmatpush1.bf16.xpose.msra.mxu0 0
    %4103 = vmatprep.subr.bf16.mxu0 0
    %4104 = vmatpush1.bf16.xpose.msra.mxu0 0
    %4105 = vmatprep.mubr.bf16.mxu0 0
    %4106 = vmatmul.mubr.bf16.gmra.mrb[0].mxu0 %v4068
    %v4107 = vpop.f32.mrb[0].mxu0
    %v4108 = vadd.f32 0.0, %v4107
    %v4109 = vpop.f32.mrb[0].mxu0
    %v4110 = vpop.f32.mrb[0].mxu0
    %v4111 = vpop.f32.mrb[0].mxu0
    %4112 = vdwg.mxu0
    %4113 = vrot.lane.b32.xlu0 %v2622, 104
    %v4114 = vpop.permute.xlu0 %4113
    %4115 = vrot.lane.b32.xlu0 %v2622, 72
    %v4116 = vpop.permute.xlu0 %4115
    %v4118 = vsel %vm246, %v4114, 0
    %v4121 = vsel %vm246, %v4116, 0
    %4123 = vmatprep.subr.bf16.mxu0 0
    %4124 = vmatpush1.bf16.xpose.msra.mxu0 %v4121
    %4125 = vmatprep.subr.bf16.mxu0 0
    %4126 = vmatpush1.bf16.xpose.msra.mxu0 0
    %4127 = vmatprep.subr.bf16.mxu0 0
    %4128 = vmatpush1.bf16.xpose.msra.mxu0 0
    %4129 = vmatprep.subr.bf16.mxu0 0
    %4130 = vmatpush1.bf16.xpose.msra.mxu0 0
    %4131 = vmatprep.subr.bf16.mxu0 0
    %4132 = vmatpush1.bf16.xpose.msra.mxu0 0
    %4133 = vmatprep.subr.bf16.mxu0 0
    %4134 = vmatpush1.bf16.xpose.msra.mxu0 0
    %4135 = vmatprep.subr.bf16.mxu0 0
    %4136 = vmatpush1.bf16.xpose.msra.mxu0 0
    %4137 = vmatprep.subr.bf16.mxu0 0
    %4138 = vmatpush1.bf16.xpose.msra.mxu0 0
    %4139 = vmatprep.subr.bf16.mxu0 0
    %4140 = vmatpush1.bf16.xpose.msra.mxu0 0
    %4141 = vmatprep.subr.bf16.mxu0 0
    %4142 = vmatpush1.bf16.xpose.msra.mxu0 0
    %4143 = vmatprep.subr.bf16.mxu0 0
    %4144 = vmatpush1.bf16.xpose.msra.mxu0 0
    %4145 = vmatprep.subr.bf16.mxu0 0
    %4146 = vmatpush1.bf16.xpose.msra.mxu0 0
    %4147 = vmatprep.subr.bf16.mxu0 0
    %4148 = vmatpush1.bf16.xpose.msra.mxu0 0
    %4149 = vmatprep.subr.bf16.mxu0 0
    %4150 = vmatpush1.bf16.xpose.msra.mxu0 0
    %4151 = vmatprep.subr.bf16.mxu0 0
    %4152 = vmatpush1.bf16.xpose.msra.mxu0 0
    %4153 = vmatprep.subr.bf16.mxu0 0
    %4154 = vmatpush1.bf16.xpose.msra.mxu0 0
    %4155 = vmatprep.mubr.bf16.mxu0 0
    %4156 = vmatmul.mubr.bf16.gmra.mrb[0].mxu0 %v4118
    %v4157 = vpop.f32.mrb[0].mxu0
    %v4158 = vadd.f32 0.0, %v4157
    %v4159 = vpop.f32.mrb[0].mxu0
    %v4160 = vpop.f32.mrb[0].mxu0
    %v4161 = vpop.f32.mrb[0].mxu0
    %4162 = vdwg.mxu0
    %v4163 = vmul.f32 %v4008, 0.35355338
    %v4164 = vmul.f32 %v4058, 0.35355338
    %v4165 = vmul.f32 %v4108, 0.35355338
    %v4166 = vmul.f32 %v4158, 0.35355338
    %v4167 = vsel %vm445, %v4163, -1e+30
    %v4168 = vsel %vm445, %v4164, -1e+30
    %v4169 = vsel %vm445, %v4165, -1e+30
    %v4170 = vsel %vm445, %v4166, -1e+30
    %v4171 = vsel %vm246, %v4167, -inf
    %4172 = vmax.xlane.f32.xlu0 %v4171
    %v4173 = vpop.xlane.xlu0 %4172
    %v4174 = vsel %vm246, %v4168, -inf
    %4175 = vmax.xlane.f32.xlu0 %v4174
    %v4176 = vpop.xlane.xlu0 %4175
    %v4177 = vsel %vm246, %v4169, -inf
    %4178 = vmax.xlane.f32.xlu0 %v4177
    %v4179 = vpop.xlane.xlu0 %4178
    %v4180 = vsel %vm246, %v4170, -inf
    %4181 = vmax.xlane.f32.xlu0 %v4180
    %v4182 = vpop.xlane.xlu0 %4181
    %v4183 = vsub.f32 %v4167, %v4173
    %v4184 = vsub.f32 %v4168, %v4176
    %v4185 = vsub.f32 %v4169, %v4179
    %v4186 = vsub.f32 %v4170, %v4182
    %v4187 = vmul.f32 %v4183, 1.442695
    %v4188 = vpow.pop %v4187
    %v4189 = vmul.f32 %v4184, 1.442695
    %v4190 = vpow.pop %v4189
    %v4191 = vmul.f32 %v4185, 1.442695
    %v4192 = vpow.pop %v4191
    %v4193 = vmul.f32 %v4186, 1.442695
    %v4194 = vpow.pop %v4193
    %v4195 = vsel %vm246, %v4188, 0.0
    %4196 = vadd.xlane.f32.xlu0 %v4195
    %v4197 = vpop.xlane.xlu0 %4196
    %v4198 = vsel %vm246, %v4190, 0.0
    %4199 = vadd.xlane.f32.xlu0 %v4198
    %v4200 = vpop.xlane.xlu0 %4199
    %v4201 = vsel %vm246, %v4192, 0.0
    %4202 = vadd.xlane.f32.xlu0 %v4201
    %v4203 = vpop.xlane.xlu0 %4202
    %v4204 = vsel %vm246, %v4194, 0.0
    %4205 = vadd.xlane.f32.xlu0 %v4204
    %v4206 = vpop.xlane.xlu0 %4205
    %v4207 = vrcp.pop %v4197
    %v4208 = vrcp.pop %v4200
    %v4209 = vrcp.pop %v4203
    %v4210 = vrcp.pop %v4206
    %v4211 = vmul.f32 %v4188, %v4207
    %v4212 = vmul.f32 %v4190, %v4208
    %v4213 = vmul.f32 %v4192, %v4209
    %v4214 = vmul.f32 %v4194, %v4210
    %v4215 = vpack.c.bf16 %v4211, %v4211
    %v4216 = vpack.c.bf16 %v4212, %v4212
    %v4217 = vpack.c.bf16 %v4213, %v4213
    %v4218 = vpack.c.bf16 %v4214, %v4214
    %4219 = vrot.lane.b32.xlu0 %v2619, 40
    %v4220 = vpop.permute.xlu0 %4219
    %v4222 = vsel %vm246, %v4215, 0
    %v4225 = vsel %vm503, %v4220, 0
    %4227 = vmatprep.subr.bf16.mxu0 0
    %4228 = vmatpush1.bf16.msra.mxu0 %v4225
    %4229 = vmatprep.subr.bf16.mxu0 0
    %4230 = vmatpush1.bf16.msra.mxu0 0
    %4231 = vmatprep.subr.bf16.mxu0 0
    %4232 = vmatpush1.bf16.msra.mxu0 0
    %4233 = vmatprep.subr.bf16.mxu0 0
    %4234 = vmatpush1.bf16.msra.mxu0 0
    %4235 = vmatprep.subr.bf16.mxu0 0
    %4236 = vmatpush1.bf16.msra.mxu0 0
    %4237 = vmatprep.subr.bf16.mxu0 0
    %4238 = vmatpush1.bf16.msra.mxu0 0
    %4239 = vmatprep.subr.bf16.mxu0 0
    %4240 = vmatpush1.bf16.msra.mxu0 0
    %4241 = vmatprep.subr.bf16.mxu0 0
    %4242 = vmatpush1.bf16.msra.mxu0 0
    %4243 = vmatprep.subr.bf16.mxu0 0
    %4244 = vmatpush1.bf16.msra.mxu0 0
    %4245 = vmatprep.subr.bf16.mxu0 0
    %4246 = vmatpush1.bf16.msra.mxu0 0
    %4247 = vmatprep.subr.bf16.mxu0 0
    %4248 = vmatpush1.bf16.msra.mxu0 0
    %4249 = vmatprep.subr.bf16.mxu0 0
    %4250 = vmatpush1.bf16.msra.mxu0 0
    %4251 = vmatprep.subr.bf16.mxu0 0
    %4252 = vmatpush1.bf16.msra.mxu0 0
    %4253 = vmatprep.subr.bf16.mxu0 0
    %4254 = vmatpush1.bf16.msra.mxu0 0
    %4255 = vmatprep.subr.bf16.mxu0 0
    %4256 = vmatpush1.bf16.msra.mxu0 0
    %4257 = vmatprep.subr.bf16.mxu0 0
    %4258 = vmatpush1.bf16.msra.mxu0 0
    %4259 = vmatprep.mubr.bf16.mxu0 0
    %4260 = vmatmul.mubr.bf16.gmra.mrb[0].mxu0 %v4222
    %v4261 = vpop.f32.mrb[0].mxu0
    %v4262 = vadd.f32 0.0, %v4261
    %v4263 = vpop.f32.mrb[0].mxu0
    %v4264 = vpop.f32.mrb[0].mxu0
    %v4265 = vpop.f32.mrb[0].mxu0
    %4266 = vdwg.mxu0
    %4267 = vrot.lane.b32.xlu0 %v2620, 40
    %v4268 = vpop.permute.xlu0 %4267
    %v4270 = vsel %vm246, %v4216, 0
    %v4273 = vsel %vm503, %v4268, 0
    %4275 = vmatprep.subr.bf16.mxu0 0
    %4276 = vmatpush1.bf16.msra.mxu0 %v4273
    %4277 = vmatprep.subr.bf16.mxu0 0
    %4278 = vmatpush1.bf16.msra.mxu0 0
    %4279 = vmatprep.subr.bf16.mxu0 0
    %4280 = vmatpush1.bf16.msra.mxu0 0
    %4281 = vmatprep.subr.bf16.mxu0 0
    %4282 = vmatpush1.bf16.msra.mxu0 0
    %4283 = vmatprep.subr.bf16.mxu0 0
    %4284 = vmatpush1.bf16.msra.mxu0 0
    %4285 = vmatprep.subr.bf16.mxu0 0
    %4286 = vmatpush1.bf16.msra.mxu0 0
    %4287 = vmatprep.subr.bf16.mxu0 0
    %4288 = vmatpush1.bf16.msra.mxu0 0
    %4289 = vmatprep.subr.bf16.mxu0 0
    %4290 = vmatpush1.bf16.msra.mxu0 0
    %4291 = vmatprep.subr.bf16.mxu0 0
    %4292 = vmatpush1.bf16.msra.mxu0 0
    %4293 = vmatprep.subr.bf16.mxu0 0
    %4294 = vmatpush1.bf16.msra.mxu0 0
    %4295 = vmatprep.subr.bf16.mxu0 0
    %4296 = vmatpush1.bf16.msra.mxu0 0
    %4297 = vmatprep.subr.bf16.mxu0 0
    %4298 = vmatpush1.bf16.msra.mxu0 0
    %4299 = vmatprep.subr.bf16.mxu0 0
    %4300 = vmatpush1.bf16.msra.mxu0 0
    %4301 = vmatprep.subr.bf16.mxu0 0
    %4302 = vmatpush1.bf16.msra.mxu0 0
    %4303 = vmatprep.subr.bf16.mxu0 0
    %4304 = vmatpush1.bf16.msra.mxu0 0
    %4305 = vmatprep.subr.bf16.mxu0 0
    %4306 = vmatpush1.bf16.msra.mxu0 0
    %4307 = vmatprep.mubr.bf16.mxu0 0
    %4308 = vmatmul.mubr.bf16.gmra.mrb[0].mxu0 %v4270
    %v4309 = vpop.f32.mrb[0].mxu0
    %v4310 = vadd.f32 0.0, %v4309
    %v4311 = vpop.f32.mrb[0].mxu0
    %v4312 = vpop.f32.mrb[0].mxu0
    %v4313 = vpop.f32.mrb[0].mxu0
    %4314 = vdwg.mxu0
    %4315 = vrot.lane.b32.xlu0 %v2621, 40
    %v4316 = vpop.permute.xlu0 %4315
    %v4318 = vsel %vm246, %v4217, 0
    %v4321 = vsel %vm503, %v4316, 0
    %4323 = vmatprep.subr.bf16.mxu0 0
    %4324 = vmatpush1.bf16.msra.mxu0 %v4321
    %4325 = vmatprep.subr.bf16.mxu0 0
    %4326 = vmatpush1.bf16.msra.mxu0 0
    %4327 = vmatprep.subr.bf16.mxu0 0
    %4328 = vmatpush1.bf16.msra.mxu0 0
    %4329 = vmatprep.subr.bf16.mxu0 0
    %4330 = vmatpush1.bf16.msra.mxu0 0
    %4331 = vmatprep.subr.bf16.mxu0 0
    %4332 = vmatpush1.bf16.msra.mxu0 0
    %4333 = vmatprep.subr.bf16.mxu0 0
    %4334 = vmatpush1.bf16.msra.mxu0 0
    %4335 = vmatprep.subr.bf16.mxu0 0
    %4336 = vmatpush1.bf16.msra.mxu0 0
    %4337 = vmatprep.subr.bf16.mxu0 0
    %4338 = vmatpush1.bf16.msra.mxu0 0
    %4339 = vmatprep.subr.bf16.mxu0 0
    %4340 = vmatpush1.bf16.msra.mxu0 0
    %4341 = vmatprep.subr.bf16.mxu0 0
    %4342 = vmatpush1.bf16.msra.mxu0 0
    %4343 = vmatprep.subr.bf16.mxu0 0
    %4344 = vmatpush1.bf16.msra.mxu0 0
    %4345 = vmatprep.subr.bf16.mxu0 0
    %4346 = vmatpush1.bf16.msra.mxu0 0
    %4347 = vmatprep.subr.bf16.mxu0 0
    %4348 = vmatpush1.bf16.msra.mxu0 0
    %4349 = vmatprep.subr.bf16.mxu0 0
    %4350 = vmatpush1.bf16.msra.mxu0 0
    %4351 = vmatprep.subr.bf16.mxu0 0
    %4352 = vmatpush1.bf16.msra.mxu0 0
    %4353 = vmatprep.subr.bf16.mxu0 0
    %4354 = vmatpush1.bf16.msra.mxu0 0
    %4355 = vmatprep.mubr.bf16.mxu0 0
    %4356 = vmatmul.mubr.bf16.gmra.mrb[0].mxu0 %v4318
    %v4357 = vpop.f32.mrb[0].mxu0
    %v4358 = vadd.f32 0.0, %v4357
    %v4359 = vpop.f32.mrb[0].mxu0
    %v4360 = vpop.f32.mrb[0].mxu0
    %v4361 = vpop.f32.mrb[0].mxu0
    %4362 = vdwg.mxu0
    %4363 = vrot.lane.b32.xlu0 %v2622, 40
    %v4364 = vpop.permute.xlu0 %4363
    %v4366 = vsel %vm246, %v4218, 0
    %v4369 = vsel %vm503, %v4364, 0
    %4371 = vmatprep.subr.bf16.mxu0 0
    %4372 = vmatpush1.bf16.msra.mxu0 %v4369
    %4373 = vmatprep.subr.bf16.mxu0 0
    %4374 = vmatpush1.bf16.msra.mxu0 0
    %4375 = vmatprep.subr.bf16.mxu0 0
    %4376 = vmatpush1.bf16.msra.mxu0 0
    %4377 = vmatprep.subr.bf16.mxu0 0
    %4378 = vmatpush1.bf16.msra.mxu0 0
    %4379 = vmatprep.subr.bf16.mxu0 0
    %4380 = vmatpush1.bf16.msra.mxu0 0
    %4381 = vmatprep.subr.bf16.mxu0 0
    %4382 = vmatpush1.bf16.msra.mxu0 0
    %4383 = vmatprep.subr.bf16.mxu0 0
    %4384 = vmatpush1.bf16.msra.mxu0 0
    %4385 = vmatprep.subr.bf16.mxu0 0
    %4386 = vmatpush1.bf16.msra.mxu0 0
    %4387 = vmatprep.subr.bf16.mxu0 0
    %4388 = vmatpush1.bf16.msra.mxu0 0
    %4389 = vmatprep.subr.bf16.mxu0 0
    %4390 = vmatpush1.bf16.msra.mxu0 0
    %4391 = vmatprep.subr.bf16.mxu0 0
    %4392 = vmatpush1.bf16.msra.mxu0 0
    %4393 = vmatprep.subr.bf16.mxu0 0
    %4394 = vmatpush1.bf16.msra.mxu0 0
    %4395 = vmatprep.subr.bf16.mxu0 0
    %4396 = vmatpush1.bf16.msra.mxu0 0
    %4397 = vmatprep.subr.bf16.mxu0 0
    %4398 = vmatpush1.bf16.msra.mxu0 0
    %4399 = vmatprep.subr.bf16.mxu0 0
    %4400 = vmatpush1.bf16.msra.mxu0 0
    %4401 = vmatprep.subr.bf16.mxu0 0
    %4402 = vmatpush1.bf16.msra.mxu0 0
    %4403 = vmatprep.mubr.bf16.mxu0 0
    %4404 = vmatmul.mubr.bf16.gmra.mrb[0].mxu0 %v4366
    %v4405 = vpop.f32.mrb[0].mxu0
    %v4406 = vadd.f32 0.0, %v4405
    %v4407 = vpop.f32.mrb[0].mxu0
    %v4408 = vpop.f32.mrb[0].mxu0
    %v4409 = vpop.f32.mrb[0].mxu0
    %4410 = vdwg.mxu0
    %4415 = vrot.lane.b32.xlu0 %v3366, 8
    %v4416 = vpop.permute.xlu0 %4415
    %4417 = vrot.lane.b32.xlu0 %v3414, 8
    %v4418 = vpop.permute.xlu0 %4417
    %4419 = vrot.lane.b32.xlu0 %v3462, 8
    %v4420 = vpop.permute.xlu0 %4419
    %4421 = vrot.lane.b32.xlu0 %v3510, 8
    %v4422 = vpop.permute.xlu0 %4421
    %4431 = vrot.lane.b32.xlu0 %v3814, 16
    %v4432 = vpop.permute.xlu0 %4431
    %4433 = vrot.lane.b32.xlu0 %v3862, 16
    %v4434 = vpop.permute.xlu0 %4433
    %4435 = vrot.lane.b32.xlu0 %v3910, 16
    %v4436 = vpop.permute.xlu0 %4435
    %4437 = vrot.lane.b32.xlu0 %v3958, 16
    %v4438 = vpop.permute.xlu0 %4437
    %4447 = vrot.lane.b32.xlu0 %v4262, 24
    %v4448 = vpop.permute.xlu0 %4447
    %4449 = vrot.lane.b32.xlu0 %v4310, 24
    %v4450 = vpop.permute.xlu0 %4449
    %4451 = vrot.lane.b32.xlu0 %v4358, 24
    %v4452 = vpop.permute.xlu0 %4451
    %4453 = vrot.lane.b32.xlu0 %v4406, 24
    %v4454 = vpop.permute.xlu0 %4453
    %v4459 = vsel %vm246, %v2918, %v4416
    %v4460 = vsel %vm246, %v2966, %v4418
    %v4461 = vsel %vm246, %v3014, %v4420
    %v4462 = vsel %vm246, %v3062, %v4422
    %v4463 = vsel %vm2087, %v4459, %v4432
    %v4464 = vsel %vm2087, %v4460, %v4434
    %v4465 = vsel %vm2087, %v4461, %v4436
    %v4466 = vsel %vm2087, %v4462, %v4438
    %v4467 = vsel %vm2092, %v4463, %v4448
    %v4468 = vsel %vm2092, %v4464, %v4450
    %v4469 = vsel %vm2092, %v4465, %v4452
    %v4470 = vsel %vm2092, %v4466, %v4454
    %v4471 = vpack.c.bf16 %v4468, %v4467
    %v4472 = vpack.c.bf16 %v4470, %v4469
    %4473 = vrot.lane.b32.xlu0 %v2560, 32
    %v4474 = vpop.permute.xlu0 %4473
    %4475 = vrot.lane.b32.xlu0 %v2561, 32
    %v4476 = vpop.permute.xlu0 %4475
    %4480 = vrot.lane.b32.xlu0 %v2551, 32
    %v4481 = vpop.permute.xlu0 %4480
    %v4484 = vsel %vm96, %v4471, 0
    %v4487 = vsel %vm96, %v4472, 0
    %4489 = vmatprep.subr.bf16.mxu0 0
    %4490 = vmatpush1.bf16.msra.mxu0 %v4474
    %4491 = vmatprep.subr.bf16.mxu0 0
    %4492 = vmatpush1.bf16.msra.mxu0 %v4476
    %4493 = vmatprep.subr.bf16.mxu0 0
    %4494 = vmatpush1.bf16.msra.mxu0 0
    %4495 = vmatprep.subr.bf16.mxu0 0
    %4496 = vmatpush1.bf16.msra.mxu0 0
    %4497 = vmatprep.subr.bf16.mxu0 0
    %4498 = vmatpush1.bf16.msra.mxu0 0
    %4499 = vmatprep.subr.bf16.mxu0 0
    %4500 = vmatpush1.bf16.msra.mxu0 0
    %4501 = vmatprep.subr.bf16.mxu0 0
    %4502 = vmatpush1.bf16.msra.mxu0 0
    %4503 = vmatprep.subr.bf16.mxu0 0
    %4504 = vmatpush1.bf16.msra.mxu0 0
    %4505 = vmatprep.subr.bf16.mxu0 0
    %4506 = vmatpush1.bf16.msra.mxu0 0
    %4507 = vmatprep.subr.bf16.mxu0 0
    %4508 = vmatpush1.bf16.msra.mxu0 0
    %4509 = vmatprep.subr.bf16.mxu0 0
    %4510 = vmatpush1.bf16.msra.mxu0 0
    %4511 = vmatprep.subr.bf16.mxu0 0
    %4512 = vmatpush1.bf16.msra.mxu0 0
    %4513 = vmatprep.subr.bf16.mxu0 0
    %4514 = vmatpush1.bf16.msra.mxu0 0
    %4515 = vmatprep.subr.bf16.mxu0 0
    %4516 = vmatpush1.bf16.msra.mxu0 0
    %4517 = vmatprep.subr.bf16.mxu0 0
    %4518 = vmatpush1.bf16.msra.mxu0 0
    %4519 = vmatprep.subr.bf16.mxu0 0
    %4520 = vmatpush1.bf16.msra.mxu0 0
    %4521 = vmatprep.mubr.bf16.mxu0 0
    %4522 = vmatmul.mubr.bf16.gmra.mrb[0].mxu0 %v4484
    %v4523 = vpop.f32.mrb[0].mxu0
    %v4524 = vadd.f32 %v4481, %v4523
    %v4525 = vpop.f32.mrb[0].mxu0
    %v4526 = vpop.f32.mrb[0].mxu0
    %v4527 = vadd.f32 %v4481, %v4526
    %v4528 = vpop.f32.mrb[0].mxu0
    %4529 = vmatprep.mubr.bf16.mxu0 0
    %4530 = vmatmul.mubr.bf16.gmra.mrb[0].mxu0 %v4487
    %v4531 = vpop.f32.mrb[0].mxu0
    %v4532 = vadd.f32 %v4481, %v4531
    %v4533 = vpop.f32.mrb[0].mxu0
    %v4534 = vpop.f32.mrb[0].mxu0
    %v4535 = vadd.f32 %v4481, %v4534
    %v4536 = vpop.f32.mrb[0].mxu0
    %4537 = vdwg.mxu0
    %v4538 = vadd.f32 %v2450, %v4524
    %v4539 = vadd.f32 %v2451, %v4527
    %v4540 = vadd.f32 %v2452, %v4532
    %v4541 = vadd.f32 %v2453, %v4535
    %v4542 = vsel %vm96, %v4538, 0.0
    %4543 = vadd.xlane.f32.xlu0 %v4542
    %v4544 = vpop.xlane.xlu0 %4543
    %v4545 = vsel %vm96, %v4539, 0.0
    %4546 = vadd.xlane.f32.xlu0 %v4545
    %v4547 = vpop.xlane.xlu0 %4546
    %v4548 = vsel %vm96, %v4540, 0.0
    %4549 = vadd.xlane.f32.xlu0 %v4548
    %v4550 = vpop.xlane.xlu0 %4549
    %v4551 = vsel %vm96, %v4541, 0.0
    %4552 = vadd.xlane.f32.xlu0 %v4551
    %v4553 = vpop.xlane.xlu0 %4552
    %v4554 = vmul.f32 %v4544, %v109
    %v4555 = vmul.f32 %v4547, %v109
    %v4556 = vmul.f32 %v4550, %v109
    %v4557 = vmul.f32 %v4553, %v109
    %v4558 = vsub.f32 %v4538, %v4554
    %v4559 = vsub.f32 %v4539, %v4555
    %v4560 = vsub.f32 %v4540, %v4556
    %v4561 = vsub.f32 %v4541, %v4557
    %v4562 = vmul.f32 %v4558, %v4558
    %v4563 = vmul.f32 %v4559, %v4559
    %v4564 = vmul.f32 %v4560, %v4560
    %v4565 = vmul.f32 %v4561, %v4561
    %v4566 = vsel %vm96, %v4562, 0.0
    %4567 = vadd.xlane.f32.xlu0 %v4566
    %v4568 = vpop.xlane.xlu0 %4567
    %v4569 = vsel %vm96, %v4563, 0.0
    %4570 = vadd.xlane.f32.xlu0 %v4569
    %v4571 = vpop.xlane.xlu0 %4570
    %v4572 = vsel %vm96, %v4564, 0.0
    %4573 = vadd.xlane.f32.xlu0 %v4572
    %v4574 = vpop.xlane.xlu0 %4573
    %v4575 = vsel %vm96, %v4565, 0.0
    %4576 = vadd.xlane.f32.xlu0 %v4575
    %v4577 = vpop.xlane.xlu0 %4576
    %v4578 = vmul.f32 %v4568, %v109
    %v4579 = vmul.f32 %v4571, %v109
    %v4580 = vmul.f32 %v4574, %v109
    %v4581 = vmul.f32 %v4577, %v109
    %v4582 = vadd.f32 %v4578, 1e-05
    %v4583 = vadd.f32 %v4579, 1e-05
    %v4584 = vadd.f32 %v4580, 1e-05
    %v4585 = vadd.f32 %v4581, 1e-05
    %v4586 = vrsqrt.pop %v4582
    %v4587 = vrsqrt.pop %v4583
    %v4588 = vrsqrt.pop %v4584
    %v4589 = vrsqrt.pop %v4585
    %v4590 = vmul.f32 %v4558, %v4586
    %v4591 = vmul.f32 %v4559, %v4587
    %v4592 = vmul.f32 %v4560, %v4588
    %v4593 = vmul.f32 %v4561, %v4589
    %4594 = vrot.lane.b32.xlu0 %v2533, 64
    %v4595 = vpop.permute.xlu0 %4594
    %v4597 = vmul.f32 %v4590, %v4595
    %v4598 = vmul.f32 %v4591, %v4595
    %v4599 = vmul.f32 %v4592, %v4595
    %v4600 = vmul.f32 %v4593, %v4595
    %4601 = vrot.lane.b32.xlu0 %v2533, 32
    %v4602 = vpop.permute.xlu0 %4601
    %v4604 = vadd.f32 %v4597, %v4602
    %v4605 = vadd.f32 %v4598, %v4602
    %v4606 = vadd.f32 %v4599, %v4602
    %v4607 = vadd.f32 %v4600, %v4602
    %v4608 = vpack.c.bf16 %v4605, %v4604
    %v4609 = vpack.c.bf16 %v4607, %v4606
    %v4610 = vlaneseq
    %v4611 = vshrl.u32 %v4610, 7
    %v4612 = vsub.s32 6, %v4611
    %v4613 = vrot.slane %v65, %v4612
    %v4618 = vunpack.c.l.b16 %v2458
    %v4619 = vunpack.c.l.b16 %v2459
    %v4620 = vunpack.c.l.b16 %v2460
    %v4621 = vunpack.c.l.b16 %v2461
    %v4622 = vpack.c.b16 %v4619, %v4618
    %v4623 = vpack.c.b16 %v4621, %v4620
    %v4627 = vsel %vm96, %v4608, 0
    %v4630 = vsel %vm96, %v4609, 0
    %4632 = vmatprep.subr.bf16.mxu0 0
    %4633 = vmatpush1.bf16.msra.mxu0 %v4622
    %4634 = vmatprep.subr.bf16.mxu0 0
    %4635 = vmatpush1.bf16.msra.mxu0 %v4623
    %4636 = vmatprep.subr.bf16.mxu0 0
    %4637 = vmatpush1.bf16.msra.mxu0 0
    %4638 = vmatprep.subr.bf16.mxu0 0
    %4639 = vmatpush1.bf16.msra.mxu0 0
    %4640 = vmatprep.subr.bf16.mxu0 0
    %4641 = vmatpush1.bf16.msra.mxu0 0
    %4642 = vmatprep.subr.bf16.mxu0 0
    %4643 = vmatpush1.bf16.msra.mxu0 0
    %4644 = vmatprep.subr.bf16.mxu0 0
    %4645 = vmatpush1.bf16.msra.mxu0 0
    %4646 = vmatprep.subr.bf16.mxu0 0
    %4647 = vmatpush1.bf16.msra.mxu0 0
    %4648 = vmatprep.subr.bf16.mxu0 0
    %4649 = vmatpush1.bf16.msra.mxu0 0
    %4650 = vmatprep.subr.bf16.mxu0 0
    %4651 = vmatpush1.bf16.msra.mxu0 0
    %4652 = vmatprep.subr.bf16.mxu0 0
    %4653 = vmatpush1.bf16.msra.mxu0 0
    %4654 = vmatprep.subr.bf16.mxu0 0
    %4655 = vmatpush1.bf16.msra.mxu0 0
    %4656 = vmatprep.subr.bf16.mxu0 0
    %4657 = vmatpush1.bf16.msra.mxu0 0
    %4658 = vmatprep.subr.bf16.mxu0 0
    %4659 = vmatpush1.bf16.msra.mxu0 0
    %4660 = vmatprep.subr.bf16.mxu0 0
    %4661 = vmatpush1.bf16.msra.mxu0 0
    %4662 = vmatprep.subr.bf16.mxu0 0
    %4663 = vmatpush1.bf16.msra.mxu0 0
    %4664 = vmatprep.mubr.bf16.mxu0 0
    %4665 = vmatmul.mubr.bf16.gmra.mrb[0].mxu0 %v4627
    %v4666 = vpop.f32.mrb[0].mxu0
    %v4667 = vadd.f32 %v4613, %v4666
    %v4668 = vpop.f32.mrb[0].mxu0
    %v4669 = vpop.f32.mrb[0].mxu0
    %v4670 = vadd.f32 %v4613, %v4669
    %v4671 = vpop.f32.mrb[0].mxu0
    %4672 = vmatprep.mubr.bf16.mxu0 0
    %4673 = vmatmul.mubr.bf16.gmra.mrb[0].mxu0 %v4630
    %v4674 = vpop.f32.mrb[0].mxu0
    %v4675 = vadd.f32 %v4613, %v4674
    %v4676 = vpop.f32.mrb[0].mxu0
    %v4677 = vpop.f32.mrb[0].mxu0
    %v4678 = vadd.f32 %v4613, %v4677
    %v4679 = vpop.f32.mrb[0].mxu0
    %4680 = vdwg.mxu0
    %v4681 = vmul.f32 %v4667, %v4667
    %v4682 = vmul.f32 %v4670, %v4670
    %v4683 = vmul.f32 %v4675, %v4675
    %v4684 = vmul.f32 %v4678, %v4678
    %v4685 = vmul.f32 %v4667, %v4681
    %v4686 = vmul.f32 %v4670, %v4682
    %v4687 = vmul.f32 %v4675, %v4683
    %v4688 = vmul.f32 %v4678, %v4684
    %v4689 = vmul.f32 %v4685, 0.044715
    %v4690 = vmul.f32 %v4686, 0.044715
    %v4691 = vmul.f32 %v4687, 0.044715
    %v4692 = vmul.f32 %v4688, 0.044715
    %v4693 = vadd.f32 %v4667, %v4689
    %v4694 = vadd.f32 %v4670, %v4690
    %v4695 = vadd.f32 %v4675, %v4691
    %v4696 = vadd.f32 %v4678, %v4692
    %v4697 = vmul.f32 %v4693, 0.7978846
    %v4698 = vmul.f32 %v4694, 0.7978846
    %v4699 = vmul.f32 %v4695, 0.7978846
    %v4700 = vmul.f32 %v4696, 0.7978846
    %v4701 = vtanh.pop %v4697
    %v4702 = vtanh.pop %v4698
    %v4703 = vtanh.pop %v4699
    %v4704 = vtanh.pop %v4700
    %v4705 = vadd.f32 %v4701, 1.0
    %v4706 = vadd.f32 %v4702, 1.0
    %v4707 = vadd.f32 %v4703, 1.0
    %v4708 = vadd.f32 %v4704, 1.0
    %v4709 = vmul.f32 %v4705, 0.5
    %v4710 = vmul.f32 %v4706, 0.5
    %v4711 = vmul.f32 %v4707, 0.5
    %v4712 = vmul.f32 %v4708, 0.5
    %v4713 = vmul.f32 %v4667, %v4709
    %v4714 = vmul.f32 %v4670, %v4710
    %v4715 = vmul.f32 %v4675, %v4711
    %v4716 = vmul.f32 %v4678, %v4712
    %v4717 = vpack.c.bf16 %v4714, %v4713
    %v4718 = vpack.c.bf16 %v4716, %v4715
    %v4735 = vunpack.c.l.b16 %v2462
    %v4736 = vunpack.c.l.b16 %v2463
    %v4737 = vunpack.c.l.b16 %v2464
    %v4738 = vunpack.c.l.b16 %v2465
    %v4739 = vunpack.c.l.b16 %v2466
    %v4740 = vunpack.c.l.b16 %v2467
    %v4741 = vunpack.c.l.b16 %v2468
    %v4742 = vunpack.c.l.b16 %v2469
    %v4743 = vunpack.c.l.b16 %v2470
    %v4744 = vunpack.c.l.b16 %v2471
    %v4745 = vunpack.c.l.b16 %v2472
    %v4746 = vunpack.c.l.b16 %v2473
    %v4747 = vunpack.c.l.b16 %v2474
    %v4748 = vunpack.c.l.b16 %v2475
    %v4749 = vunpack.c.l.b16 %v2476
    %v4750 = vunpack.c.l.b16 %v2477
    %v4751 = vpack.c.b16 %v4736, %v4735
    %v4752 = vpack.c.b16 %v4738, %v4737
    %v4753 = vpack.c.b16 %v4740, %v4739
    %v4754 = vpack.c.b16 %v4742, %v4741
    %v4755 = vpack.c.b16 %v4744, %v4743
    %v4756 = vpack.c.b16 %v4746, %v4745
    %v4757 = vpack.c.b16 %v4748, %v4747
    %v4758 = vpack.c.b16 %v4750, %v4749
    %4767 = vmatprep.subr.bf16.mxu0 0
    %4768 = vmatpush1.bf16.msra.mxu0 %v4751
    %4769 = vmatprep.subr.bf16.mxu0 0
    %4770 = vmatpush1.bf16.msra.mxu0 %v4752
    %4771 = vmatprep.subr.bf16.mxu0 0
    %4772 = vmatpush1.bf16.msra.mxu0 %v4753
    %4773 = vmatprep.subr.bf16.mxu0 0
    %4774 = vmatpush1.bf16.msra.mxu0 %v4754
    %4775 = vmatprep.subr.bf16.mxu0 0
    %4776 = vmatpush1.bf16.msra.mxu0 %v4755
    %4777 = vmatprep.subr.bf16.mxu0 0
    %4778 = vmatpush1.bf16.msra.mxu0 %v4756
    %4779 = vmatprep.subr.bf16.mxu0 0
    %4780 = vmatpush1.bf16.msra.mxu0 %v4757
    %4781 = vmatprep.subr.bf16.mxu0 0
    %4782 = vmatpush1.bf16.msra.mxu0 %v4758
    %4783 = vmatprep.subr.bf16.mxu0 0
    %4784 = vmatpush1.bf16.msra.mxu0 0
    %4785 = vmatprep.subr.bf16.mxu0 0
    %4786 = vmatpush1.bf16.msra.mxu0 0
    %4787 = vmatprep.subr.bf16.mxu0 0
    %4788 = vmatpush1.bf16.msra.mxu0 0
    %4789 = vmatprep.subr.bf16.mxu0 0
    %4790 = vmatpush1.bf16.msra.mxu0 0
    %4791 = vmatprep.subr.bf16.mxu0 0
    %4792 = vmatpush1.bf16.msra.mxu0 0
    %4793 = vmatprep.subr.bf16.mxu0 0
    %4794 = vmatpush1.bf16.msra.mxu0 0
    %4795 = vmatprep.subr.bf16.mxu0 0
    %4796 = vmatpush1.bf16.msra.mxu0 0
    %4797 = vmatprep.subr.bf16.mxu0 0
    %4798 = vmatpush1.bf16.msra.mxu0 0
    %4799 = vmatprep.mubr.bf16.mxu0 0
    %4800 = vmatmul.mubr.bf16.gmra.mrb[0].mxu0 %v4717
    %v4801 = vpop.f32.mrb[0].mxu0
    %v4802 = vadd.f32 0.0, %v4801
    %v4803 = vpop.f32.mrb[0].mxu0
    %v4804 = vpop.f32.mrb[0].mxu0
    %v4805 = vadd.f32 0.0, %v4804
    %v4806 = vpop.f32.mrb[0].mxu0
    %4807 = vmatprep.mubr.bf16.mxu0 0
    %4808 = vmatmul.mubr.bf16.gmra.mrb[0].mxu0 %v4718
    %v4809 = vpop.f32.mrb[0].mxu0
    %v4810 = vadd.f32 0.0, %v4809
    %v4811 = vpop.f32.mrb[0].mxu0
    %v4812 = vpop.f32.mrb[0].mxu0
    %v4813 = vadd.f32 0.0, %v4812
    %v4814 = vpop.f32.mrb[0].mxu0
    %4815 = vdwg.mxu0
    %v4816 = vadd.f32 %v4538, %v4802
    %v4817 = vadd.f32 %v4539, %v4805
    %v4818 = vadd.f32 %v4540, %v4810
    %v4819 = vadd.f32 %v4541, %v4813
    %v4820 = vlaneseq
    %v4821 = vshrl.u32 %v4820, 7
    %v4822 = vsub.s32 7, %v4821
    %v4823 = vrot.slane %v65, %v4822
    %v4824 = vadd.f32 %v4816, %v4823
    %v4825 = vadd.f32 %v4817, %v4823
    %v4826 = vadd.f32 %v4818, %v4823
    %v4827 = vadd.f32 %v4819, %v4823
    %v4828 = vsel %vm96, %v4824, 0.0
    %4829 = vadd.xlane.f32.xlu0 %v4828
    %v4830 = vpop.xlane.xlu0 %4829
    %v4831 = vsel %vm96, %v4825, 0.0
    %4832 = vadd.xlane.f32.xlu0 %v4831
    %v4833 = vpop.xlane.xlu0 %4832
    %v4834 = vsel %vm96, %v4826, 0.0
    %4835 = vadd.xlane.f32.xlu0 %v4834
    %v4836 = vpop.xlane.xlu0 %4835
    %v4837 = vsel %vm96, %v4827, 0.0
    %4838 = vadd.xlane.f32.xlu0 %v4837
    %v4839 = vpop.xlane.xlu0 %4838
    %v4840 = vmul.f32 %v4830, %v109
    %v4841 = vmul.f32 %v4833, %v109
    %v4842 = vmul.f32 %v4836, %v109
    %v4843 = vmul.f32 %v4839, %v109
    %v4844 = vsub.f32 %v4824, %v4840
    %v4845 = vsub.f32 %v4825, %v4841
    %v4846 = vsub.f32 %v4826, %v4842
    %v4847 = vsub.f32 %v4827, %v4843
    %v4848 = vmul.f32 %v4844, %v4844
    %v4849 = vmul.f32 %v4845, %v4845
    %v4850 = vmul.f32 %v4846, %v4846
    %v4851 = vmul.f32 %v4847, %v4847
    %v4852 = vsel %vm96, %v4848, 0.0
    %4853 = vadd.xlane.f32.xlu0 %v4852
    %v4854 = vpop.xlane.xlu0 %4853
    %v4855 = vsel %vm96, %v4849, 0.0
    %4856 = vadd.xlane.f32.xlu0 %v4855
    %v4857 = vpop.xlane.xlu0 %4856
    %v4858 = vsel %vm96, %v4850, 0.0
    %4859 = vadd.xlane.f32.xlu0 %v4858
    %v4860 = vpop.xlane.xlu0 %4859
    %v4861 = vsel %vm96, %v4851, 0.0
    %4862 = vadd.xlane.f32.xlu0 %v4861
    %v4863 = vpop.xlane.xlu0 %4862
    %v4864 = vmul.f32 %v4854, %v109
    %v4865 = vmul.f32 %v4857, %v109
    %v4866 = vmul.f32 %v4860, %v109
    %v4867 = vmul.f32 %v4863, %v109
    %v4868 = vadd.f32 %v4864, 1e-05
    %v4869 = vadd.f32 %v4865, 1e-05
    %v4870 = vadd.f32 %v4866, 1e-05
    %v4871 = vadd.f32 %v4867, 1e-05
    %v4872 = vrsqrt.pop %v4868
    %v4873 = vrsqrt.pop %v4869
    %v4874 = vrsqrt.pop %v4870
    %v4875 = vrsqrt.pop %v4871
    %v4876 = vmul.f32 %v4844, %v4872
    %v4877 = vmul.f32 %v4845, %v4873
    %v4878 = vmul.f32 %v4846, %v4874
    %v4879 = vmul.f32 %v4847, %v4875
    %v4880 = vlaneseq
    %v4881 = vshrl.u32 %v4880, 7
    %v4882 = vsub.s32 0, %v4881
    %v4883 = vrot.slane %v66, %v4882
    %v4884 = vmul.f32 %v4876, %v4883
    %v4885 = vmul.f32 %v4877, %v4883
    %v4886 = vmul.f32 %v4878, %v4883
    %v4887 = vmul.f32 %v4879, %v4883
    %4889 = vrot.lane.b32.xlu0 %v4883, 96
    %v4890 = vpop.permute.xlu0 %4889
    %v4892 = vadd.f32 %v4884, %v4890
    %v4893 = vadd.f32 %v4885, %v4890
    %v4894 = vadd.f32 %v4886, %v4890
    %v4895 = vadd.f32 %v4887, %v4890
    %v4896 = vpack.c.bf16 %v4893, %v4892
    %v4897 = vpack.c.bf16 %v4895, %v4894
    %v4898 = vld [vmem:[#allocation5 + $0xc0] sm:$0xf]
    %v4899 = vld [vmem:[#allocation5 + $0xc4] sm:$0xf]
    %v4900 = vld [vmem:[#allocation5 + $0xc8] sm:$0xf]
    %v4901 = vld [vmem:[#allocation5 + $0xcc] sm:$0xf]
    %v4906 = vunpack.c.l.b16 %v4898
    %v4907 = vunpack.c.l.b16 %v4899
    %v4908 = vunpack.c.l.b16 %v4900
    %v4909 = vunpack.c.l.b16 %v4901
    %v4910 = vpack.c.b16 %v4907, %v4906
    %v4911 = vpack.c.b16 %v4909, %v4908
    %v4915 = vsel %vm96, %v4896, 0
    %v4918 = vsel %vm96, %v4897, 0
    %4920 = vmatprep.subr.bf16.mxu0 0
    %4921 = vmatpush1.bf16.msra.mxu0 %v4910
    %4922 = vmatprep.subr.bf16.mxu0 0
    %4923 = vmatpush1.bf16.msra.mxu0 %v4911
    %4924 = vmatprep.subr.bf16.mxu0 0
    %4925 = vmatpush1.bf16.msra.mxu0 0
    %4926 = vmatprep.subr.bf16.mxu0 0
    %4927 = vmatpush1.bf16.msra.mxu0 0
    %4928 = vmatprep.subr.bf16.mxu0 0
    %4929 = vmatpush1.bf16.msra.mxu0 0
    %4930 = vmatprep.subr.bf16.mxu0 0
    %4931 = vmatpush1.bf16.msra.mxu0 0
    %4932 = vmatprep.subr.bf16.mxu0 0
    %4933 = vmatpush1.bf16.msra.mxu0 0
    %4934 = vmatprep.subr.bf16.mxu0 0
    %4935 = vmatpush1.bf16.msra.mxu0 0
    %4936 = vmatprep.subr.bf16.mxu0 0
    %4937 = vmatpush1.bf16.msra.mxu0 0
    %4938 = vmatprep.subr.bf16.mxu0 0
    %4939 = vmatpush1.bf16.msra.mxu0 0
    %4940 = vmatprep.subr.bf16.mxu0 0
    %4941 = vmatpush1.bf16.msra.mxu0 0
    %4942 = vmatprep.subr.bf16.mxu0 0
    %4943 = vmatpush1.bf16.msra.mxu0 0
    %4944 = vmatprep.subr.bf16.mxu0 0
    %4945 = vmatpush1.bf16.msra.mxu0 0
    %4946 = vmatprep.subr.bf16.mxu0 0
    %4947 = vmatpush1.bf16.msra.mxu0 0
    %4948 = vmatprep.subr.bf16.mxu0 0
    %4949 = vmatpush1.bf16.msra.mxu0 0
    %4950 = vmatprep.subr.bf16.mxu0 0
    %4951 = vmatpush1.bf16.msra.mxu0 0
    %4952 = vmatprep.mubr.bf16.mxu0 0
    %4953 = vmatmul.mubr.bf16.gmra.mrb[0].mxu0 %v4915
    %v4954 = vpop.f32.mrb[0].mxu0
    %v4955 = vadd.f32 0.0, %v4954
    %v4956 = vpop.f32.mrb[0].mxu0
    %v4957 = vpop.f32.mrb[0].mxu0
    %v4958 = vadd.f32 0.0, %v4957
    %v4959 = vpop.f32.mrb[0].mxu0
    %4960 = vmatprep.mubr.bf16.mxu0 0
    %4961 = vmatmul.mubr.bf16.gmra.mrb[0].mxu0 %v4918
    %v4962 = vpop.f32.mrb[0].mxu0
    %v4963 = vadd.f32 0.0, %v4962
    %v4964 = vpop.f32.mrb[0].mxu0
    %v4965 = vpop.f32.mrb[0].mxu0
    %v4966 = vadd.f32 0.0, %v4965
    %v4967 = vpop.f32.mrb[0].mxu0
    %4968 = vdwg.mxu0
    %4969 = vst [vmem:[#allocation8] sm:$0xff] %v4955
    %4970 = vst [vmem:[#allocation8 + $0x8] sm:$0xff] %v4958
    %4971 = vst [vmem:[#allocation8 + $0x10] sm:$0xff] %v4963
    %4972 = vst [vmem:[#allocation8 + $0x18] sm:$0xff] %v4966
    // Predicated region
    $region26: #{tpu_custom_call.1} parent=1 // pred_check
      _
    $region27: #{tpu_custom_call.1} parent=1 // pred_check_branch
      %4974 = sbr.rel (0) target = $region29
    $region28: #{tpu_custom_call.1} parent=1 // pred_region
      %s4976 = ssub.s32 512, 512
      %4977 = vsyncadd [#allocation4], %s4976
      %s4978 = sshll.u32 [#allocation8], 4
      %s4979 = int_to_ptr.vmem [resolvable:$true] %s4978
      %4984 = dma.vmem_to_hbm [thread:$0]  %s4979, 512, %s3, [#allocation4], 128, 128, 8
    $region29: #{tpu_custom_call.1} parent=1 // pred_fallthru
      _
    // Predicated region
    $region30: #{tpu_custom_call.1} parent=1 // pred_check
      _
    $region31: #{tpu_custom_call.1} parent=1 // pred_check_branch
      %4986 = sbr.rel (0) target = $region33
    $region32: #{tpu_custom_call.1} parent=1 // pred_region
      %4987 = dma.done [#allocation4], 512
    $region33: #{tpu_custom_call.1} parent=1 // pred_fallthru
      _
    %4988 = vsyncpa [#allocation3], 1
    %4989 = vsyncpa [#allocation6], 1
    %4990 = vsyncpa [#allocation4], 1

</llo_original>
